<compile_context>
chip_gen: v7x
topology: tpu7x:2x2x1
jax: 0.10.0
libtpu: 0.0.40
codegen_flags: <defaults>
</compile_context>

<pallas_src>
import functools

import jax
import jax.numpy as jnp
from jax.experimental import pallas as pl
from jax.experimental.pallas import tpu as pltpu


def _pick_tile(n, target):
    """Largest tile <= target that divides n."""
    t = min(n, target)
    while t > 1 and n % t != 0:
        t -= 1
    return t


# ---------------------------------------------------------------------------
# Pallas kernels
# ---------------------------------------------------------------------------

def _spectral_mix_kernel(xr_ref, xi_ref, wr_ref, wi_ref, or_ref, oi_ref):
    # Per-mode complex matmul over a block of modes:
    #   out[m, b, o] = sum_i x[m, b, i] * w[m, i, o]
    # 3-multiplication (Gauss) form: 25% fewer MXU pushes, extra adds on VPU.
    xr, xi = xr_ref[...], xi_ref[...]
    wr, wi = wr_ref[...], wi_ref[...]
    t1 = jnp.einsum("mbi,mio->mbo", xr, wr, preferred_element_type=jnp.float32)
    t2 = jnp.einsum("mbi,mio->mbo", xi, wi, preferred_element_type=jnp.float32)
    t3 = jnp.einsum("mbi,mio->mbo", xr + xi, wr + wi,
                    preferred_element_type=jnp.float32)
    or_ref[...] = t1 - t2
    oi_ref[...] = t3 - t1 - t2


def spectral_mix_pallas(xr, xi, wr, wi):
    M, B, Ci = xr.shape
    Co = wr.shape[2]
    mb = _pick_tile(M, 8)                       # modes per grid step (M=16 -> 2 steps)
    spec_x = pl.BlockSpec((mb, B, Ci), lambda m: (m, 0, 0))
    spec_w = pl.BlockSpec((mb, Ci, Co), lambda m: (m, 0, 0))
    spec_o = pl.BlockSpec((mb, B, Co), lambda m: (m, 0, 0))
    return pl.pallas_call(
        _spectral_mix_kernel,
        out_shape=(jax.ShapeDtypeStruct((M, B, Co), jnp.float32),
                   jax.ShapeDtypeStruct((M, B, Co), jnp.float32)),
        grid=(M // mb,),
        in_specs=[spec_x, spec_x, spec_w, spec_w],
        out_specs=(spec_o, spec_o),
        compiler_params=pltpu.CompilerParams(dimension_semantics=("parallel",)),
    )(xr, xi, wr, wi)


def _conv_add_relu_kernel(x_ref, spec_ref, w_ref, b_ref, o_ref):
    # 1x1 Conv2d == per-pixel channel matmul, fused with spectral add + ReLU.
    y = jnp.dot(x_ref[...], w_ref[...], preferred_element_type=jnp.float32)
    y = y + b_ref[...] + spec_ref[...]
    o_ref[...] = jnp.maximum(y, 0.0).astype(o_ref.dtype)


def conv_add_relu_pallas(x, spec, w, b, tm):
    N, C = x.shape
    Co = w.shape[1]
    return pl.pallas_call(
        _conv_add_relu_kernel,
        out_shape=jax.ShapeDtypeStruct((N, Co), jnp.float32),
        grid=(N // tm,),
        in_specs=[pl.BlockSpec((tm, C), lambda i: (i, 0)),
                  pl.BlockSpec((tm, Co), lambda i: (i, 0)),
                  pl.BlockSpec((C, Co), lambda i: (0, 0)),
                  pl.BlockSpec((1, Co), lambda i: (0, 0))],
        out_specs=pl.BlockSpec((tm, Co), lambda i: (i, 0)),
        compiler_params=pltpu.CompilerParams(dimension_semantics=("parallel",)),
    )(x, spec, w, b)


def _tail_kernel(x_ref, spec_ref, cw_ref, cb_ref,
                 w1_ref, b1_ref, w2_ref, b2_ref, o_ref):
    # Fused: last layer's (1x1 conv + spectral add + ReLU), then fc1 -> ReLU -> fc2.
    # Only the (tm, 1) result is written back to HBM.
    y = jnp.dot(x_ref[...], cw_ref[...], preferred_element_type=jnp.float32)
    y = jnp.maximum(y + cb_ref[...] + spec_ref[...], 0.0)
    h = jnp.dot(y, w1_ref[...], preferred_element_type=jnp.float32) + b1_ref[...]
    h = jnp.maximum(h, 0.0)
    o = jnp.dot(h, w2_ref[...], preferred_element_type=jnp.float32) + b2_ref[...]
    o_ref[...] = o.astype(o_ref.dtype)


def tail_pallas(x, spec, cw, cb, w1, b1, w2, b2, tm):
    N, C = x.shape
    H = w1.shape[1]
    return pl.pallas_call(
        _tail_kernel,
        out_shape=jax.ShapeDtypeStruct((N, 1), jnp.float32),
        grid=(N // tm,),
        in_specs=[pl.BlockSpec((tm, C), lambda i: (i, 0)),
                  pl.BlockSpec((tm, C), lambda i: (i, 0)),
                  pl.BlockSpec((C, C), lambda i: (0, 0)),
                  pl.BlockSpec((1, C), lambda i: (0, 0)),
                  pl.BlockSpec((C, H), lambda i: (0, 0)),
                  pl.BlockSpec((1, H), lambda i: (0, 0)),
                  pl.BlockSpec((H, 1), lambda i: (0, 0)),
                  pl.BlockSpec((1, 1), lambda i: (0, 0))],
        out_specs=pl.BlockSpec((tm, 1), lambda i: (i, 0)),
        compiler_params=pltpu.CompilerParams(dimension_semantics=("parallel",)),
    )(x, spec, cw, cb, w1, b1, w2, b2)


# ---------------------------------------------------------------------------
# FNO2d forward (FFT glue in plain JAX, hot paths in Pallas)
# ---------------------------------------------------------------------------

def fno2d_forward(x, params, modes1, modes2, width):
    b, h, w, _ = x.shape
    N = b * h * w
    M = modes1 * modes2
    tm = _pick_tile(N, 256)          # N=512 -> 2 row blocks (shards v7x's 2 TCs)

    # fc0: Linear(1, width) -> broadcast multiply-add (plain jnp).
    y = x.reshape(b, h * w, 1) * params["fc0_w"] + params["fc0_b"]   # (b, h*w, width)

    # Reproduce torch's raw `.view(b, width, h, w)` (memory reinterpretation,
    # NOT a permute), then convert once to channels-last for the whole loop.
    xg = y.reshape(b, width, h, w)
    xh = jnp.transpose(xg, (0, 2, 3, 1))                             # (b, h, w, width)

    result = None
    for l in range(4):
        # --- SpectralConv2d (channels-last, FFT over spatial axes (1, 2)) ---
        # TODO(synk): rfft2/irfft2 have no Pallas primitive; computed with jnp.fft.
        x_ft = jnp.fft.rfft2(xh, axes=(1, 2), norm="ortho")          # (b,h,w//2+1,C) c64
        xm = x_ft[:, :modes1, :modes2, :]                            # (b, m1, m2, C)
        xm_t = jnp.transpose(xm, (1, 2, 0, 3)).reshape(M, b, width)  # (M, b, C)
        o_r, o_i = spectral_mix_pallas(
            jnp.real(xm_t), jnp.imag(xm_t),
            params["spec_wr"][l], params["spec_wi"][l])
        om = jax.lax.complex(o_r, o_i).reshape(modes1, modes2, b, width)
        om = jnp.transpose(om, (2, 0, 1, 3))                         # (b, m1, m2, C)
        out_ft = jnp.zeros((b, h, w // 2 + 1, width), dtype=jnp.complex64)
        out_ft = out_ft.at[:, :modes1, :modes2, :].set(om)
        x1 = jnp.fft.irfft2(out_ft, s=(h, w), axes=(1, 2), norm="ortho")  # (b,h,w,C)

        x2_in = xh.reshape(N, width)
        x1_in = x1.reshape(N, width)
        if l < 3:
            # fused 1x1 conv + spectral add + ReLU
            out = conv_add_relu_pallas(x2_in, x1_in,
                                       params["conv_w"][l], params["conv_b"][l], tm)
            xh = out.reshape(b, h, w, width)
        else:
            # last layer fused with MLP head: conv+add+relu -> fc1 -> relu -> fc2
            result = tail_pallas(x2_in, x1_in,
                                 params["conv_w"][l], params["conv_b"][l],
                                 params["fc1_w"], params["fc1_b"],
                                 params["fc2_w"], params["fc2_b"], tm)

    return result.reshape(b, h, w, 1)


def init_params(key, modes1, modes2, width):
    k = jax.random.split(key, 10)
    M = modes1 * modes2
    scale_spec = 1.0 / (width * width)
    return {
        # fc0: Linear(1, width)
        "fc0_w": jax.random.normal(k[0], (width,), jnp.float32) * 0.5,
        "fc0_b": jax.random.normal(k[1], (width,), jnp.float32) * 0.1,
        # 4 spectral layers: complex weights (in_c, out_c, m1, m2) rearranged to
        # per-mode matmul form (M, in_c, out_c), split into real/imag parts.
        "spec_wr": jax.random.normal(k[2], (4, M, width, width), jnp.float32) * scale_spec,
        "spec_wi": jax.random.normal(k[3], (4, M, width, width), jnp.float32) * scale_spec,
        # 4 local 1x1 convs: Conv2d weight (out, in, 1, 1) pre-transposed to (in, out)
        "conv_w": jax.random.normal(k[4], (4, width, width), jnp.float32) * (1.0 / width),
        "conv_b": jax.random.normal(k[5], (4, 1, width), jnp.float32) * 0.1,
        # fc1: Linear(width, 128), fc2: Linear(128, 1) -- pre-transposed weights
        "fc1_w": jax.random.normal(k[6], (width, 128), jnp.float32) * (1.0 / width),
        "fc1_b": jax.random.normal(k[7], (1, 128), jnp.float32) * 0.1,
        "fc2_w": jax.random.normal(k[8], (128, 1), jnp.float32) * (1.0 / 128.0),
        "fc2_b": jax.random.normal(k[9], (1, 1), jnp.float32) * 0.1,
    }


if __name__ == "__main__":
    modes1, modes2, width = 4, 4, 32
    b, h, w = 2, 16, 16

    key = jax.random.PRNGKey(0)
    kx, kp = jax.random.split(key)
    x = jax.random.normal(kx, (b, h, w, 1), jnp.float32)
    params = init_params(kp, modes1, modes2, width)

    fwd = jax.jit(functools.partial(
        fno2d_forward, modes1=modes1, modes2=modes2, width=width))
    out = fwd(x, params)
    jax.block_until_ready(out)
    assert out.shape == (b, h, w, 1) and out.dtype == jnp.float32
    print("KERNEL_OK")
</pallas_src>

<mosaic_0001>
module attributes {stable_mosaic.version = 11 : i64} {
  func.func @_spectral_mix_kernel(%arg0: i32, %arg1: memref<8x2x32xf32, #tpu.memory_space<vmem>>, %arg2: memref<8x2x32xf32, #tpu.memory_space<vmem>>, %arg3: memref<8x32x32xf32, #tpu.memory_space<vmem>>, %arg4: memref<8x32x32xf32, #tpu.memory_space<vmem>>, %arg5: memref<8x2x32xf32, #tpu.memory_space<vmem>>, %arg6: memref<8x2x32xf32, #tpu.memory_space<vmem>>) attributes {dimension_semantics = [#tpu.dimension_semantics<parallel>], iteration_bounds = array<i64: 2>, scalar_prefetch = 0 : i64, scratch_operands = 0 : i64, tpu.core_type = #tpu.core_type<tc>, window_params = [{transform_indices = @transform_0, window_bounds = array<i64: 8, 2, 32>}, {transform_indices = @transform_1, window_bounds = array<i64: 8, 2, 32>}, {transform_indices = @transform_2, window_bounds = array<i64: 8, 32, 32>}, {transform_indices = @transform_3, window_bounds = array<i64: 8, 32, 32>}, {transform_indices = @transform_4, window_bounds = array<i64: 8, 2, 32>}, {transform_indices = @transform_5, window_bounds = array<i64: 8, 2, 32>}]} {
    %c0 = arith.constant 0 : index
    %c0_0 = arith.constant 0 : index
    %c0_1 = arith.constant 0 : index
    %0 = vector.load %arg1[%c0, %c0_0, %c0_1] : memref<8x2x32xf32, #tpu.memory_space<vmem>>, vector<8x2x32xf32>
    %c0_2 = arith.constant 0 : index
    %c0_3 = arith.constant 0 : index
    %c0_4 = arith.constant 0 : index
    %1 = vector.load %arg2[%c0_2, %c0_3, %c0_4] : memref<8x2x32xf32, #tpu.memory_space<vmem>>, vector<8x2x32xf32>
    %c0_5 = arith.constant 0 : index
    %c0_6 = arith.constant 0 : index
    %c0_7 = arith.constant 0 : index
    %2 = vector.load %arg3[%c0_5, %c0_6, %c0_7] : memref<8x32x32xf32, #tpu.memory_space<vmem>>, vector<8x32x32xf32>
    %c0_8 = arith.constant 0 : index
    %c0_9 = arith.constant 0 : index
    %c0_10 = arith.constant 0 : index
    %3 = vector.load %arg4[%c0_8, %c0_9, %c0_10] : memref<8x32x32xf32, #tpu.memory_space<vmem>>, vector<8x32x32xf32>
    "tpu.trace_start"() <{level = 10 : i32, message = "mbi,mio->mbo"}> : () -> ()
    %cst = arith.constant dense<0.000000e+00> : vector<8x2x32xf32>
    %4 = tpu.matmul %0, %2, %cst {dimension_numbers = #tpu.dot_dimension_numbers<[2], [1], [1], [2], [0, 0, 0, 1, 1, 2], [0], [0]>} : vector<8x2x32xf32>, vector<8x32x32xf32>, vector<8x2x32xf32> -> vector<8x2x32xf32>
    %cst_11 = arith.constant dense<0.000000e+00> : vector<8x2x32xf32>
    %5 = tpu.matmul %1, %3, %cst_11 {dimension_numbers = #tpu.dot_dimension_numbers<[2], [1], [1], [2], [0, 0, 0, 1, 1, 2], [0], [0]>} : vector<8x2x32xf32>, vector<8x32x32xf32>, vector<8x2x32xf32> -> vector<8x2x32xf32>
    "tpu.trace_stop"() : () -> ()
    %6 = arith.addf %0, %1 : vector<8x2x32xf32>
    %7 = arith.addf %2, %3 : vector<8x32x32xf32>
    "tpu.trace_start"() <{level = 10 : i32, message = "mbi,mio->mbo"}> : () -> ()
    %cst_12 = arith.constant dense<0.000000e+00> : vector<8x2x32xf32>
    %8 = tpu.matmul %6, %7, %cst_12 {dimension_numbers = #tpu.dot_dimension_numbers<[2], [1], [1], [2], [0, 0, 0, 1, 1, 2], [0], [0]>} : vector<8x2x32xf32>, vector<8x32x32xf32>, vector<8x2x32xf32> -> vector<8x2x32xf32>
    "tpu.trace_stop"() : () -> ()
    %9 = arith.subf %4, %5 : vector<8x2x32xf32>
    %c0_13 = arith.constant 0 : index
    %c0_14 = arith.constant 0 : index
    %c0_15 = arith.constant 0 : index
    %10 = vector.load %arg5[%c0_13, %c0_14, %c0_15] : memref<8x2x32xf32, #tpu.memory_space<vmem>>, vector<8x2x32xf32>
    tpu.vector_store %arg5[%c0_13, %c0_14, %c0_15], %9 {strides = array<i32>} : memref<8x2x32xf32, #tpu.memory_space<vmem>>, vector<8x2x32xf32>,
    %11 = arith.subf %8, %4 : vector<8x2x32xf32>
    %12 = arith.subf %11, %5 : vector<8x2x32xf32>
    %c0_16 = arith.constant 0 : index
    %c0_17 = arith.constant 0 : index
    %c0_18 = arith.constant 0 : index
    %13 = vector.load %arg6[%c0_16, %c0_17, %c0_18] : memref<8x2x32xf32, #tpu.memory_space<vmem>>, vector<8x2x32xf32>
    tpu.vector_store %arg6[%c0_16, %c0_17, %c0_18], %12 {strides = array<i32>} : memref<8x2x32xf32, #tpu.memory_space<vmem>>, vector<8x2x32xf32>,
    return
  }
  func.func @transform_0(%arg0: i32) -> (i32, i32, i32) {
    %c0_i32 = arith.constant 0 : i32
    %c0_i32_0 = arith.constant 0 : i32
    %c0_i32_1 = arith.constant 0 : i32
    return %arg0, %c0_i32, %c0_i32_0 : i32, i32, i32
  }
  func.func @transform_1(%arg0: i32) -> (i32, i32, i32) {
    %c0_i32 = arith.constant 0 : i32
    %c0_i32_0 = arith.constant 0 : i32
    %c0_i32_1 = arith.constant 0 : i32
    return %arg0, %c0_i32, %c0_i32_0 : i32, i32, i32
  }
  func.func @transform_2(%arg0: i32) -> (i32, i32, i32) {
    %c0_i32 = arith.constant 0 : i32
    %c0_i32_0 = arith.constant 0 : i32
    %c0_i32_1 = arith.constant 0 : i32
    return %arg0, %c0_i32, %c0_i32_0 : i32, i32, i32
  }
  func.func @transform_3(%arg0: i32) -> (i32, i32, i32) {
    %c0_i32 = arith.constant 0 : i32
    %c0_i32_0 = arith.constant 0 : i32
    %c0_i32_1 = arith.constant 0 : i32
    return %arg0, %c0_i32, %c0_i32_0 : i32, i32, i32
  }
  func.func @transform_4(%arg0: i32) -> (i32, i32, i32) {
    %c0_i32 = arith.constant 0 : i32
    %c0_i32_0 = arith.constant 0 : i32
    %c0_i32_1 = arith.constant 0 : i32
    return %arg0, %c0_i32, %c0_i32_0 : i32, i32, i32
  }
  func.func @transform_5(%arg0: i32) -> (i32, i32, i32) {
    %c0_i32 = arith.constant 0 : i32
    %c0_i32_0 = arith.constant 0 : i32
    %c0_i32_1 = arith.constant 0 : i32
    return %arg0, %c0_i32, %c0_i32_0 : i32, i32, i32
  }
}

module attributes {stable_mosaic.version = 11 : i64} {
  func.func @_conv_add_relu_kernel(%arg0: i32, %arg1: memref<256x32xf32, #tpu.memory_space<vmem>>, %arg2: memref<256x32xf32, #tpu.memory_space<vmem>>, %arg3: memref<32x32xf32, #tpu.memory_space<vmem>>, %arg4: memref<1x32xf32, #tpu.memory_space<vmem>>, %arg5: memref<256x32xf32, #tpu.memory_space<vmem>>) attributes {dimension_semantics = [#tpu.dimension_semantics<parallel>], iteration_bounds = array<i64: 2>, scalar_prefetch = 0 : i64, scratch_operands = 0 : i64, tpu.core_type = #tpu.core_type<tc>, window_params = [{transform_indices = @transform_0, window_bounds = array<i64: 256, 32>}, {transform_indices = @transform_1, window_bounds = array<i64: 256, 32>}, {pipeline_mode = #tpu.pipeline_mode<synchronous>, transform_indices = @transform_2, window_bounds = array<i64: 32, 32>}, {pipeline_mode = #tpu.pipeline_mode<synchronous>, transform_indices = @transform_3, window_bounds = array<i64: 1, 32>}, {transform_indices = @transform_4, window_bounds = array<i64: 256, 32>}]} {
    %c0 = arith.constant 0 : index
    %c0_0 = arith.constant 0 : index
    %0 = vector.load %arg1[%c0, %c0_0] : memref<256x32xf32, #tpu.memory_space<vmem>>, vector<256x32xf32>
    %c0_1 = arith.constant 0 : index
    %c0_2 = arith.constant 0 : index
    %1 = vector.load %arg3[%c0_1, %c0_2] : memref<32x32xf32, #tpu.memory_space<vmem>>, vector<32x32xf32>
    %cst = arith.constant dense<0.000000e+00> : vector<256x32xf32>
    %2 = tpu.matmul %0, %1, %cst {dimension_numbers = #tpu.dot_dimension_numbers<[1], [0], [0], [1], [0, 0, 1, 1], [], []>} : vector<256x32xf32>, vector<32x32xf32>, vector<256x32xf32> -> vector<256x32xf32>
    %c0_3 = arith.constant 0 : index
    %c0_4 = arith.constant 0 : index
    %3 = vector.load %arg4[%c0_3, %c0_4] : memref<1x32xf32, #tpu.memory_space<vmem>>, vector<1x32xf32>
    %4 = vector.broadcast %3 : vector<1x32xf32> to vector<256x32xf32>
    %5 = arith.addf %2, %4 : vector<256x32xf32>
    %c0_5 = arith.constant 0 : index
    %c0_6 = arith.constant 0 : index
    %6 = vector.load %arg2[%c0_5, %c0_6] : memref<256x32xf32, #tpu.memory_space<vmem>>, vector<256x32xf32>
    %7 = arith.addf %5, %6 : vector<256x32xf32>
    %cst_7 = arith.constant 0.000000e+00 : f32
    %8 = vector.broadcast %cst_7 : f32 to vector<256x32xf32>
    %9 = arith.maximumf %7, %8 : vector<256x32xf32>
    %c0_8 = arith.constant 0 : index
    %c0_9 = arith.constant 0 : index
    %10 = vector.load %arg5[%c0_8, %c0_9] : memref<256x32xf32, #tpu.memory_space<vmem>>, vector<256x32xf32>
    tpu.vector_store %arg5[%c0_8, %c0_9], %9 {strides = array<i32>} : memref<256x32xf32, #tpu.memory_space<vmem>>, vector<256x32xf32>,
    return
  }
  func.func @transform_0(%arg0: i32) -> (i32, i32) {
    %c0_i32 = arith.constant 0 : i32
    %c0_i32_0 = arith.constant 0 : i32
    return %arg0, %c0_i32 : i32, i32
  }
  func.func @transform_1(%arg0: i32) -> (i32, i32) {
    %c0_i32 = arith.constant 0 : i32
    %c0_i32_0 = arith.constant 0 : i32
    return %arg0, %c0_i32 : i32, i32
  }
  func.func @transform_2(%arg0: i32) -> (i32, i32) {
    %c0_i32 = arith.constant 0 : i32
    %c0_i32_0 = arith.constant 0 : i32
    %c0_i32_1 = arith.constant 0 : i32
    return %c0_i32, %c0_i32_0 : i32, i32
  }
  func.func @transform_3(%arg0: i32) -> (i32, i32) {
    %c0_i32 = arith.constant 0 : i32
    %c0_i32_0 = arith.constant 0 : i32
    %c0_i32_1 = arith.constant 0 : i32
    return %c0_i32, %c0_i32_0 : i32, i32
  }
  func.func @transform_4(%arg0: i32) -> (i32, i32) {
    %c0_i32 = arith.constant 0 : i32
    %c0_i32_0 = arith.constant 0 : i32
    return %arg0, %c0_i32 : i32, i32
  }
}

module attributes {stable_mosaic.version = 11 : i64} {
  func.func @_tail_kernel(%arg0: i32, %arg1: memref<256x32xf32, #tpu.memory_space<vmem>>, %arg2: memref<256x32xf32, #tpu.memory_space<vmem>>, %arg3: memref<32x32xf32, #tpu.memory_space<vmem>>, %arg4: memref<1x32xf32, #tpu.memory_space<vmem>>, %arg5: memref<32x128xf32, #tpu.memory_space<vmem>>, %arg6: memref<1x128xf32, #tpu.memory_space<vmem>>, %arg7: memref<128x1xf32, #tpu.memory_space<vmem>>, %arg8: memref<1x1xf32, #tpu.memory_space<vmem>>, %arg9: memref<256x1xf32, #tpu.memory_space<vmem>>) attributes {dimension_semantics = [#tpu.dimension_semantics<parallel>], iteration_bounds = array<i64: 2>, scalar_prefetch = 0 : i64, scratch_operands = 0 : i64, tpu.core_type = #tpu.core_type<tc>, window_params = [{transform_indices = @transform_0, window_bounds = array<i64: 256, 32>}, {transform_indices = @transform_1, window_bounds = array<i64: 256, 32>}, {pipeline_mode = #tpu.pipeline_mode<synchronous>, transform_indices = @transform_2, window_bounds = array<i64: 32, 32>}, {pipeline_mode = #tpu.pipeline_mode<synchronous>, transform_indices = @transform_3, window_bounds = array<i64: 1, 32>}, {pipeline_mode = #tpu.pipeline_mode<synchronous>, transform_indices = @transform_4, window_bounds = array<i64: 32, 128>}, {pipeline_mode = #tpu.pipeline_mode<synchronous>, transform_indices = @transform_5, window_bounds = array<i64: 1, 128>}, {pipeline_mode = #tpu.pipeline_mode<synchronous>, transform_indices = @transform_6, window_bounds = array<i64: 128, 1>}, {pipeline_mode = #tpu.pipeline_mode<synchronous>, transform_indices = @transform_7, window_bounds = array<i64: 1, 1>}, {transform_indices = @transform_8, window_bounds = array<i64: 256, 1>}]} {
    %c0 = arith.constant 0 : index
    %c0_0 = arith.constant 0 : index
    %0 = vector.load %arg1[%c0, %c0_0] : memref<256x32xf32, #tpu.memory_space<vmem>>, vector<256x32xf32>
    %c0_1 = arith.constant 0 : index
    %c0_2 = arith.constant 0 : index
    %1 = vector.load %arg3[%c0_1, %c0_2] : memref<32x32xf32, #tpu.memory_space<vmem>>, vector<32x32xf32>
    %cst = arith.constant dense<0.000000e+00> : vector<256x32xf32>
    %2 = tpu.matmul %0, %1, %cst {dimension_numbers = #tpu.dot_dimension_numbers<[1], [0], [0], [1], [0, 0, 1, 1], [], []>} : vector<256x32xf32>, vector<32x32xf32>, vector<256x32xf32> -> vector<256x32xf32>
    %c0_3 = arith.constant 0 : index
    %c0_4 = arith.constant 0 : index
    %3 = vector.load %arg4[%c0_3, %c0_4] : memref<1x32xf32, #tpu.memory_space<vmem>>, vector<1x32xf32>
    %4 = vector.broadcast %3 : vector<1x32xf32> to vector<256x32xf32>
    %5 = arith.addf %2, %4 : vector<256x32xf32>
    %c0_5 = arith.constant 0 : index
    %c0_6 = arith.constant 0 : index
    %6 = vector.load %arg2[%c0_5, %c0_6] : memref<256x32xf32, #tpu.memory_space<vmem>>, vector<256x32xf32>
    %7 = arith.addf %5, %6 : vector<256x32xf32>
    %cst_7 = arith.constant 0.000000e+00 : f32
    %8 = vector.broadcast %cst_7 : f32 to vector<256x32xf32>
    %9 = arith.maximumf %7, %8 : vector<256x32xf32>
    %c0_8 = arith.constant 0 : index
    %c0_9 = arith.constant 0 : index
    %10 = vector.load %arg5[%c0_8, %c0_9] : memref<32x128xf32, #tpu.memory_space<vmem>>, vector<32x128xf32>
    %cst_10 = arith.constant dense<0.000000e+00> : vector<256x128xf32>
    %11 = tpu.matmul %9, %10, %cst_10 {dimension_numbers = #tpu.dot_dimension_numbers<[1], [0], [0], [1], [0, 0, 1, 1], [], []>} : vector<256x32xf32>, vector<32x128xf32>, vector<256x128xf32> -> vector<256x128xf32>
    %c0_11 = arith.constant 0 : index
    %c0_12 = arith.constant 0 : index
    %12 = vector.load %arg6[%c0_11, %c0_12] : memref<1x128xf32, #tpu.memory_space<vmem>>, vector<1x128xf32>
    %13 = vector.broadcast %12 : vector<1x128xf32> to vector<256x128xf32>
    %14 = arith.addf %11, %13 : vector<256x128xf32>
    %cst_13 = arith.constant 0.000000e+00 : f32
    %15 = vector.broadcast %cst_13 : f32 to vector<256x128xf32>
    %16 = arith.maximumf %14, %15 : vector<256x128xf32>
    %c0_14 = arith.constant 0 : index
    %c0_15 = arith.constant 0 : index
    %17 = vector.load %arg7[%c0_14, %c0_15] : memref<128x1xf32, #tpu.memory_space<vmem>>, vector<128x1xf32>
    %cst_16 = arith.constant dense<0.000000e+00> : vector<256x1xf32>
    %18 = tpu.matmul %16, %17, %cst_16 {dimension_numbers = #tpu.dot_dimension_numbers<[1], [0], [0], [1], [0, 0, 1, 1], [], []>} : vector<256x128xf32>, vector<128x1xf32>, vector<256x1xf32> -> vector<256x1xf32>
    %c0_17 = arith.constant 0 : index
    %c0_18 = arith.constant 0 : index
    %19 = vector.load %arg8[%c0_17, %c0_18] : memref<1x1xf32, #tpu.memory_space<vmem>>, vector<1x1xf32>
    %20 = vector.broadcast %19 : vector<1x1xf32> to vector<256x1xf32>
    %21 = arith.addf %18, %20 : vector<256x1xf32>
    %c0_19 = arith.constant 0 : index
    %c0_20 = arith.constant 0 : index
    %22 = vector.load %arg9[%c0_19, %c0_20] : memref<256x1xf32, #tpu.memory_space<vmem>>, vector<256x1xf32>
    tpu.vector_store %arg9[%c0_19, %c0_20], %21 {strides = array<i32>} : memref<256x1xf32, #tpu.memory_space<vmem>>, vector<256x1xf32>,
    return
  }
  func.func @transform_0(%arg0: i32) -> (i32, i32) {
    %c0_i32 = arith.constant 0 : i32
    %c0_i32_0 = arith.constant 0 : i32
    return %arg0, %c0_i32 : i32, i32
  }
  func.func @transform_1(%arg0: i32) -> (i32, i32) {
    %c0_i32 = arith.constant 0 : i32
    %c0_i32_0 = arith.constant 0 : i32
    return %arg0, %c0_i32 : i32, i32
  }
  func.func @transform_2(%arg0: i32) -> (i32, i32) {
    %c0_i32 = arith.constant 0 : i32
    %c0_i32_0 = arith.constant 0 : i32
    %c0_i32_1 = arith.constant 0 : i32
    return %c0_i32, %c0_i32_0 : i32, i32
  }
  func.func @transform_3(%arg0: i32) -> (i32, i32) {
    %c0_i32 = arith.constant 0 : i32
    %c0_i32_0 = arith.constant 0 : i32
    %c0_i32_1 = arith.constant 0 : i32
    return %c0_i32, %c0_i32_0 : i32, i32
  }
  func.func @transform_4(%arg0: i32) -> (i32, i32) {
    %c0_i32 = arith.constant 0 : i32
    %c0_i32_0 = arith.constant 0 : i32
    %c0_i32_1 = arith.constant 0 : i32
    return %c0_i32, %c0_i32_0 : i32, i32
  }
  func.func @transform_5(%arg0: i32) -> (i32, i32) {
    %c0_i32 = arith.constant 0 : i32
    %c0_i32_0 = arith.constant 0 : i32
    %c0_i32_1 = arith.constant 0 : i32
    return %c0_i32, %c0_i32_0 : i32, i32
  }
  func.func @transform_6(%arg0: i32) -> (i32, i32) {
    %c0_i32 = arith.constant 0 : i32
    %c0_i32_0 = arith.constant 0 : i32
    %c0_i32_1 = arith.constant 0 : i32
    return %c0_i32, %c0_i32_0 : i32, i32
  }
  func.func @transform_7(%arg0: i32) -> (i32, i32) {
    %c0_i32 = arith.constant 0 : i32
    %c0_i32_0 = arith.constant 0 : i32
    %c0_i32_1 = arith.constant 0 : i32
    return %c0_i32, %c0_i32_0 : i32, i32
  }
  func.func @transform_8(%arg0: i32) -> (i32, i32) {
    %c0_i32 = arith.constant 0 : i32
    %c0_i32_0 = arith.constant 0 : i32
    return %arg0, %c0_i32 : i32, i32
  }
}

</mosaic_0001>

<llo_original>
// kernel: mul.24
$region0: #{mul.24}
  %s0 = inlined_call_operand.vmem [shape: f32[2,16,16], index: 0, kind: input, shape index: {}]
  %s1 = inlined_call_operand.vmem [shape: f32[2,256], index: 1, kind: output, shape index: {}]
  $region1: #{mul.24} parent=0
    #allocation0 [shape = 'u8[8192]{0}', space=vmem, size = 0x2000, scoped, tag = 'scoped mem for output reshape']
    %v2 = vld [vmem:[%s0] ss:$8 sm:$0xf]
    %vm3 = vcmask 130048
    %4 = vst.msk [vmem:[#allocation0] ss:$8 sm:$0x3] %vm3, %v2
    %s5 = scalar_lea.vmem [#allocation0], 4294967281
    %6 = vst.msk [vmem:[%s5] ss:$8 sm:$0xc] %vm3, %v2
    %s7 = scalar_lea.vmem %s0, 7
    %s8 = smov 3
    %v9 = vld [vmem:[%s7] ss:$16 sm:%s8]
    %s10 = scalar_lea.vmem %s0, 4294967279
    %s11 = smov 12
    %v12 = vld [vmem:[%s10] ss:$16 sm:%s11]
    %vm13 = vcmask 1043458
    %v14 = vsel %vm13, %v12, %v9
    %15 = vrot.lane.b32.xlu0 %v14, 112
    %v16 = vpop.permute.xlu0 %15
    %vm17 = vcmask 1048448
    %18 = vst.msk [vmem:[#allocation0] sm:$0x3] %vm17, %v16
    %s19 = scalar_lea.vmem [#allocation0], 6
    %20 = vst.msk [vmem:[%s19] sm:$0xc] %vm17, %v16
    %s21 = scalar_lea.vmem %s0, 6
    %s22 = smov 3
    %v23 = vld [vmem:[%s21] ss:$16 sm:%s22]
    %s24 = scalar_lea.vmem %s0, 4294967278
    %s25 = smov 12
    %v26 = vld [vmem:[%s24] ss:$16 sm:%s25]
    %vm27 = vcmask 1043458
    %v28 = vsel %vm27, %v26, %v23
    %29 = vrot.lane.b32.xlu0 %v28, 96
    %v30 = vpop.permute.xlu0 %29
    %vm31 = vcmask 917248
    %32 = vst.msk [vmem:[#allocation0] sm:$0x3] %vm31, %v30
    %s33 = scalar_lea.vmem [#allocation0], 6
    %34 = vst.msk [vmem:[%s33] sm:$0xc] %vm31, %v30
    %s35 = scalar_lea.vmem %s0, 5
    %s36 = smov 3
    %v37 = vld [vmem:[%s35] ss:$16 sm:%s36]
    %s38 = scalar_lea.vmem %s0, 4294967277
    %s39 = smov 12
    %v40 = vld [vmem:[%s38] ss:$16 sm:%s39]
    %vm41 = vcmask 1043458
    %v42 = vsel %vm41, %v40, %v37
    %43 = vrot.lane.b32.xlu0 %v42, 80
    %v44 = vpop.permute.xlu0 %43
    %vm45 = vcmask 786048
    %46 = vst.msk [vmem:[#allocation0] sm:$0x3] %vm45, %v44
    %s47 = scalar_lea.vmem [#allocation0], 6
    %48 = vst.msk [vmem:[%s47] sm:$0xc] %vm45, %v44
    %s49 = scalar_lea.vmem %s0, 4
    %s50 = smov 3
    %v51 = vld [vmem:[%s49] ss:$16 sm:%s50]
    %s52 = scalar_lea.vmem %s0, 4294967276
    %s53 = smov 12
    %v54 = vld [vmem:[%s52] ss:$16 sm:%s53]
    %vm55 = vcmask 1043458
    %v56 = vsel %vm55, %v54, %v51
    %57 = vrot.lane.b32.xlu0 %v56, 64
    %v58 = vpop.permute.xlu0 %57
    %vm59 = vcmask 654848
    %60 = vst.msk [vmem:[#allocation0] sm:$0x3] %vm59, %v58
    %s61 = scalar_lea.vmem [#allocation0], 6
    %62 = vst.msk [vmem:[%s61] sm:$0xc] %vm59, %v58
    %s63 = scalar_lea.vmem %s0, 3
    %s64 = smov 3
    %v65 = vld [vmem:[%s63] ss:$16 sm:%s64]
    %s66 = scalar_lea.vmem %s0, 4294967275
    %s67 = smov 12
    %v68 = vld [vmem:[%s66] ss:$16 sm:%s67]
    %vm69 = vcmask 1043458
    %v70 = vsel %vm69, %v68, %v65
    %71 = vrot.lane.b32.xlu0 %v70, 48
    %v72 = vpop.permute.xlu0 %71
    %vm73 = vcmask 523648
    %74 = vst.msk [vmem:[#allocation0] sm:$0x3] %vm73, %v72
    %s75 = scalar_lea.vmem [#allocation0], 6
    %76 = vst.msk [vmem:[%s75] sm:$0xc] %vm73, %v72
    %s77 = scalar_lea.vmem %s0, 2
    %s78 = smov 3
    %v79 = vld [vmem:[%s77] ss:$16 sm:%s78]
    %s80 = scalar_lea.vmem %s0, 4294967274
    %s81 = smov 12
    %v82 = vld [vmem:[%s80] ss:$16 sm:%s81]
    %vm83 = vcmask 1043458
    %v84 = vsel %vm83, %v82, %v79
    %85 = vrot.lane.b32.xlu0 %v84, 32
    %v86 = vpop.permute.xlu0 %85
    %vm87 = vcmask 392448
    %88 = vst.msk [vmem:[#allocation0] sm:$0x3] %vm87, %v86
    %s89 = scalar_lea.vmem [#allocation0], 6
    %90 = vst.msk [vmem:[%s89] sm:$0xc] %vm87, %v86
    %s91 = scalar_lea.vmem %s0, 1
    %s92 = smov 3
    %v93 = vld [vmem:[%s91] ss:$16 sm:%s92]
    %s94 = scalar_lea.vmem %s0, 4294967273
    %s95 = smov 12
    %v96 = vld [vmem:[%s94] ss:$16 sm:%s95]
    %vm97 = vcmask 1043458
    %v98 = vsel %vm97, %v96, %v93
    %99 = vrot.lane.b32.xlu0 %v98, 16
    %v100 = vpop.permute.xlu0 %99
    %vm101 = vcmask 261248
    %102 = vst.msk [vmem:[#allocation0] sm:$0x3] %vm101, %v100
    %s103 = scalar_lea.vmem [#allocation0], 6
    %104 = vst.msk [vmem:[%s103] sm:$0xc] %vm101, %v100
    %s106 = sshllo.u32 0, 2
    %v108 = vld [vmem:[#allocation0] sm:%s106]
    %s109 = sshllo.u32 0, 2
    %110 = vst [vmem:[%s1] sm:%s109] %v108
    %s111 = scalar_lea.vmem [#allocation0], 8
    %v112 = vld [vmem:[%s111] sm:%s106]
    %s113 = sshllo.u32 0, 2
    %s114 = scalar_lea.vmem %s1, 2
    %115 = vst [vmem:[%s114] sm:%s113] %v112

// kernel: fno2d_forward.8
$region0: #{fno2d_forward.8}
  #allocation0 [shape = 'u32[]', space=smem, size = 0x4, offset = 0x4, fixed_abs, tag = 'smem constant byte address 0x4 - core index']
  #allocation1 [shape = 'u32[144,128]{1,0:T(1,128)}', space=vmem, size = 0x12000, scoped, tag = 'internal scratch']
  %s0 = inlined_call_operand.vmem [shape: f32[16,2,32], index: 0, kind: input, shape index: {}]
  %s1 = inlined_call_operand.vmem [shape: f32[16,2,32], index: 1, kind: input, shape index: {}]
  %s2 = inlined_call_operand.vmem [shape: f32[16,32,32], index: 2, kind: input, shape index: {}]
  %s3 = inlined_call_operand.vmem [shape: f32[16,32,32], index: 3, kind: input, shape index: {}]
  %s4 = inlined_call_operand.vmem [shape: f32[16,2,32], index: 4, kind: output, shape index: {0}]
  %s5 = inlined_call_operand.vmem [shape: f32[16,2,32], index: 5, kind: output, shape index: {1}]
  %6 = xla_tuple %s4, %s5
  %s7 = sld [smem:[#allocation0]]
  $region57: #{fno2d_forward.8} parent=0
    _
  %s9 = ssub.s32 1, %s7
  %s10 = scalar_select 0, %s9, %s7
  loop: start=0, step=1, limit=4
  $region2: #{fno2d_forward.8} parent=0 // loop_pre_header
    _
  $region3: #{fno2d_forward.8} parent=0 // loop_header
    %s12 = sphi 0, %s16
    %p13 = scmp.ge.s32.totalorder %s12, 4
    %s22 = sphi 0, %s24
    %s25 = sphi 0, %s22
    %s26 = sphi 0, %s25
    %s42 = sphi 0, %s26
    %s48 = sphi 0, %s50
    %s51 = sphi 0, %s48
    %s52 = sphi 0, %s51
    %s68 = sphi 0, %s52
    %s74 = sphi 0, %s76
    %s77 = sphi 0, %s74
    %s78 = sphi 0, %s77
    %s94 = sphi 0, %s78
    %s100 = sphi 0, %s102
    %s103 = sphi 0, %s100
    %s104 = sphi 0, %s103
    %s120 = sphi 0, %s104
    %s126 = sphi 0, %s128
    %s129 = sphi 0, %s126
    %s130 = sphi 0, %s129
    %s146 = sphi 0, %s130
    %s152 = sphi 0, %s154
    %s155 = sphi 0, %s152
    %s156 = sphi 0, %s155
    %s172 = sphi 0, %s156
  $region4: #{fno2d_forward.8} parent=0 // loop_header_branch
    %15 = sbr.rel (%p13) target = $region8
  $region5: #{fno2d_forward.8} parent=0 // loop_body
    %s17 = ssub.s32 %s12, 1
    %s18 = ssub.s32 %s12, 2
    %s19 = sadd.s32 %s12, 1
    %s20 = ssub.s32 %s12, %s19
    %p21 = scmp.eq.s32.totalorder %s20, 0
    %s23 = sadd.s32 %s22, 1
    %s24 = scalar_select %p21, %s22, %s23
    %p27 = pneg %p21
    %p28 = scmp.eq.s32.totalorder %s12, 1
    %p29 = por %p27, %p28
    %p30 = scmp.ne.s32.totalorder %s22, %s25
    %p31 = scmp.eq.s32.totalorder %s12, 0
    %p32 = por %p30, %p31
    %p33 = scmp.ne.s32.totalorder %s22, %s25
    %p34 = scmp.eq.s32.totalorder %s17, 1
    %p35 = por %p33, %p34
    %p36 = scmp.ne.s32.totalorder %s25, %s26
    %p37 = scmp.eq.s32.totalorder %s17, 0
    %p38 = por %p36, %p37
    %p39 = scmp.ne.s32.totalorder %s25, %s26
    %p40 = scmp.eq.s32.totalorder %s18, 1
    %p41 = por %p39, %p40
    %p43 = scmp.ne.s32.totalorder %s26, %s42
    %p44 = scmp.eq.s32.totalorder %s18, 0
    %p45 = por %p43, %p44
    %s46 = ssub.s32 %s12, %s19
    %p47 = scmp.eq.s32.totalorder %s46, 0
    %s49 = sadd.s32 %s48, 1
    %s50 = scalar_select %p47, %s48, %s49
    %p53 = pneg %p47
    %p54 = scmp.eq.s32.totalorder %s12, 1
    %p55 = por %p53, %p54
    %p56 = scmp.ne.s32.totalorder %s48, %s51
    %p57 = scmp.eq.s32.totalorder %s12, 0
    %p58 = por %p56, %p57
    %p59 = scmp.ne.s32.totalorder %s48, %s51
    %p60 = scmp.eq.s32.totalorder %s17, 1
    %p61 = por %p59, %p60
    %p62 = scmp.ne.s32.totalorder %s51, %s52
    %p63 = scmp.eq.s32.totalorder %s17, 0
    %p64 = por %p62, %p63
    %p65 = scmp.ne.s32.totalorder %s51, %s52
    %p66 = scmp.eq.s32.totalorder %s18, 1
    %p67 = por %p65, %p66
    %p69 = scmp.ne.s32.totalorder %s52, %s68
    %p70 = scmp.eq.s32.totalorder %s18, 0
    %p71 = por %p69, %p70
    %s72 = ssub.s32 %s12, %s19
    %p73 = scmp.eq.s32.totalorder %s72, 0
    %s75 = sadd.s32 %s74, 1
    %s76 = scalar_select %p73, %s74, %s75
    %p79 = pneg %p73
    %p80 = scmp.eq.s32.totalorder %s12, 1
    %p81 = por %p79, %p80
    %p82 = scmp.ne.s32.totalorder %s74, %s77
    %p83 = scmp.eq.s32.totalorder %s12, 0
    %p84 = por %p82, %p83
    %p85 = scmp.ne.s32.totalorder %s74, %s77
    %p86 = scmp.eq.s32.totalorder %s17, 1
    %p87 = por %p85, %p86
    %p88 = scmp.ne.s32.totalorder %s77, %s78
    %p89 = scmp.eq.s32.totalorder %s17, 0
    %p90 = por %p88, %p89
    %p91 = scmp.ne.s32.totalorder %s77, %s78
    %p92 = scmp.eq.s32.totalorder %s18, 1
    %p93 = por %p91, %p92
    %p95 = scmp.ne.s32.totalorder %s78, %s94
    %p96 = scmp.eq.s32.totalorder %s18, 0
    %p97 = por %p95, %p96
    %s98 = ssub.s32 %s12, %s19
    %p99 = scmp.eq.s32.totalorder %s98, 0
    %s101 = sadd.s32 %s100, 1
    %s102 = scalar_select %p99, %s100, %s101
    %p105 = pneg %p99
    %p106 = scmp.eq.s32.totalorder %s12, 1
    %p107 = por %p105, %p106
    %p108 = scmp.ne.s32.totalorder %s100, %s103
    %p109 = scmp.eq.s32.totalorder %s12, 0
    %p110 = por %p108, %p109
    %p111 = scmp.ne.s32.totalorder %s100, %s103
    %p112 = scmp.eq.s32.totalorder %s17, 1
    %p113 = por %p111, %p112
    %p114 = scmp.ne.s32.totalorder %s103, %s104
    %p115 = scmp.eq.s32.totalorder %s17, 0
    %p116 = por %p114, %p115
    %p117 = scmp.ne.s32.totalorder %s103, %s104
    %p118 = scmp.eq.s32.totalorder %s18, 1
    %p119 = por %p117, %p118
    %p121 = scmp.ne.s32.totalorder %s104, %s120
    %p122 = scmp.eq.s32.totalorder %s18, 0
    %p123 = por %p121, %p122
    %s124 = ssub.s32 %s12, %s19
    %p125 = scmp.eq.s32.totalorder %s124, 0
    %s127 = sadd.s32 %s126, 1
    %s128 = scalar_select %p125, %s126, %s127
    %p131 = pneg %p125
    %p132 = scmp.eq.s32.totalorder %s12, 1
    %p133 = por %p131, %p132
    %p134 = scmp.ne.s32.totalorder %s126, %s129
    %p135 = scmp.eq.s32.totalorder %s12, 0
    %p136 = por %p134, %p135
    %p137 = scmp.ne.s32.totalorder %s126, %s129
    %p138 = scmp.eq.s32.totalorder %s17, 1
    %p139 = por %p137, %p138
    %p140 = scmp.ne.s32.totalorder %s129, %s130
    %p141 = scmp.eq.s32.totalorder %s17, 0
    %p142 = por %p140, %p141
    %p143 = scmp.ne.s32.totalorder %s129, %s130
    %p144 = scmp.eq.s32.totalorder %s18, 1
    %p145 = por %p143, %p144
    %p147 = scmp.ne.s32.totalorder %s130, %s146
    %p148 = scmp.eq.s32.totalorder %s18, 0
    %p149 = por %p147, %p148
    %s150 = ssub.s32 %s12, %s19
    %p151 = scmp.eq.s32.totalorder %s150, 0
    %s153 = sadd.s32 %s152, 1
    %s154 = scalar_select %p151, %s152, %s153
    %p157 = pneg %p151
    %p158 = scmp.eq.s32.totalorder %s12, 1
    %p159 = por %p157, %p158
    %p160 = scmp.ne.s32.totalorder %s152, %s155
    %p161 = scmp.eq.s32.totalorder %s12, 0
    %p162 = por %p160, %p161
    %p163 = scmp.ne.s32.totalorder %s152, %s155
    %p164 = scmp.eq.s32.totalorder %s17, 1
    %p165 = por %p163, %p164
    %p166 = scmp.ne.s32.totalorder %s155, %s156
    %p167 = scmp.eq.s32.totalorder %s17, 0
    %p168 = por %p166, %p167
    %p169 = scmp.ne.s32.totalorder %s155, %s156
    %p170 = scmp.eq.s32.totalorder %s18, 1
    %p171 = por %p169, %p170
    %p173 = scmp.ne.s32.totalorder %s156, %s172
    %p174 = scmp.eq.s32.totalorder %s18, 0
    %p175 = por %p173, %p174
    %p176 = scmp.le.s32.totalorder 1, %s12
    %p177 = scmp.lt.s32.totalorder %s12, 3
    %p178 = pnand %p176, %p177
    %p179 = pneg %p178
    // Predicated region
    $region9: #{fno2d_forward.8} parent=5 // pred_check
      _
    $region10: #{fno2d_forward.8} parent=5 // pred_check_branch
      %181 = sbr.rel (%p178) target = $region12
    $region11: #{fno2d_forward.8} parent=5 // pred_region
      %s182 = ssub.s32 %s12, 1
    $region12: #{fno2d_forward.8} parent=5 // pred_fallthru
      _
    %p183 = scmp.lt.s32.totalorder %s12, 2
    // Predicated region
    $region13: #{fno2d_forward.8} parent=5 // pred_check
      %p184 = pneg %p183
    $region14: #{fno2d_forward.8} parent=5 // pred_check_branch
      %186 = sbr.rel (%p184) target = $region16
    $region15: #{fno2d_forward.8} parent=5 // pred_region
      // Predicated region
      $region17: #{fno2d_forward.8} parent=15 // pred_check
        %p187 = pneg %p32
      $region18: #{fno2d_forward.8} parent=15 // pred_check_branch
        %189 = sbr.rel (%p187) target = $region20
      $region19: #{fno2d_forward.8} parent=15 // pred_region
        %s190 = smul.u32 8, %s12
        %p191 = scmp.lt.s32.totalorder %s190, 15
        %s192 = scalar_select %p191, %s190, 15
        %s193 = smul.addr %s192, 2
        %s194 = scalar_lea.vmem %s0, %s193
        %s195 = smul.u32 8, %s12
      $region20: #{fno2d_forward.8} parent=15 // pred_fallthru
        _
      // Predicated region
      $region21: #{fno2d_forward.8} parent=15 // pred_check
        %p196 = pneg %p58
      $region22: #{fno2d_forward.8} parent=15 // pred_check_branch
        %198 = sbr.rel (%p196) target = $region24
      $region23: #{fno2d_forward.8} parent=15 // pred_region
        %s199 = smul.u32 8, %s12
        %p200 = scmp.lt.s32.totalorder %s199, 15
        %s201 = scalar_select %p200, %s199, 15
        %s202 = smul.addr %s201, 2
        %s203 = scalar_lea.vmem %s1, %s202
        %s204 = smul.u32 8, %s12
      $region24: #{fno2d_forward.8} parent=15 // pred_fallthru
        _
      // Predicated region
      $region25: #{fno2d_forward.8} parent=15 // pred_check
        %p205 = pneg %p84
      $region26: #{fno2d_forward.8} parent=15 // pred_check_branch
        %207 = sbr.rel (%p205) target = $region28
      $region27: #{fno2d_forward.8} parent=15 // pred_region
        %s208 = smul.u32 8, %s12
        %p209 = scmp.lt.s32.totalorder %s208, 15
        %s210 = scalar_select %p209, %s208, 15
        %s211 = smul.addr %s210, 4
        %s212 = smul.addr %s211, 8
        %s213 = scalar_lea.vmem %s2, %s212
        %s214 = smul.u32 8, %s12
      $region28: #{fno2d_forward.8} parent=15 // pred_fallthru
        _
      // Predicated region
      $region29: #{fno2d_forward.8} parent=15 // pred_check
        %p215 = pneg %p110
      $region30: #{fno2d_forward.8} parent=15 // pred_check_branch
        %217 = sbr.rel (%p215) target = $region32
      $region31: #{fno2d_forward.8} parent=15 // pred_region
        %s218 = smul.u32 8, %s12
        %p219 = scmp.lt.s32.totalorder %s218, 15
        %s220 = scalar_select %p219, %s218, 15
        %s221 = smul.addr %s220, 4
        %s222 = smul.addr %s221, 8
        %s223 = scalar_lea.vmem %s3, %s222
        %s224 = smul.u32 8, %s12
      $region32: #{fno2d_forward.8} parent=15 // pred_fallthru
        _
    $region16: #{fno2d_forward.8} parent=5 // pred_fallthru
      _
    %p225 = scmp.le.s32.totalorder 1, %s12
    %p226 = scmp.lt.s32.totalorder %s12, 3
    %p227 = pnand %p225, %p226
    %p228 = pneg %p227
    // Predicated region
    $region33: #{fno2d_forward.8} parent=5 // pred_check
      _
    $region34: #{fno2d_forward.8} parent=5 // pred_check_branch
      %230 = sbr.rel (%p227) target = $region36
    $region35: #{fno2d_forward.8} parent=5 // pred_region
      %s231 = ssub.s32 %s12, 1
      %s232 = smul.u32 8, %s17
      %p233 = scmp.lt.s32.totalorder %s232, 15
      %s234 = scalar_select %p233, %s232, 15
      %s235 = smul.addr %s234, 2
      %s236 = scalar_lea.vmem %s0, %s235
      %p237 = pneg %p38
      %p238 = pneg %p35
      %s239 = smul.u32 8, %s17
      %p240 = scmp.lt.s32.totalorder %s239, 15
      %s241 = scalar_select %p240, %s239, 15
      %s242 = smul.addr %s241, 2
      %s243 = scalar_lea.vmem %s1, %s242
      %p244 = pneg %p64
      %p245 = pneg %p61
      %s246 = smul.u32 8, %s17
      %p247 = scmp.lt.s32.totalorder %s246, 15
      %s248 = scalar_select %p247, %s246, 15
      %s249 = smul.addr %s248, 4
      %s250 = smul.addr %s249, 8
      %s251 = scalar_lea.vmem %s2, %s250
      %p252 = pneg %p90
      %p253 = pneg %p87
      %s254 = smul.u32 8, %s17
      %p255 = scmp.lt.s32.totalorder %s254, 15
      %s256 = scalar_select %p255, %s254, 15
      %s257 = smul.addr %s256, 4
      %s258 = smul.addr %s257, 8
      %s259 = scalar_lea.vmem %s3, %s258
      %p260 = pneg %p116
      %p261 = pneg %p113
      %p262 = pneg %p142
      %p263 = pneg %p139
      %s264 = smul.u32 8, %s17
      %p265 = scmp.lt.s32.totalorder %s264, 15
      %s266 = scalar_select %p265, %s264, 15
      %s267 = smul.addr %s266, 2
      %s268 = scalar_lea.vmem %s4, %s267
      %p269 = pneg %p168
      %p270 = pneg %p165
      %s271 = smul.u32 8, %s17
      %p272 = scmp.lt.s32.totalorder %s271, 15
      %s273 = scalar_select %p272, %s271, 15
      %s274 = smul.addr %s273, 2
      %s275 = scalar_lea.vmem %s5, %s274
      %s276 = smul.u32 8, %s17
      %p277 = scmp.lt.s32.totalorder %s276, 15
      %s278 = scalar_select %p277, %s276, 15
      %s279 = smul.addr %s278, 2
      %s280 = scalar_lea.vmem %s0, %s279
      %s281 = smul.u32 8, %s17
      %s282 = smul.u32 8, %s17
      %p283 = scmp.lt.s32.totalorder %s282, 15
      %s284 = scalar_select %p283, %s282, 15
      %s285 = smul.addr %s284, 2
      %s286 = scalar_lea.vmem %s1, %s285
      %s287 = smul.u32 8, %s17
      %s288 = smul.u32 8, %s17
      %p289 = scmp.lt.s32.totalorder %s288, 15
      %s290 = scalar_select %p289, %s288, 15
      %s291 = smul.addr %s290, 4
      %s292 = smul.addr %s291, 8
      %s293 = scalar_lea.vmem %s2, %s292
      %s294 = smul.u32 8, %s17
      %s295 = smul.u32 8, %s17
      %p296 = scmp.lt.s32.totalorder %s295, 15
      %s297 = scalar_select %p296, %s295, 15
      %s298 = smul.addr %s297, 4
      %s299 = smul.addr %s298, 8
      %s300 = scalar_lea.vmem %s3, %s299
      %s301 = smul.u32 8, %s17
      %s302 = smul.u32 8, %s17
      %p303 = scmp.lt.s32.totalorder %s302, 15
      %s304 = scalar_select %p303, %s302, 15
      %s305 = smul.addr %s304, 2
      %s306 = scalar_lea.vmem %s4, %s305
      %s307 = smul.u32 8, %s17
      %s308 = smul.u32 8, %s17
      %p309 = scmp.lt.s32.totalorder %s308, 15
      %s310 = scalar_select %p309, %s308, 15
      %s311 = smul.addr %s310, 2
      %s312 = scalar_lea.vmem %s5, %s311
      %s313 = smul.u32 8, %s17
      %v314 = vld [vmem:[%s280] sm:$0x3]
      %v315 = vld [vmem:[%s280 + $0x2] sm:$0x3]
      %v316 = vld [vmem:[%s280 + $0x4] sm:$0x3]
      %v317 = vld [vmem:[%s280 + $0x6] sm:$0x3]
      %v318 = vld [vmem:[%s280 + $0x8] sm:$0x3]
      %v319 = vld [vmem:[%s280 + $0xa] sm:$0x3]
      %v320 = vld [vmem:[%s280 + $0xc] sm:$0x3]
      %v321 = vld [vmem:[%s280 + $0xe] sm:$0x3]
      %v322 = vld [vmem:[%s286] sm:$0x3]
      %v323 = vld [vmem:[%s286 + $0x2] sm:$0x3]
      %v324 = vld [vmem:[%s286 + $0x4] sm:$0x3]
      %v325 = vld [vmem:[%s286 + $0x6] sm:$0x3]
      %v326 = vld [vmem:[%s286 + $0x8] sm:$0x3]
      %v327 = vld [vmem:[%s286 + $0xa] sm:$0x3]
      %v328 = vld [vmem:[%s286 + $0xc] sm:$0x3]
      %v329 = vld [vmem:[%s286 + $0xe] sm:$0x3]
      %v330 = vld [vmem:[%s293] sm:$0xff]
      %v331 = vld [vmem:[%s293 + $0x8] sm:$0xff]
      %v332 = vld [vmem:[%s293 + $0x10] sm:$0xff]
      %v333 = vld [vmem:[%s293 + $0x18] sm:$0xff]
      %v334 = vld [vmem:[%s293 + $0x20] sm:$0xff]
      %v335 = vld [vmem:[%s293 + $0x28] sm:$0xff]
      %v336 = vld [vmem:[%s293 + $0x30] sm:$0xff]
      %v337 = vld [vmem:[%s293 + $0x38] sm:$0xff]
      %v338 = vld [vmem:[%s293 + $0x40] sm:$0xff]
      %v339 = vld [vmem:[%s293 + $0x48] sm:$0xff]
      %v340 = vld [vmem:[%s293 + $0x50] sm:$0xff]
      %v341 = vld [vmem:[%s293 + $0x58] sm:$0xff]
      %v342 = vld [vmem:[%s293 + $0x60] sm:$0xff]
      %v343 = vld [vmem:[%s293 + $0x68] sm:$0xff]
      %v344 = vld [vmem:[%s293 + $0x70] sm:$0xff]
      %v345 = vld [vmem:[%s293 + $0x78] sm:$0xff]
      %v346 = vld [vmem:[%s293 + $0x80] sm:$0xff]
      %v347 = vld [vmem:[%s293 + $0x88] sm:$0xff]
      %v348 = vld [vmem:[%s293 + $0x90] sm:$0xff]
      %v349 = vld [vmem:[%s293 + $0x98] sm:$0xff]
      %v350 = vld [vmem:[%s293 + $0xa0] sm:$0xff]
      %v351 = vld [vmem:[%s293 + $0xa8] sm:$0xff]
      %v352 = vld [vmem:[%s293 + $0xb0] sm:$0xff]
      %v353 = vld [vmem:[%s293 + $0xb8] sm:$0xff]
      %v354 = vld [vmem:[%s293 + $0xc0] sm:$0xff]
      %v355 = vld [vmem:[%s293 + $0xc8] sm:$0xff]
      %v356 = vld [vmem:[%s293 + $0xd0] sm:$0xff]
      %v357 = vld [vmem:[%s293 + $0xd8] sm:$0xff]
      %v358 = vld [vmem:[%s293 + $0xe0] sm:$0xff]
      %v359 = vld [vmem:[%s293 + $0xe8] sm:$0xff]
      %v360 = vld [vmem:[%s293 + $0xf0] sm:$0xff]
      %v361 = vld [vmem:[%s293 + $0xf8] sm:$0xff]
      %v362 = vld [vmem:[%s300] sm:$0xff]
      %v363 = vld [vmem:[%s300 + $0x8] sm:$0xff]
      %v364 = vld [vmem:[%s300 + $0x10] sm:$0xff]
      %v365 = vld [vmem:[%s300 + $0x18] sm:$0xff]
      %v366 = vld [vmem:[%s300 + $0x20] sm:$0xff]
      %v367 = vld [vmem:[%s300 + $0x28] sm:$0xff]
      %v368 = vld [vmem:[%s300 + $0x30] sm:$0xff]
      %v369 = vld [vmem:[%s300 + $0x38] sm:$0xff]
      %v370 = vld [vmem:[%s300 + $0x40] sm:$0xff]
      %v371 = vld [vmem:[%s300 + $0x48] sm:$0xff]
      %v372 = vld [vmem:[%s300 + $0x50] sm:$0xff]
      %v373 = vld [vmem:[%s300 + $0x58] sm:$0xff]
      %v374 = vld [vmem:[%s300 + $0x60] sm:$0xff]
      %v375 = vld [vmem:[%s300 + $0x68] sm:$0xff]
      %v376 = vld [vmem:[%s300 + $0x70] sm:$0xff]
      %v377 = vld [vmem:[%s300 + $0x78] sm:$0xff]
      %v378 = vld [vmem:[%s300 + $0x80] sm:$0xff]
      %v379 = vld [vmem:[%s300 + $0x88] sm:$0xff]
      %v380 = vld [vmem:[%s300 + $0x90] sm:$0xff]
      %v381 = vld [vmem:[%s300 + $0x98] sm:$0xff]
      %v382 = vld [vmem:[%s300 + $0xa0] sm:$0xff]
      %v383 = vld [vmem:[%s300 + $0xa8] sm:$0xff]
      %v384 = vld [vmem:[%s300 + $0xb0] sm:$0xff]
      %v385 = vld [vmem:[%s300 + $0xb8] sm:$0xff]
      %v386 = vld [vmem:[%s300 + $0xc0] sm:$0xff]
      %v387 = vld [vmem:[%s300 + $0xc8] sm:$0xff]
      %v388 = vld [vmem:[%s300 + $0xd0] sm:$0xff]
      %v389 = vld [vmem:[%s300 + $0xd8] sm:$0xff]
      %v390 = vld [vmem:[%s300 + $0xe0] sm:$0xff]
      %v391 = vld [vmem:[%s300 + $0xe8] sm:$0xff]
      %v392 = vld [vmem:[%s300 + $0xf0] sm:$0xff]
      %v393 = vld [vmem:[%s300 + $0xf8] sm:$0xff]
      %vm394 = vcmask 261120
      %v396 = vsel %vm394, %v314, 0
      %398 = vmatprep.subr.mxu0 0.0
      %399 = vmatpush1.msra.mxu0 %v330
      %400 = vmatprep.subr.mxu0 0.0
      %401 = vmatpush1.msra.mxu0 %v331
      %402 = vmatprep.subr.mxu0 0.0
      %403 = vmatpush1.msra.mxu0 %v332
      %404 = vmatprep.subr.mxu0 0.0
      %405 = vmatpush1.msra.mxu0 %v333
      %406 = vmatprep.subr.mxu0 0.0
      %407 = vmatpush1.msra.mxu0 0.0
      %408 = vmatprep.subr.mxu0 0.0
      %409 = vmatpush1.msra.mxu0 0.0
      %410 = vmatprep.subr.mxu0 0.0
      %411 = vmatpush1.msra.mxu0 0.0
      %412 = vmatprep.subr.mxu0 0.0
      %413 = vmatpush1.msra.mxu0 0.0
      %414 = vmatprep.subr.mxu0 0.0
      %415 = vmatpush1.msra.mxu0 0.0
      %416 = vmatprep.subr.mxu0 0.0
      %417 = vmatpush1.msra.mxu0 0.0
      %418 = vmatprep.subr.mxu0 0.0
      %419 = vmatpush1.msra.mxu0 0.0
      %420 = vmatprep.subr.mxu0 0.0
      %421 = vmatpush1.msra.mxu0 0.0
      %422 = vmatprep.subr.mxu0 0.0
      %423 = vmatpush1.msra.mxu0 0.0
      %424 = vmatprep.subr.mxu0 0.0
      %425 = vmatpush1.msra.mxu0 0.0
      %426 = vmatprep.subr.mxu0 0.0
      %427 = vmatpush1.msra.mxu0 0.0
      %428 = vmatprep.subr.mxu0 0.0
      %429 = vmatpush1.msra.mxu0 0.0
      %430 = vmatprep.subr.mxu0 0.0
      %431 = vmatpush1.msra.mxu0 0.0
      %432 = vmatprep.subr.mxu0 0.0
      %433 = vmatpush1.msra.mxu0 0.0
      %434 = vmatprep.subr.mxu0 0.0
      %435 = vmatpush1.msra.mxu0 0.0
      %436 = vmatprep.subr.mxu0 0.0
      %437 = vmatpush1.msra.mxu0 0.0
      %438 = vmatprep.subr.mxu0 0.0
      %439 = vmatpush1.msra.mxu0 0.0
      %440 = vmatprep.subr.mxu0 0.0
      %441 = vmatpush1.msra.mxu0 0.0
      %442 = vmatprep.subr.mxu0 0.0
      %443 = vmatpush1.msra.mxu0 0.0
      %444 = vmatprep.subr.mxu0 0.0
      %445 = vmatpush1.msra.mxu0 0.0
      %446 = vmatprep.subr.mxu0 0.0
      %447 = vmatpush1.msra.mxu0 0.0
      %448 = vmatprep.subr.mxu0 0.0
      %449 = vmatpush1.msra.mxu0 0.0
      %450 = vmatprep.subr.mxu0 0.0
      %451 = vmatpush1.msra.mxu0 0.0
      %452 = vmatprep.subr.mxu0 0.0
      %453 = vmatpush1.msra.mxu0 0.0
      %454 = vmatprep.subr.mxu0 0.0
      %455 = vmatpush1.msra.mxu0 0.0
      %456 = vmatprep.subr.mxu0 0.0
      %457 = vmatpush1.msra.mxu0 0.0
      %458 = vmatprep.subr.mxu0 0.0
      %459 = vmatpush1.msra.mxu0 0.0
      %460 = vmatprep.subr.mxu0 0.0
      %461 = vmatpush1.msra.mxu0 0.0
      %462 = vmatprep.mubr.f32.mxu0 0.0
      %463 = vmatmul.mubr.f32.gmra.mrb[0].mxu0 %v396
      %v464 = vpop.f32.mrb[0].mxu0
      %v465 = vadd.f32 0.0, %v464
      %v466 = vpop.f32.mrb[0].mxu0
      %467 = vdwg.mxu0
      %v469 = vsel %vm394, %v315, 0
      %471 = vmatprep.subr.mxu0 0.0
      %472 = vmatpush1.msra.mxu0 %v334
      %473 = vmatprep.subr.mxu0 0.0
      %474 = vmatpush1.msra.mxu0 %v335
      %475 = vmatprep.subr.mxu0 0.0
      %476 = vmatpush1.msra.mxu0 %v336
      %477 = vmatprep.subr.mxu0 0.0
      %478 = vmatpush1.msra.mxu0 %v337
      %479 = vmatprep.subr.mxu0 0.0
      %480 = vmatpush1.msra.mxu0 0.0
      %481 = vmatprep.subr.mxu0 0.0
      %482 = vmatpush1.msra.mxu0 0.0
      %483 = vmatprep.subr.mxu0 0.0
      %484 = vmatpush1.msra.mxu0 0.0
      %485 = vmatprep.subr.mxu0 0.0
      %486 = vmatpush1.msra.mxu0 0.0
      %487 = vmatprep.subr.mxu0 0.0
      %488 = vmatpush1.msra.mxu0 0.0
      %489 = vmatprep.subr.mxu0 0.0
      %490 = vmatpush1.msra.mxu0 0.0
      %491 = vmatprep.subr.mxu0 0.0
      %492 = vmatpush1.msra.mxu0 0.0
      %493 = vmatprep.subr.mxu0 0.0
      %494 = vmatpush1.msra.mxu0 0.0
      %495 = vmatprep.subr.mxu0 0.0
      %496 = vmatpush1.msra.mxu0 0.0
      %497 = vmatprep.subr.mxu0 0.0
      %498 = vmatpush1.msra.mxu0 0.0
      %499 = vmatprep.subr.mxu0 0.0
      %500 = vmatpush1.msra.mxu0 0.0
      %501 = vmatprep.subr.mxu0 0.0
      %502 = vmatpush1.msra.mxu0 0.0
      %503 = vmatprep.subr.mxu0 0.0
      %504 = vmatpush1.msra.mxu0 0.0
      %505 = vmatprep.subr.mxu0 0.0
      %506 = vmatpush1.msra.mxu0 0.0
      %507 = vmatprep.subr.mxu0 0.0
      %508 = vmatpush1.msra.mxu0 0.0
      %509 = vmatprep.subr.mxu0 0.0
      %510 = vmatpush1.msra.mxu0 0.0
      %511 = vmatprep.subr.mxu0 0.0
      %512 = vmatpush1.msra.mxu0 0.0
      %513 = vmatprep.subr.mxu0 0.0
      %514 = vmatpush1.msra.mxu0 0.0
      %515 = vmatprep.subr.mxu0 0.0
      %516 = vmatpush1.msra.mxu0 0.0
      %517 = vmatprep.subr.mxu0 0.0
      %518 = vmatpush1.msra.mxu0 0.0
      %519 = vmatprep.subr.mxu0 0.0
      %520 = vmatpush1.msra.mxu0 0.0
      %521 = vmatprep.subr.mxu0 0.0
      %522 = vmatpush1.msra.mxu0 0.0
      %523 = vmatprep.subr.mxu0 0.0
      %524 = vmatpush1.msra.mxu0 0.0
      %525 = vmatprep.subr.mxu0 0.0
      %526 = vmatpush1.msra.mxu0 0.0
      %527 = vmatprep.subr.mxu0 0.0
      %528 = vmatpush1.msra.mxu0 0.0
      %529 = vmatprep.subr.mxu0 0.0
      %530 = vmatpush1.msra.mxu0 0.0
      %531 = vmatprep.subr.mxu0 0.0
      %532 = vmatpush1.msra.mxu0 0.0
      %533 = vmatprep.subr.mxu0 0.0
      %534 = vmatpush1.msra.mxu0 0.0
      %535 = vmatprep.mubr.f32.mxu0 0.0
      %536 = vmatmul.mubr.f32.gmra.mrb[0].mxu0 %v469
      %v537 = vpop.f32.mrb[0].mxu0
      %v538 = vadd.f32 0.0, %v537
      %v539 = vpop.f32.mrb[0].mxu0
      %540 = vdwg.mxu0
      %v542 = vsel %vm394, %v316, 0
      %544 = vmatprep.subr.mxu0 0.0
      %545 = vmatpush1.msra.mxu0 %v338
      %546 = vmatprep.subr.mxu0 0.0
      %547 = vmatpush1.msra.mxu0 %v339
      %548 = vmatprep.subr.mxu0 0.0
      %549 = vmatpush1.msra.mxu0 %v340
      %550 = vmatprep.subr.mxu0 0.0
      %551 = vmatpush1.msra.mxu0 %v341
      %552 = vmatprep.subr.mxu0 0.0
      %553 = vmatpush1.msra.mxu0 0.0
      %554 = vmatprep.subr.mxu0 0.0
      %555 = vmatpush1.msra.mxu0 0.0
      %556 = vmatprep.subr.mxu0 0.0
      %557 = vmatpush1.msra.mxu0 0.0
      %558 = vmatprep.subr.mxu0 0.0
      %559 = vmatpush1.msra.mxu0 0.0
      %560 = vmatprep.subr.mxu0 0.0
      %561 = vmatpush1.msra.mxu0 0.0
      %562 = vmatprep.subr.mxu0 0.0
      %563 = vmatpush1.msra.mxu0 0.0
      %564 = vmatprep.subr.mxu0 0.0
      %565 = vmatpush1.msra.mxu0 0.0
      %566 = vmatprep.subr.mxu0 0.0
      %567 = vmatpush1.msra.mxu0 0.0
      %568 = vmatprep.subr.mxu0 0.0
      %569 = vmatpush1.msra.mxu0 0.0
      %570 = vmatprep.subr.mxu0 0.0
      %571 = vmatpush1.msra.mxu0 0.0
      %572 = vmatprep.subr.mxu0 0.0
      %573 = vmatpush1.msra.mxu0 0.0
      %574 = vmatprep.subr.mxu0 0.0
      %575 = vmatpush1.msra.mxu0 0.0
      %576 = vmatprep.subr.mxu0 0.0
      %577 = vmatpush1.msra.mxu0 0.0
      %578 = vmatprep.subr.mxu0 0.0
      %579 = vmatpush1.msra.mxu0 0.0
      %580 = vmatprep.subr.mxu0 0.0
      %581 = vmatpush1.msra.mxu0 0.0
      %582 = vmatprep.subr.mxu0 0.0
      %583 = vmatpush1.msra.mxu0 0.0
      %584 = vmatprep.subr.mxu0 0.0
      %585 = vmatpush1.msra.mxu0 0.0
      %586 = vmatprep.subr.mxu0 0.0
      %587 = vmatpush1.msra.mxu0 0.0
      %588 = vmatprep.subr.mxu0 0.0
      %589 = vmatpush1.msra.mxu0 0.0
      %590 = vmatprep.subr.mxu0 0.0
      %591 = vmatpush1.msra.mxu0 0.0
      %592 = vmatprep.subr.mxu0 0.0
      %593 = vmatpush1.msra.mxu0 0.0
      %594 = vmatprep.subr.mxu0 0.0
      %595 = vmatpush1.msra.mxu0 0.0
      %596 = vmatprep.subr.mxu0 0.0
      %597 = vmatpush1.msra.mxu0 0.0
      %598 = vmatprep.subr.mxu0 0.0
      %599 = vmatpush1.msra.mxu0 0.0
      %600 = vmatprep.subr.mxu0 0.0
      %601 = vmatpush1.msra.mxu0 0.0
      %602 = vmatprep.subr.mxu0 0.0
      %603 = vmatpush1.msra.mxu0 0.0
      %604 = vmatprep.subr.mxu0 0.0
      %605 = vmatpush1.msra.mxu0 0.0
      %606 = vmatprep.subr.mxu0 0.0
      %607 = vmatpush1.msra.mxu0 0.0
      %608 = vmatprep.mubr.f32.mxu0 0.0
      %609 = vmatmul.mubr.f32.gmra.mrb[0].mxu0 %v542
      %v610 = vpop.f32.mrb[0].mxu0
      %v611 = vadd.f32 0.0, %v610
      %v612 = vpop.f32.mrb[0].mxu0
      %613 = vdwg.mxu0
      %v615 = vsel %vm394, %v317, 0
      %617 = vmatprep.subr.mxu0 0.0
      %618 = vmatpush1.msra.mxu0 %v342
      %619 = vmatprep.subr.mxu0 0.0
      %620 = vmatpush1.msra.mxu0 %v343
      %621 = vmatprep.subr.mxu0 0.0
      %622 = vmatpush1.msra.mxu0 %v344
      %623 = vmatprep.subr.mxu0 0.0
      %624 = vmatpush1.msra.mxu0 %v345
      %625 = vmatprep.subr.mxu0 0.0
      %626 = vmatpush1.msra.mxu0 0.0
      %627 = vmatprep.subr.mxu0 0.0
      %628 = vmatpush1.msra.mxu0 0.0
      %629 = vmatprep.subr.mxu0 0.0
      %630 = vmatpush1.msra.mxu0 0.0
      %631 = vmatprep.subr.mxu0 0.0
      %632 = vmatpush1.msra.mxu0 0.0
      %633 = vmatprep.subr.mxu0 0.0
      %634 = vmatpush1.msra.mxu0 0.0
      %635 = vmatprep.subr.mxu0 0.0
      %636 = vmatpush1.msra.mxu0 0.0
      %637 = vmatprep.subr.mxu0 0.0
      %638 = vmatpush1.msra.mxu0 0.0
      %639 = vmatprep.subr.mxu0 0.0
      %640 = vmatpush1.msra.mxu0 0.0
      %641 = vmatprep.subr.mxu0 0.0
      %642 = vmatpush1.msra.mxu0 0.0
      %643 = vmatprep.subr.mxu0 0.0
      %644 = vmatpush1.msra.mxu0 0.0
      %645 = vmatprep.subr.mxu0 0.0
      %646 = vmatpush1.msra.mxu0 0.0
      %647 = vmatprep.subr.mxu0 0.0
      %648 = vmatpush1.msra.mxu0 0.0
      %649 = vmatprep.subr.mxu0 0.0
      %650 = vmatpush1.msra.mxu0 0.0
      %651 = vmatprep.subr.mxu0 0.0
      %652 = vmatpush1.msra.mxu0 0.0
      %653 = vmatprep.subr.mxu0 0.0
      %654 = vmatpush1.msra.mxu0 0.0
      %655 = vmatprep.subr.mxu0 0.0
      %656 = vmatpush1.msra.mxu0 0.0
      %657 = vmatprep.subr.mxu0 0.0
      %658 = vmatpush1.msra.mxu0 0.0
      %659 = vmatprep.subr.mxu0 0.0
      %660 = vmatpush1.msra.mxu0 0.0
      %661 = vmatprep.subr.mxu0 0.0
      %662 = vmatpush1.msra.mxu0 0.0
      %663 = vmatprep.subr.mxu0 0.0
      %664 = vmatpush1.msra.mxu0 0.0
      %665 = vmatprep.subr.mxu0 0.0
      %666 = vmatpush1.msra.mxu0 0.0
      %667 = vmatprep.subr.mxu0 0.0
      %668 = vmatpush1.msra.mxu0 0.0
      %669 = vmatprep.subr.mxu0 0.0
      %670 = vmatpush1.msra.mxu0 0.0
      %671 = vmatprep.subr.mxu0 0.0
      %672 = vmatpush1.msra.mxu0 0.0
      %673 = vmatprep.subr.mxu0 0.0
      %674 = vmatpush1.msra.mxu0 0.0
      %675 = vmatprep.subr.mxu0 0.0
      %676 = vmatpush1.msra.mxu0 0.0
      %677 = vmatprep.subr.mxu0 0.0
      %678 = vmatpush1.msra.mxu0 0.0
      %679 = vmatprep.subr.mxu0 0.0
      %680 = vmatpush1.msra.mxu0 0.0
      %681 = vmatprep.mubr.f32.mxu0 0.0
      %682 = vmatmul.mubr.f32.gmra.mrb[0].mxu0 %v615
      %v683 = vpop.f32.mrb[0].mxu0
      %v684 = vadd.f32 0.0, %v683
      %v685 = vpop.f32.mrb[0].mxu0
      %686 = vdwg.mxu0
      %v688 = vsel %vm394, %v318, 0
      %690 = vmatprep.subr.mxu0 0.0
      %691 = vmatpush1.msra.mxu0 %v346
      %692 = vmatprep.subr.mxu0 0.0
      %693 = vmatpush1.msra.mxu0 %v347
      %694 = vmatprep.subr.mxu0 0.0
      %695 = vmatpush1.msra.mxu0 %v348
      %696 = vmatprep.subr.mxu0 0.0
      %697 = vmatpush1.msra.mxu0 %v349
      %698 = vmatprep.subr.mxu0 0.0
      %699 = vmatpush1.msra.mxu0 0.0
      %700 = vmatprep.subr.mxu0 0.0
      %701 = vmatpush1.msra.mxu0 0.0
      %702 = vmatprep.subr.mxu0 0.0
      %703 = vmatpush1.msra.mxu0 0.0
      %704 = vmatprep.subr.mxu0 0.0
      %705 = vmatpush1.msra.mxu0 0.0
      %706 = vmatprep.subr.mxu0 0.0
      %707 = vmatpush1.msra.mxu0 0.0
      %708 = vmatprep.subr.mxu0 0.0
      %709 = vmatpush1.msra.mxu0 0.0
      %710 = vmatprep.subr.mxu0 0.0
      %711 = vmatpush1.msra.mxu0 0.0
      %712 = vmatprep.subr.mxu0 0.0
      %713 = vmatpush1.msra.mxu0 0.0
      %714 = vmatprep.subr.mxu0 0.0
      %715 = vmatpush1.msra.mxu0 0.0
      %716 = vmatprep.subr.mxu0 0.0
      %717 = vmatpush1.msra.mxu0 0.0
      %718 = vmatprep.subr.mxu0 0.0
      %719 = vmatpush1.msra.mxu0 0.0
      %720 = vmatprep.subr.mxu0 0.0
      %721 = vmatpush1.msra.mxu0 0.0
      %722 = vmatprep.subr.mxu0 0.0
      %723 = vmatpush1.msra.mxu0 0.0
      %724 = vmatprep.subr.mxu0 0.0
      %725 = vmatpush1.msra.mxu0 0.0
      %726 = vmatprep.subr.mxu0 0.0
      %727 = vmatpush1.msra.mxu0 0.0
      %728 = vmatprep.subr.mxu0 0.0
      %729 = vmatpush1.msra.mxu0 0.0
      %730 = vmatprep.subr.mxu0 0.0
      %731 = vmatpush1.msra.mxu0 0.0
      %732 = vmatprep.subr.mxu0 0.0
      %733 = vmatpush1.msra.mxu0 0.0
      %734 = vmatprep.subr.mxu0 0.0
      %735 = vmatpush1.msra.mxu0 0.0
      %736 = vmatprep.subr.mxu0 0.0
      %737 = vmatpush1.msra.mxu0 0.0
      %738 = vmatprep.subr.mxu0 0.0
      %739 = vmatpush1.msra.mxu0 0.0
      %740 = vmatprep.subr.mxu0 0.0
      %741 = vmatpush1.msra.mxu0 0.0
      %742 = vmatprep.subr.mxu0 0.0
      %743 = vmatpush1.msra.mxu0 0.0
      %744 = vmatprep.subr.mxu0 0.0
      %745 = vmatpush1.msra.mxu0 0.0
      %746 = vmatprep.subr.mxu0 0.0
      %747 = vmatpush1.msra.mxu0 0.0
      %748 = vmatprep.subr.mxu0 0.0
      %749 = vmatpush1.msra.mxu0 0.0
      %750 = vmatprep.subr.mxu0 0.0
      %751 = vmatpush1.msra.mxu0 0.0
      %752 = vmatprep.subr.mxu0 0.0
      %753 = vmatpush1.msra.mxu0 0.0
      %754 = vmatprep.mubr.f32.mxu0 0.0
      %755 = vmatmul.mubr.f32.gmra.mrb[0].mxu0 %v688
      %v756 = vpop.f32.mrb[0].mxu0
      %v757 = vadd.f32 0.0, %v756
      %v758 = vpop.f32.mrb[0].mxu0
      %759 = vdwg.mxu0
      %v761 = vsel %vm394, %v319, 0
      %763 = vmatprep.subr.mxu0 0.0
      %764 = vmatpush1.msra.mxu0 %v350
      %765 = vmatprep.subr.mxu0 0.0
      %766 = vmatpush1.msra.mxu0 %v351
      %767 = vmatprep.subr.mxu0 0.0
      %768 = vmatpush1.msra.mxu0 %v352
      %769 = vmatprep.subr.mxu0 0.0
      %770 = vmatpush1.msra.mxu0 %v353
      %771 = vmatprep.subr.mxu0 0.0
      %772 = vmatpush1.msra.mxu0 0.0
      %773 = vmatprep.subr.mxu0 0.0
      %774 = vmatpush1.msra.mxu0 0.0
      %775 = vmatprep.subr.mxu0 0.0
      %776 = vmatpush1.msra.mxu0 0.0
      %777 = vmatprep.subr.mxu0 0.0
      %778 = vmatpush1.msra.mxu0 0.0
      %779 = vmatprep.subr.mxu0 0.0
      %780 = vmatpush1.msra.mxu0 0.0
      %781 = vmatprep.subr.mxu0 0.0
      %782 = vmatpush1.msra.mxu0 0.0
      %783 = vmatprep.subr.mxu0 0.0
      %784 = vmatpush1.msra.mxu0 0.0
      %785 = vmatprep.subr.mxu0 0.0
      %786 = vmatpush1.msra.mxu0 0.0
      %787 = vmatprep.subr.mxu0 0.0
      %788 = vmatpush1.msra.mxu0 0.0
      %789 = vmatprep.subr.mxu0 0.0
      %790 = vmatpush1.msra.mxu0 0.0
      %791 = vmatprep.subr.mxu0 0.0
      %792 = vmatpush1.msra.mxu0 0.0
      %793 = vmatprep.subr.mxu0 0.0
      %794 = vmatpush1.msra.mxu0 0.0
      %795 = vmatprep.subr.mxu0 0.0
      %796 = vmatpush1.msra.mxu0 0.0
      %797 = vmatprep.subr.mxu0 0.0
      %798 = vmatpush1.msra.mxu0 0.0
      %799 = vmatprep.subr.mxu0 0.0
      %800 = vmatpush1.msra.mxu0 0.0
      %801 = vmatprep.subr.mxu0 0.0
      %802 = vmatpush1.msra.mxu0 0.0
      %803 = vmatprep.subr.mxu0 0.0
      %804 = vmatpush1.msra.mxu0 0.0
      %805 = vmatprep.subr.mxu0 0.0
      %806 = vmatpush1.msra.mxu0 0.0
      %807 = vmatprep.subr.mxu0 0.0
      %808 = vmatpush1.msra.mxu0 0.0
      %809 = vmatprep.subr.mxu0 0.0
      %810 = vmatpush1.msra.mxu0 0.0
      %811 = vmatprep.subr.mxu0 0.0
      %812 = vmatpush1.msra.mxu0 0.0
      %813 = vmatprep.subr.mxu0 0.0
      %814 = vmatpush1.msra.mxu0 0.0
      %815 = vmatprep.subr.mxu0 0.0
      %816 = vmatpush1.msra.mxu0 0.0
      %817 = vmatprep.subr.mxu0 0.0
      %818 = vmatpush1.msra.mxu0 0.0
      %819 = vmatprep.subr.mxu0 0.0
      %820 = vmatpush1.msra.mxu0 0.0
      %821 = vmatprep.subr.mxu0 0.0
      %822 = vmatpush1.msra.mxu0 0.0
      %823 = vmatprep.subr.mxu0 0.0
      %824 = vmatpush1.msra.mxu0 0.0
      %825 = vmatprep.subr.mxu0 0.0
      %826 = vmatpush1.msra.mxu0 0.0
      %827 = vmatprep.mubr.f32.mxu0 0.0
      %828 = vmatmul.mubr.f32.gmra.mrb[0].mxu0 %v761
      %v829 = vpop.f32.mrb[0].mxu0
      %v830 = vadd.f32 0.0, %v829
      %v831 = vpop.f32.mrb[0].mxu0
      %832 = vdwg.mxu0
      %v834 = vsel %vm394, %v320, 0
      %836 = vmatprep.subr.mxu0 0.0
      %837 = vmatpush1.msra.mxu0 %v354
      %838 = vmatprep.subr.mxu0 0.0
      %839 = vmatpush1.msra.mxu0 %v355
      %840 = vmatprep.subr.mxu0 0.0
      %841 = vmatpush1.msra.mxu0 %v356
      %842 = vmatprep.subr.mxu0 0.0
      %843 = vmatpush1.msra.mxu0 %v357
      %844 = vmatprep.subr.mxu0 0.0
      %845 = vmatpush1.msra.mxu0 0.0
      %846 = vmatprep.subr.mxu0 0.0
      %847 = vmatpush1.msra.mxu0 0.0
      %848 = vmatprep.subr.mxu0 0.0
      %849 = vmatpush1.msra.mxu0 0.0
      %850 = vmatprep.subr.mxu0 0.0
      %851 = vmatpush1.msra.mxu0 0.0
      %852 = vmatprep.subr.mxu0 0.0
      %853 = vmatpush1.msra.mxu0 0.0
      %854 = vmatprep.subr.mxu0 0.0
      %855 = vmatpush1.msra.mxu0 0.0
      %856 = vmatprep.subr.mxu0 0.0
      %857 = vmatpush1.msra.mxu0 0.0
      %858 = vmatprep.subr.mxu0 0.0
      %859 = vmatpush1.msra.mxu0 0.0
      %860 = vmatprep.subr.mxu0 0.0
      %861 = vmatpush1.msra.mxu0 0.0
      %862 = vmatprep.subr.mxu0 0.0
      %863 = vmatpush1.msra.mxu0 0.0
      %864 = vmatprep.subr.mxu0 0.0
      %865 = vmatpush1.msra.mxu0 0.0
      %866 = vmatprep.subr.mxu0 0.0
      %867 = vmatpush1.msra.mxu0 0.0
      %868 = vmatprep.subr.mxu0 0.0
      %869 = vmatpush1.msra.mxu0 0.0
      %870 = vmatprep.subr.mxu0 0.0
      %871 = vmatpush1.msra.mxu0 0.0
      %872 = vmatprep.subr.mxu0 0.0
      %873 = vmatpush1.msra.mxu0 0.0
      %874 = vmatprep.subr.mxu0 0.0
      %875 = vmatpush1.msra.mxu0 0.0
      %876 = vmatprep.subr.mxu0 0.0
      %877 = vmatpush1.msra.mxu0 0.0
      %878 = vmatprep.subr.mxu0 0.0
      %879 = vmatpush1.msra.mxu0 0.0
      %880 = vmatprep.subr.mxu0 0.0
      %881 = vmatpush1.msra.mxu0 0.0
      %882 = vmatprep.subr.mxu0 0.0
      %883 = vmatpush1.msra.mxu0 0.0
      %884 = vmatprep.subr.mxu0 0.0
      %885 = vmatpush1.msra.mxu0 0.0
      %886 = vmatprep.subr.mxu0 0.0
      %887 = vmatpush1.msra.mxu0 0.0
      %888 = vmatprep.subr.mxu0 0.0
      %889 = vmatpush1.msra.mxu0 0.0
      %890 = vmatprep.subr.mxu0 0.0
      %891 = vmatpush1.msra.mxu0 0.0
      %892 = vmatprep.subr.mxu0 0.0
      %893 = vmatpush1.msra.mxu0 0.0
      %894 = vmatprep.subr.mxu0 0.0
      %895 = vmatpush1.msra.mxu0 0.0
      %896 = vmatprep.subr.mxu0 0.0
      %897 = vmatpush1.msra.mxu0 0.0
      %898 = vmatprep.subr.mxu0 0.0
      %899 = vmatpush1.msra.mxu0 0.0
      %900 = vmatprep.mubr.f32.mxu0 0.0
      %901 = vmatmul.mubr.f32.gmra.mrb[0].mxu0 %v834
      %v902 = vpop.f32.mrb[0].mxu0
      %v903 = vadd.f32 0.0, %v902
      %v904 = vpop.f32.mrb[0].mxu0
      %905 = vdwg.mxu0
      %v907 = vsel %vm394, %v321, 0
      %909 = vmatprep.subr.mxu0 0.0
      %910 = vmatpush1.msra.mxu0 %v358
      %911 = vmatprep.subr.mxu0 0.0
      %912 = vmatpush1.msra.mxu0 %v359
      %913 = vmatprep.subr.mxu0 0.0
      %914 = vmatpush1.msra.mxu0 %v360
      %915 = vmatprep.subr.mxu0 0.0
      %916 = vmatpush1.msra.mxu0 %v361
      %917 = vmatprep.subr.mxu0 0.0
      %918 = vmatpush1.msra.mxu0 0.0
      %919 = vmatprep.subr.mxu0 0.0
      %920 = vmatpush1.msra.mxu0 0.0
      %921 = vmatprep.subr.mxu0 0.0
      %922 = vmatpush1.msra.mxu0 0.0
      %923 = vmatprep.subr.mxu0 0.0
      %924 = vmatpush1.msra.mxu0 0.0
      %925 = vmatprep.subr.mxu0 0.0
      %926 = vmatpush1.msra.mxu0 0.0
      %927 = vmatprep.subr.mxu0 0.0
      %928 = vmatpush1.msra.mxu0 0.0
      %929 = vmatprep.subr.mxu0 0.0
      %930 = vmatpush1.msra.mxu0 0.0
      %931 = vmatprep.subr.mxu0 0.0
      %932 = vmatpush1.msra.mxu0 0.0
      %933 = vmatprep.subr.mxu0 0.0
      %934 = vmatpush1.msra.mxu0 0.0
      %935 = vmatprep.subr.mxu0 0.0
      %936 = vmatpush1.msra.mxu0 0.0
      %937 = vmatprep.subr.mxu0 0.0
      %938 = vmatpush1.msra.mxu0 0.0
      %939 = vmatprep.subr.mxu0 0.0
      %940 = vmatpush1.msra.mxu0 0.0
      %941 = vmatprep.subr.mxu0 0.0
      %942 = vmatpush1.msra.mxu0 0.0
      %943 = vmatprep.subr.mxu0 0.0
      %944 = vmatpush1.msra.mxu0 0.0
      %945 = vmatprep.subr.mxu0 0.0
      %946 = vmatpush1.msra.mxu0 0.0
      %947 = vmatprep.subr.mxu0 0.0
      %948 = vmatpush1.msra.mxu0 0.0
      %949 = vmatprep.subr.mxu0 0.0
      %950 = vmatpush1.msra.mxu0 0.0
      %951 = vmatprep.subr.mxu0 0.0
      %952 = vmatpush1.msra.mxu0 0.0
      %953 = vmatprep.subr.mxu0 0.0
      %954 = vmatpush1.msra.mxu0 0.0
      %955 = vmatprep.subr.mxu0 0.0
      %956 = vmatpush1.msra.mxu0 0.0
      %957 = vmatprep.subr.mxu0 0.0
      %958 = vmatpush1.msra.mxu0 0.0
      %959 = vmatprep.subr.mxu0 0.0
      %960 = vmatpush1.msra.mxu0 0.0
      %961 = vmatprep.subr.mxu0 0.0
      %962 = vmatpush1.msra.mxu0 0.0
      %963 = vmatprep.subr.mxu0 0.0
      %964 = vmatpush1.msra.mxu0 0.0
      %965 = vmatprep.subr.mxu0 0.0
      %966 = vmatpush1.msra.mxu0 0.0
      %967 = vmatprep.subr.mxu0 0.0
      %968 = vmatpush1.msra.mxu0 0.0
      %969 = vmatprep.subr.mxu0 0.0
      %970 = vmatpush1.msra.mxu0 0.0
      %971 = vmatprep.subr.mxu0 0.0
      %972 = vmatpush1.msra.mxu0 0.0
      %973 = vmatprep.mubr.f32.mxu0 0.0
      %974 = vmatmul.mubr.f32.gmra.mrb[0].mxu0 %v907
      %v975 = vpop.f32.mrb[0].mxu0
      %v976 = vadd.f32 0.0, %v975
      %v977 = vpop.f32.mrb[0].mxu0
      %978 = vdwg.mxu0
      %v980 = vsel %vm394, %v322, 0
      %982 = vmatprep.subr.mxu0 0.0
      %983 = vmatpush1.msra.mxu0 %v362
      %984 = vmatprep.subr.mxu0 0.0
      %985 = vmatpush1.msra.mxu0 %v363
      %986 = vmatprep.subr.mxu0 0.0
      %987 = vmatpush1.msra.mxu0 %v364
      %988 = vmatprep.subr.mxu0 0.0
      %989 = vmatpush1.msra.mxu0 %v365
      %990 = vmatprep.subr.mxu0 0.0
      %991 = vmatpush1.msra.mxu0 0.0
      %992 = vmatprep.subr.mxu0 0.0
      %993 = vmatpush1.msra.mxu0 0.0
      %994 = vmatprep.subr.mxu0 0.0
      %995 = vmatpush1.msra.mxu0 0.0
      %996 = vmatprep.subr.mxu0 0.0
      %997 = vmatpush1.msra.mxu0 0.0
      %998 = vmatprep.subr.mxu0 0.0
      %999 = vmatpush1.msra.mxu0 0.0
      %1000 = vmatprep.subr.mxu0 0.0
      %1001 = vmatpush1.msra.mxu0 0.0
      %1002 = vmatprep.subr.mxu0 0.0
      %1003 = vmatpush1.msra.mxu0 0.0
      %1004 = vmatprep.subr.mxu0 0.0
      %1005 = vmatpush1.msra.mxu0 0.0
      %1006 = vmatprep.subr.mxu0 0.0
      %1007 = vmatpush1.msra.mxu0 0.0
      %1008 = vmatprep.subr.mxu0 0.0
      %1009 = vmatpush1.msra.mxu0 0.0
      %1010 = vmatprep.subr.mxu0 0.0
      %1011 = vmatpush1.msra.mxu0 0.0
      %1012 = vmatprep.subr.mxu0 0.0
      %1013 = vmatpush1.msra.mxu0 0.0
      %1014 = vmatprep.subr.mxu0 0.0
      %1015 = vmatpush1.msra.mxu0 0.0
      %1016 = vmatprep.subr.mxu0 0.0
      %1017 = vmatpush1.msra.mxu0 0.0
      %1018 = vmatprep.subr.mxu0 0.0
      %1019 = vmatpush1.msra.mxu0 0.0
      %1020 = vmatprep.subr.mxu0 0.0
      %1021 = vmatpush1.msra.mxu0 0.0
      %1022 = vmatprep.subr.mxu0 0.0
      %1023 = vmatpush1.msra.mxu0 0.0
      %1024 = vmatprep.subr.mxu0 0.0
      %1025 = vmatpush1.msra.mxu0 0.0
      %1026 = vmatprep.subr.mxu0 0.0
      %1027 = vmatpush1.msra.mxu0 0.0
      %1028 = vmatprep.subr.mxu0 0.0
      %1029 = vmatpush1.msra.mxu0 0.0
      %1030 = vmatprep.subr.mxu0 0.0
      %1031 = vmatpush1.msra.mxu0 0.0
      %1032 = vmatprep.subr.mxu0 0.0
      %1033 = vmatpush1.msra.mxu0 0.0
      %1034 = vmatprep.subr.mxu0 0.0
      %1035 = vmatpush1.msra.mxu0 0.0
      %1036 = vmatprep.subr.mxu0 0.0
      %1037 = vmatpush1.msra.mxu0 0.0
      %1038 = vmatprep.subr.mxu0 0.0
      %1039 = vmatpush1.msra.mxu0 0.0
      %1040 = vmatprep.subr.mxu0 0.0
      %1041 = vmatpush1.msra.mxu0 0.0
      %1042 = vmatprep.subr.mxu0 0.0
      %1043 = vmatpush1.msra.mxu0 0.0
      %1044 = vmatprep.subr.mxu0 0.0
      %1045 = vmatpush1.msra.mxu0 0.0
      %1046 = vmatprep.mubr.f32.mxu0 0.0
      %1047 = vmatmul.mubr.f32.gmra.mrb[0].mxu0 %v980
      %v1048 = vpop.f32.mrb[0].mxu0
      %v1049 = vadd.f32 0.0, %v1048
      %v1050 = vpop.f32.mrb[0].mxu0
      %1051 = vdwg.mxu0
      %v1053 = vsel %vm394, %v323, 0
      %1055 = vmatprep.subr.mxu0 0.0
      %1056 = vmatpush1.msra.mxu0 %v366
      %1057 = vmatprep.subr.mxu0 0.0
      %1058 = vmatpush1.msra.mxu0 %v367
      %1059 = vmatprep.subr.mxu0 0.0
      %1060 = vmatpush1.msra.mxu0 %v368
      %1061 = vmatprep.subr.mxu0 0.0
      %1062 = vmatpush1.msra.mxu0 %v369
      %1063 = vmatprep.subr.mxu0 0.0
      %1064 = vmatpush1.msra.mxu0 0.0
      %1065 = vmatprep.subr.mxu0 0.0
      %1066 = vmatpush1.msra.mxu0 0.0
      %1067 = vmatprep.subr.mxu0 0.0
      %1068 = vmatpush1.msra.mxu0 0.0
      %1069 = vmatprep.subr.mxu0 0.0
      %1070 = vmatpush1.msra.mxu0 0.0
      %1071 = vmatprep.subr.mxu0 0.0
      %1072 = vmatpush1.msra.mxu0 0.0
      %1073 = vmatprep.subr.mxu0 0.0
      %1074 = vmatpush1.msra.mxu0 0.0
      %1075 = vmatprep.subr.mxu0 0.0
      %1076 = vmatpush1.msra.mxu0 0.0
      %1077 = vmatprep.subr.mxu0 0.0
      %1078 = vmatpush1.msra.mxu0 0.0
      %1079 = vmatprep.subr.mxu0 0.0
      %1080 = vmatpush1.msra.mxu0 0.0
      %1081 = vmatprep.subr.mxu0 0.0
      %1082 = vmatpush1.msra.mxu0 0.0
      %1083 = vmatprep.subr.mxu0 0.0
      %1084 = vmatpush1.msra.mxu0 0.0
      %1085 = vmatprep.subr.mxu0 0.0
      %1086 = vmatpush1.msra.mxu0 0.0
      %1087 = vmatprep.subr.mxu0 0.0
      %1088 = vmatpush1.msra.mxu0 0.0
      %1089 = vmatprep.subr.mxu0 0.0
      %1090 = vmatpush1.msra.mxu0 0.0
      %1091 = vmatprep.subr.mxu0 0.0
      %1092 = vmatpush1.msra.mxu0 0.0
      %1093 = vmatprep.subr.mxu0 0.0
      %1094 = vmatpush1.msra.mxu0 0.0
      %1095 = vmatprep.subr.mxu0 0.0
      %1096 = vmatpush1.msra.mxu0 0.0
      %1097 = vmatprep.subr.mxu0 0.0
      %1098 = vmatpush1.msra.mxu0 0.0
      %1099 = vmatprep.subr.mxu0 0.0
      %1100 = vmatpush1.msra.mxu0 0.0
      %1101 = vmatprep.subr.mxu0 0.0
      %1102 = vmatpush1.msra.mxu0 0.0
      %1103 = vmatprep.subr.mxu0 0.0
      %1104 = vmatpush1.msra.mxu0 0.0
      %1105 = vmatprep.subr.mxu0 0.0
      %1106 = vmatpush1.msra.mxu0 0.0
      %1107 = vmatprep.subr.mxu0 0.0
      %1108 = vmatpush1.msra.mxu0 0.0
      %1109 = vmatprep.subr.mxu0 0.0
      %1110 = vmatpush1.msra.mxu0 0.0
      %1111 = vmatprep.subr.mxu0 0.0
      %1112 = vmatpush1.msra.mxu0 0.0
      %1113 = vmatprep.subr.mxu0 0.0
      %1114 = vmatpush1.msra.mxu0 0.0
      %1115 = vmatprep.subr.mxu0 0.0
      %1116 = vmatpush1.msra.mxu0 0.0
      %1117 = vmatprep.subr.mxu0 0.0
      %1118 = vmatpush1.msra.mxu0 0.0
      %1119 = vmatprep.mubr.f32.mxu0 0.0
      %1120 = vmatmul.mubr.f32.gmra.mrb[0].mxu0 %v1053
      %v1121 = vpop.f32.mrb[0].mxu0
      %v1122 = vadd.f32 0.0, %v1121
      %v1123 = vpop.f32.mrb[0].mxu0
      %1124 = vdwg.mxu0
      %v1126 = vsel %vm394, %v324, 0
      %1128 = vmatprep.subr.mxu0 0.0
      %1129 = vmatpush1.msra.mxu0 %v370
      %1130 = vmatprep.subr.mxu0 0.0
      %1131 = vmatpush1.msra.mxu0 %v371
      %1132 = vmatprep.subr.mxu0 0.0
      %1133 = vmatpush1.msra.mxu0 %v372
      %1134 = vmatprep.subr.mxu0 0.0
      %1135 = vmatpush1.msra.mxu0 %v373
      %1136 = vmatprep.subr.mxu0 0.0
      %1137 = vmatpush1.msra.mxu0 0.0
      %1138 = vmatprep.subr.mxu0 0.0
      %1139 = vmatpush1.msra.mxu0 0.0
      %1140 = vmatprep.subr.mxu0 0.0
      %1141 = vmatpush1.msra.mxu0 0.0
      %1142 = vmatprep.subr.mxu0 0.0
      %1143 = vmatpush1.msra.mxu0 0.0
      %1144 = vmatprep.subr.mxu0 0.0
      %1145 = vmatpush1.msra.mxu0 0.0
      %1146 = vmatprep.subr.mxu0 0.0
      %1147 = vmatpush1.msra.mxu0 0.0
      %1148 = vmatprep.subr.mxu0 0.0
      %1149 = vmatpush1.msra.mxu0 0.0
      %1150 = vmatprep.subr.mxu0 0.0
      %1151 = vmatpush1.msra.mxu0 0.0
      %1152 = vmatprep.subr.mxu0 0.0
      %1153 = vmatpush1.msra.mxu0 0.0
      %1154 = vmatprep.subr.mxu0 0.0
      %1155 = vmatpush1.msra.mxu0 0.0
      %1156 = vmatprep.subr.mxu0 0.0
      %1157 = vmatpush1.msra.mxu0 0.0
      %1158 = vmatprep.subr.mxu0 0.0
      %1159 = vmatpush1.msra.mxu0 0.0
      %1160 = vmatprep.subr.mxu0 0.0
      %1161 = vmatpush1.msra.mxu0 0.0
      %1162 = vmatprep.subr.mxu0 0.0
      %1163 = vmatpush1.msra.mxu0 0.0
      %1164 = vmatprep.subr.mxu0 0.0
      %1165 = vmatpush1.msra.mxu0 0.0
      %1166 = vmatprep.subr.mxu0 0.0
      %1167 = vmatpush1.msra.mxu0 0.0
      %1168 = vmatprep.subr.mxu0 0.0
      %1169 = vmatpush1.msra.mxu0 0.0
      %1170 = vmatprep.subr.mxu0 0.0
      %1171 = vmatpush1.msra.mxu0 0.0
      %1172 = vmatprep.subr.mxu0 0.0
      %1173 = vmatpush1.msra.mxu0 0.0
      %1174 = vmatprep.subr.mxu0 0.0
      %1175 = vmatpush1.msra.mxu0 0.0
      %1176 = vmatprep.subr.mxu0 0.0
      %1177 = vmatpush1.msra.mxu0 0.0
      %1178 = vmatprep.subr.mxu0 0.0
      %1179 = vmatpush1.msra.mxu0 0.0
      %1180 = vmatprep.subr.mxu0 0.0
      %1181 = vmatpush1.msra.mxu0 0.0
      %1182 = vmatprep.subr.mxu0 0.0
      %1183 = vmatpush1.msra.mxu0 0.0
      %1184 = vmatprep.subr.mxu0 0.0
      %1185 = vmatpush1.msra.mxu0 0.0
      %1186 = vmatprep.subr.mxu0 0.0
      %1187 = vmatpush1.msra.mxu0 0.0
      %1188 = vmatprep.subr.mxu0 0.0
      %1189 = vmatpush1.msra.mxu0 0.0
      %1190 = vmatprep.subr.mxu0 0.0
      %1191 = vmatpush1.msra.mxu0 0.0
      %1192 = vmatprep.mubr.f32.mxu0 0.0
      %1193 = vmatmul.mubr.f32.gmra.mrb[0].mxu0 %v1126
      %v1194 = vpop.f32.mrb[0].mxu0
      %v1195 = vadd.f32 0.0, %v1194
      %v1196 = vpop.f32.mrb[0].mxu0
      %1197 = vdwg.mxu0
      %v1199 = vsel %vm394, %v325, 0
      %1201 = vmatprep.subr.mxu0 0.0
      %1202 = vmatpush1.msra.mxu0 %v374
      %1203 = vmatprep.subr.mxu0 0.0
      %1204 = vmatpush1.msra.mxu0 %v375
      %1205 = vmatprep.subr.mxu0 0.0
      %1206 = vmatpush1.msra.mxu0 %v376
      %1207 = vmatprep.subr.mxu0 0.0
      %1208 = vmatpush1.msra.mxu0 %v377
      %1209 = vmatprep.subr.mxu0 0.0
      %1210 = vmatpush1.msra.mxu0 0.0
      %1211 = vmatprep.subr.mxu0 0.0
      %1212 = vmatpush1.msra.mxu0 0.0
      %1213 = vmatprep.subr.mxu0 0.0
      %1214 = vmatpush1.msra.mxu0 0.0
      %1215 = vmatprep.subr.mxu0 0.0
      %1216 = vmatpush1.msra.mxu0 0.0
      %1217 = vmatprep.subr.mxu0 0.0
      %1218 = vmatpush1.msra.mxu0 0.0
      %1219 = vmatprep.subr.mxu0 0.0
      %1220 = vmatpush1.msra.mxu0 0.0
      %1221 = vmatprep.subr.mxu0 0.0
      %1222 = vmatpush1.msra.mxu0 0.0
      %1223 = vmatprep.subr.mxu0 0.0
      %1224 = vmatpush1.msra.mxu0 0.0
      %1225 = vmatprep.subr.mxu0 0.0
      %1226 = vmatpush1.msra.mxu0 0.0
      %1227 = vmatprep.subr.mxu0 0.0
      %1228 = vmatpush1.msra.mxu0 0.0
      %1229 = vmatprep.subr.mxu0 0.0
      %1230 = vmatpush1.msra.mxu0 0.0
      %1231 = vmatprep.subr.mxu0 0.0
      %1232 = vmatpush1.msra.mxu0 0.0
      %1233 = vmatprep.subr.mxu0 0.0
      %1234 = vmatpush1.msra.mxu0 0.0
      %1235 = vmatprep.subr.mxu0 0.0
      %1236 = vmatpush1.msra.mxu0 0.0
      %1237 = vmatprep.subr.mxu0 0.0
      %1238 = vmatpush1.msra.mxu0 0.0
      %1239 = vmatprep.subr.mxu0 0.0
      %1240 = vmatpush1.msra.mxu0 0.0
      %1241 = vmatprep.subr.mxu0 0.0
      %1242 = vmatpush1.msra.mxu0 0.0
      %1243 = vmatprep.subr.mxu0 0.0
      %1244 = vmatpush1.msra.mxu0 0.0
      %1245 = vmatprep.subr.mxu0 0.0
      %1246 = vmatpush1.msra.mxu0 0.0
      %1247 = vmatprep.subr.mxu0 0.0
      %1248 = vmatpush1.msra.mxu0 0.0
      %1249 = vmatprep.subr.mxu0 0.0
      %1250 = vmatpush1.msra.mxu0 0.0
      %1251 = vmatprep.subr.mxu0 0.0
      %1252 = vmatpush1.msra.mxu0 0.0
      %1253 = vmatprep.subr.mxu0 0.0
      %1254 = vmatpush1.msra.mxu0 0.0
      %1255 = vmatprep.subr.mxu0 0.0
      %1256 = vmatpush1.msra.mxu0 0.0
      %1257 = vmatprep.subr.mxu0 0.0
      %1258 = vmatpush1.msra.mxu0 0.0
      %1259 = vmatprep.subr.mxu0 0.0
      %1260 = vmatpush1.msra.mxu0 0.0
      %1261 = vmatprep.subr.mxu0 0.0
      %1262 = vmatpush1.msra.mxu0 0.0
      %1263 = vmatprep.subr.mxu0 0.0
      %1264 = vmatpush1.msra.mxu0 0.0
      %1265 = vmatprep.mubr.f32.mxu0 0.0
      %1266 = vmatmul.mubr.f32.gmra.mrb[0].mxu0 %v1199
      %v1267 = vpop.f32.mrb[0].mxu0
      %v1268 = vadd.f32 0.0, %v1267
      %v1269 = vpop.f32.mrb[0].mxu0
      %1270 = vdwg.mxu0
      %v1272 = vsel %vm394, %v326, 0
      %1274 = vmatprep.subr.mxu0 0.0
      %1275 = vmatpush1.msra.mxu0 %v378
      %1276 = vmatprep.subr.mxu0 0.0
      %1277 = vmatpush1.msra.mxu0 %v379
      %1278 = vmatprep.subr.mxu0 0.0
      %1279 = vmatpush1.msra.mxu0 %v380
      %1280 = vmatprep.subr.mxu0 0.0
      %1281 = vmatpush1.msra.mxu0 %v381
      %1282 = vmatprep.subr.mxu0 0.0
      %1283 = vmatpush1.msra.mxu0 0.0
      %1284 = vmatprep.subr.mxu0 0.0
      %1285 = vmatpush1.msra.mxu0 0.0
      %1286 = vmatprep.subr.mxu0 0.0
      %1287 = vmatpush1.msra.mxu0 0.0
      %1288 = vmatprep.subr.mxu0 0.0
      %1289 = vmatpush1.msra.mxu0 0.0
      %1290 = vmatprep.subr.mxu0 0.0
      %1291 = vmatpush1.msra.mxu0 0.0
      %1292 = vmatprep.subr.mxu0 0.0
      %1293 = vmatpush1.msra.mxu0 0.0
      %1294 = vmatprep.subr.mxu0 0.0
      %1295 = vmatpush1.msra.mxu0 0.0
      %1296 = vmatprep.subr.mxu0 0.0
      %1297 = vmatpush1.msra.mxu0 0.0
      %1298 = vmatprep.subr.mxu0 0.0
      %1299 = vmatpush1.msra.mxu0 0.0
      %1300 = vmatprep.subr.mxu0 0.0
      %1301 = vmatpush1.msra.mxu0 0.0
      %1302 = vmatprep.subr.mxu0 0.0
      %1303 = vmatpush1.msra.mxu0 0.0
      %1304 = vmatprep.subr.mxu0 0.0
      %1305 = vmatpush1.msra.mxu0 0.0
      %1306 = vmatprep.subr.mxu0 0.0
      %1307 = vmatpush1.msra.mxu0 0.0
      %1308 = vmatprep.subr.mxu0 0.0
      %1309 = vmatpush1.msra.mxu0 0.0
      %1310 = vmatprep.subr.mxu0 0.0
      %1311 = vmatpush1.msra.mxu0 0.0
      %1312 = vmatprep.subr.mxu0 0.0
      %1313 = vmatpush1.msra.mxu0 0.0
      %1314 = vmatprep.subr.mxu0 0.0
      %1315 = vmatpush1.msra.mxu0 0.0
      %1316 = vmatprep.subr.mxu0 0.0
      %1317 = vmatpush1.msra.mxu0 0.0
      %1318 = vmatprep.subr.mxu0 0.0
      %1319 = vmatpush1.msra.mxu0 0.0
      %1320 = vmatprep.subr.mxu0 0.0
      %1321 = vmatpush1.msra.mxu0 0.0
      %1322 = vmatprep.subr.mxu0 0.0
      %1323 = vmatpush1.msra.mxu0 0.0
      %1324 = vmatprep.subr.mxu0 0.0
      %1325 = vmatpush1.msra.mxu0 0.0
      %1326 = vmatprep.subr.mxu0 0.0
      %1327 = vmatpush1.msra.mxu0 0.0
      %1328 = vmatprep.subr.mxu0 0.0
      %1329 = vmatpush1.msra.mxu0 0.0
      %1330 = vmatprep.subr.mxu0 0.0
      %1331 = vmatpush1.msra.mxu0 0.0
      %1332 = vmatprep.subr.mxu0 0.0
      %1333 = vmatpush1.msra.mxu0 0.0
      %1334 = vmatprep.subr.mxu0 0.0
      %1335 = vmatpush1.msra.mxu0 0.0
      %1336 = vmatprep.subr.mxu0 0.0
      %1337 = vmatpush1.msra.mxu0 0.0
      %1338 = vmatprep.mubr.f32.mxu0 0.0
      %1339 = vmatmul.mubr.f32.gmra.mrb[0].mxu0 %v1272
      %v1340 = vpop.f32.mrb[0].mxu0
      %v1341 = vadd.f32 0.0, %v1340
      %v1342 = vpop.f32.mrb[0].mxu0
      %1343 = vdwg.mxu0
      %v1345 = vsel %vm394, %v327, 0
      %1347 = vmatprep.subr.mxu0 0.0
      %1348 = vmatpush1.msra.mxu0 %v382
      %1349 = vmatprep.subr.mxu0 0.0
      %1350 = vmatpush1.msra.mxu0 %v383
      %1351 = vmatprep.subr.mxu0 0.0
      %1352 = vmatpush1.msra.mxu0 %v384
      %1353 = vmatprep.subr.mxu0 0.0
      %1354 = vmatpush1.msra.mxu0 %v385
      %1355 = vmatprep.subr.mxu0 0.0
      %1356 = vmatpush1.msra.mxu0 0.0
      %1357 = vmatprep.subr.mxu0 0.0
      %1358 = vmatpush1.msra.mxu0 0.0
      %1359 = vmatprep.subr.mxu0 0.0
      %1360 = vmatpush1.msra.mxu0 0.0
      %1361 = vmatprep.subr.mxu0 0.0
      %1362 = vmatpush1.msra.mxu0 0.0
      %1363 = vmatprep.subr.mxu0 0.0
      %1364 = vmatpush1.msra.mxu0 0.0
      %1365 = vmatprep.subr.mxu0 0.0
      %1366 = vmatpush1.msra.mxu0 0.0
      %1367 = vmatprep.subr.mxu0 0.0
      %1368 = vmatpush1.msra.mxu0 0.0
      %1369 = vmatprep.subr.mxu0 0.0
      %1370 = vmatpush1.msra.mxu0 0.0
      %1371 = vmatprep.subr.mxu0 0.0
      %1372 = vmatpush1.msra.mxu0 0.0
      %1373 = vmatprep.subr.mxu0 0.0
      %1374 = vmatpush1.msra.mxu0 0.0
      %1375 = vmatprep.subr.mxu0 0.0
      %1376 = vmatpush1.msra.mxu0 0.0
      %1377 = vmatprep.subr.mxu0 0.0
      %1378 = vmatpush1.msra.mxu0 0.0
      %1379 = vmatprep.subr.mxu0 0.0
      %1380 = vmatpush1.msra.mxu0 0.0
      %1381 = vmatprep.subr.mxu0 0.0
      %1382 = vmatpush1.msra.mxu0 0.0
      %1383 = vmatprep.subr.mxu0 0.0
      %1384 = vmatpush1.msra.mxu0 0.0
      %1385 = vmatprep.subr.mxu0 0.0
      %1386 = vmatpush1.msra.mxu0 0.0
      %1387 = vmatprep.subr.mxu0 0.0
      %1388 = vmatpush1.msra.mxu0 0.0
      %1389 = vmatprep.subr.mxu0 0.0
      %1390 = vmatpush1.msra.mxu0 0.0
      %1391 = vmatprep.subr.mxu0 0.0
      %1392 = vmatpush1.msra.mxu0 0.0
      %1393 = vmatprep.subr.mxu0 0.0
      %1394 = vmatpush1.msra.mxu0 0.0
      %1395 = vmatprep.subr.mxu0 0.0
      %1396 = vmatpush1.msra.mxu0 0.0
      %1397 = vmatprep.subr.mxu0 0.0
      %1398 = vmatpush1.msra.mxu0 0.0
      %1399 = vmatprep.subr.mxu0 0.0
      %1400 = vmatpush1.msra.mxu0 0.0
      %1401 = vmatprep.subr.mxu0 0.0
      %1402 = vmatpush1.msra.mxu0 0.0
      %1403 = vmatprep.subr.mxu0 0.0
      %1404 = vmatpush1.msra.mxu0 0.0
      %1405 = vmatprep.subr.mxu0 0.0
      %1406 = vmatpush1.msra.mxu0 0.0
      %1407 = vmatprep.subr.mxu0 0.0
      %1408 = vmatpush1.msra.mxu0 0.0
      %1409 = vmatprep.subr.mxu0 0.0
      %1410 = vmatpush1.msra.mxu0 0.0
      %1411 = vmatprep.mubr.f32.mxu0 0.0
      %1412 = vmatmul.mubr.f32.gmra.mrb[0].mxu0 %v1345
      %v1413 = vpop.f32.mrb[0].mxu0
      %v1414 = vadd.f32 0.0, %v1413
      %v1415 = vpop.f32.mrb[0].mxu0
      %1416 = vdwg.mxu0
      %v1418 = vsel %vm394, %v328, 0
      %1420 = vmatprep.subr.mxu0 0.0
      %1421 = vmatpush1.msra.mxu0 %v386
      %1422 = vmatprep.subr.mxu0 0.0
      %1423 = vmatpush1.msra.mxu0 %v387
      %1424 = vmatprep.subr.mxu0 0.0
      %1425 = vmatpush1.msra.mxu0 %v388
      %1426 = vmatprep.subr.mxu0 0.0
      %1427 = vmatpush1.msra.mxu0 %v389
      %1428 = vmatprep.subr.mxu0 0.0
      %1429 = vmatpush1.msra.mxu0 0.0
      %1430 = vmatprep.subr.mxu0 0.0
      %1431 = vmatpush1.msra.mxu0 0.0
      %1432 = vmatprep.subr.mxu0 0.0
      %1433 = vmatpush1.msra.mxu0 0.0
      %1434 = vmatprep.subr.mxu0 0.0
      %1435 = vmatpush1.msra.mxu0 0.0
      %1436 = vmatprep.subr.mxu0 0.0
      %1437 = vmatpush1.msra.mxu0 0.0
      %1438 = vmatprep.subr.mxu0 0.0
      %1439 = vmatpush1.msra.mxu0 0.0
      %1440 = vmatprep.subr.mxu0 0.0
      %1441 = vmatpush1.msra.mxu0 0.0
      %1442 = vmatprep.subr.mxu0 0.0
      %1443 = vmatpush1.msra.mxu0 0.0
      %1444 = vmatprep.subr.mxu0 0.0
      %1445 = vmatpush1.msra.mxu0 0.0
      %1446 = vmatprep.subr.mxu0 0.0
      %1447 = vmatpush1.msra.mxu0 0.0
      %1448 = vmatprep.subr.mxu0 0.0
      %1449 = vmatpush1.msra.mxu0 0.0
      %1450 = vmatprep.subr.mxu0 0.0
      %1451 = vmatpush1.msra.mxu0 0.0
      %1452 = vmatprep.subr.mxu0 0.0
      %1453 = vmatpush1.msra.mxu0 0.0
      %1454 = vmatprep.subr.mxu0 0.0
      %1455 = vmatpush1.msra.mxu0 0.0
      %1456 = vmatprep.subr.mxu0 0.0
      %1457 = vmatpush1.msra.mxu0 0.0
      %1458 = vmatprep.subr.mxu0 0.0
      %1459 = vmatpush1.msra.mxu0 0.0
      %1460 = vmatprep.subr.mxu0 0.0
      %1461 = vmatpush1.msra.mxu0 0.0
      %1462 = vmatprep.subr.mxu0 0.0
      %1463 = vmatpush1.msra.mxu0 0.0
      %1464 = vmatprep.subr.mxu0 0.0
      %1465 = vmatpush1.msra.mxu0 0.0
      %1466 = vmatprep.subr.mxu0 0.0
      %1467 = vmatpush1.msra.mxu0 0.0
      %1468 = vmatprep.subr.mxu0 0.0
      %1469 = vmatpush1.msra.mxu0 0.0
      %1470 = vmatprep.subr.mxu0 0.0
      %1471 = vmatpush1.msra.mxu0 0.0
      %1472 = vmatprep.subr.mxu0 0.0
      %1473 = vmatpush1.msra.mxu0 0.0
      %1474 = vmatprep.subr.mxu0 0.0
      %1475 = vmatpush1.msra.mxu0 0.0
      %1476 = vmatprep.subr.mxu0 0.0
      %1477 = vmatpush1.msra.mxu0 0.0
      %1478 = vmatprep.subr.mxu0 0.0
      %1479 = vmatpush1.msra.mxu0 0.0
      %1480 = vmatprep.subr.mxu0 0.0
      %1481 = vmatpush1.msra.mxu0 0.0
      %1482 = vmatprep.subr.mxu0 0.0
      %1483 = vmatpush1.msra.mxu0 0.0
      %1484 = vmatprep.mubr.f32.mxu0 0.0
      %1485 = vmatmul.mubr.f32.gmra.mrb[0].mxu0 %v1418
      %v1486 = vpop.f32.mrb[0].mxu0
      %v1487 = vadd.f32 0.0, %v1486
      %v1488 = vpop.f32.mrb[0].mxu0
      %1489 = vdwg.mxu0
      %v1491 = vsel %vm394, %v329, 0
      %1493 = vmatprep.subr.mxu0 0.0
      %1494 = vmatpush1.msra.mxu0 %v390
      %1495 = vmatprep.subr.mxu0 0.0
      %1496 = vmatpush1.msra.mxu0 %v391
      %1497 = vmatprep.subr.mxu0 0.0
      %1498 = vmatpush1.msra.mxu0 %v392
      %1499 = vmatprep.subr.mxu0 0.0
      %1500 = vmatpush1.msra.mxu0 %v393
      %1501 = vmatprep.subr.mxu0 0.0
      %1502 = vmatpush1.msra.mxu0 0.0
      %1503 = vmatprep.subr.mxu0 0.0
      %1504 = vmatpush1.msra.mxu0 0.0
      %1505 = vmatprep.subr.mxu0 0.0
      %1506 = vmatpush1.msra.mxu0 0.0
      %1507 = vmatprep.subr.mxu0 0.0
      %1508 = vmatpush1.msra.mxu0 0.0
      %1509 = vmatprep.subr.mxu0 0.0
      %1510 = vmatpush1.msra.mxu0 0.0
      %1511 = vmatprep.subr.mxu0 0.0
      %1512 = vmatpush1.msra.mxu0 0.0
      %1513 = vmatprep.subr.mxu0 0.0
      %1514 = vmatpush1.msra.mxu0 0.0
      %1515 = vmatprep.subr.mxu0 0.0
      %1516 = vmatpush1.msra.mxu0 0.0
      %1517 = vmatprep.subr.mxu0 0.0
      %1518 = vmatpush1.msra.mxu0 0.0
      %1519 = vmatprep.subr.mxu0 0.0
      %1520 = vmatpush1.msra.mxu0 0.0
      %1521 = vmatprep.subr.mxu0 0.0
      %1522 = vmatpush1.msra.mxu0 0.0
      %1523 = vmatprep.subr.mxu0 0.0
      %1524 = vmatpush1.msra.mxu0 0.0
      %1525 = vmatprep.subr.mxu0 0.0
      %1526 = vmatpush1.msra.mxu0 0.0
      %1527 = vmatprep.subr.mxu0 0.0
      %1528 = vmatpush1.msra.mxu0 0.0
      %1529 = vmatprep.subr.mxu0 0.0
      %1530 = vmatpush1.msra.mxu0 0.0
      %1531 = vmatprep.subr.mxu0 0.0
      %1532 = vmatpush1.msra.mxu0 0.0
      %1533 = vmatprep.subr.mxu0 0.0
      %1534 = vmatpush1.msra.mxu0 0.0
      %1535 = vmatprep.subr.mxu0 0.0
      %1536 = vmatpush1.msra.mxu0 0.0
      %1537 = vmatprep.subr.mxu0 0.0
      %1538 = vmatpush1.msra.mxu0 0.0
      %1539 = vmatprep.subr.mxu0 0.0
      %1540 = vmatpush1.msra.mxu0 0.0
      %1541 = vmatprep.subr.mxu0 0.0
      %1542 = vmatpush1.msra.mxu0 0.0
      %1543 = vmatprep.subr.mxu0 0.0
      %1544 = vmatpush1.msra.mxu0 0.0
      %1545 = vmatprep.subr.mxu0 0.0
      %1546 = vmatpush1.msra.mxu0 0.0
      %1547 = vmatprep.subr.mxu0 0.0
      %1548 = vmatpush1.msra.mxu0 0.0
      %1549 = vmatprep.subr.mxu0 0.0
      %1550 = vmatpush1.msra.mxu0 0.0
      %1551 = vmatprep.subr.mxu0 0.0
      %1552 = vmatpush1.msra.mxu0 0.0
      %1553 = vmatprep.subr.mxu0 0.0
      %1554 = vmatpush1.msra.mxu0 0.0
      %1555 = vmatprep.subr.mxu0 0.0
      %1556 = vmatpush1.msra.mxu0 0.0
      %1557 = vmatprep.mubr.f32.mxu0 0.0
      %1558 = vmatmul.mubr.f32.gmra.mrb[0].mxu0 %v1491
      %v1559 = vpop.f32.mrb[0].mxu0
      %v1560 = vadd.f32 0.0, %v1559
      %v1561 = vpop.f32.mrb[0].mxu0
      %1562 = vdwg.mxu0
      %v1563 = vadd.f32 %v314, %v322
      %v1564 = vadd.f32 %v315, %v323
      %v1565 = vadd.f32 %v316, %v324
      %v1566 = vadd.f32 %v317, %v325
      %v1567 = vadd.f32 %v318, %v326
      %v1568 = vadd.f32 %v319, %v327
      %v1569 = vadd.f32 %v320, %v328
      %v1570 = vadd.f32 %v321, %v329
      %v1571 = vadd.f32 %v330, %v362
      %v1572 = vadd.f32 %v331, %v363
      %v1573 = vadd.f32 %v332, %v364
      %v1574 = vadd.f32 %v333, %v365
      %v1575 = vadd.f32 %v334, %v366
      %v1576 = vadd.f32 %v335, %v367
      %v1577 = vadd.f32 %v336, %v368
      %v1578 = vadd.f32 %v337, %v369
      %v1579 = vadd.f32 %v338, %v370
      %v1580 = vadd.f32 %v339, %v371
      %v1581 = vadd.f32 %v340, %v372
      %v1582 = vadd.f32 %v341, %v373
      %v1583 = vadd.f32 %v342, %v374
      %v1584 = vadd.f32 %v343, %v375
      %v1585 = vadd.f32 %v344, %v376
      %v1586 = vadd.f32 %v345, %v377
      %v1587 = vadd.f32 %v346, %v378
      %v1588 = vadd.f32 %v347, %v379
      %v1589 = vadd.f32 %v348, %v380
      %v1590 = vadd.f32 %v349, %v381
      %v1591 = vadd.f32 %v350, %v382
      %v1592 = vadd.f32 %v351, %v383
      %v1593 = vadd.f32 %v352, %v384
      %v1594 = vadd.f32 %v353, %v385
      %v1595 = vadd.f32 %v354, %v386
      %v1596 = vadd.f32 %v355, %v387
      %v1597 = vadd.f32 %v356, %v388
      %v1598 = vadd.f32 %v357, %v389
      %v1599 = vadd.f32 %v358, %v390
      %v1600 = vadd.f32 %v359, %v391
      %v1601 = vadd.f32 %v360, %v392
      %v1602 = vadd.f32 %v361, %v393
      %v1604 = vsel %vm394, %v1563, 0
      %1606 = vmatprep.subr.mxu0 0.0
      %1607 = vmatpush1.msra.mxu0 %v1571
      %1608 = vmatprep.subr.mxu0 0.0
      %1609 = vmatpush1.msra.mxu0 %v1572
      %1610 = vmatprep.subr.mxu0 0.0
      %1611 = vmatpush1.msra.mxu0 %v1573
      %1612 = vmatprep.subr.mxu0 0.0
      %1613 = vmatpush1.msra.mxu0 %v1574
      %1614 = vmatprep.subr.mxu0 0.0
      %1615 = vmatpush1.msra.mxu0 0.0
      %1616 = vmatprep.subr.mxu0 0.0
      %1617 = vmatpush1.msra.mxu0 0.0
      %1618 = vmatprep.subr.mxu0 0.0
      %1619 = vmatpush1.msra.mxu0 0.0
      %1620 = vmatprep.subr.mxu0 0.0
      %1621 = vmatpush1.msra.mxu0 0.0
      %1622 = vmatprep.subr.mxu0 0.0
      %1623 = vmatpush1.msra.mxu0 0.0
      %1624 = vmatprep.subr.mxu0 0.0
      %1625 = vmatpush1.msra.mxu0 0.0
      %1626 = vmatprep.subr.mxu0 0.0
      %1627 = vmatpush1.msra.mxu0 0.0
      %1628 = vmatprep.subr.mxu0 0.0
      %1629 = vmatpush1.msra.mxu0 0.0
      %1630 = vmatprep.subr.mxu0 0.0
      %1631 = vmatpush1.msra.mxu0 0.0
      %1632 = vmatprep.subr.mxu0 0.0
      %1633 = vmatpush1.msra.mxu0 0.0
      %1634 = vmatprep.subr.mxu0 0.0
      %1635 = vmatpush1.msra.mxu0 0.0
      %1636 = vmatprep.subr.mxu0 0.0
      %1637 = vmatpush1.msra.mxu0 0.0
      %1638 = vmatprep.subr.mxu0 0.0
      %1639 = vmatpush1.msra.mxu0 0.0
      %1640 = vmatprep.subr.mxu0 0.0
      %1641 = vmatpush1.msra.mxu0 0.0
      %1642 = vmatprep.subr.mxu0 0.0
      %1643 = vmatpush1.msra.mxu0 0.0
      %1644 = vmatprep.subr.mxu0 0.0
      %1645 = vmatpush1.msra.mxu0 0.0
      %1646 = vmatprep.subr.mxu0 0.0
      %1647 = vmatpush1.msra.mxu0 0.0
      %1648 = vmatprep.subr.mxu0 0.0
      %1649 = vmatpush1.msra.mxu0 0.0
      %1650 = vmatprep.subr.mxu0 0.0
      %1651 = vmatpush1.msra.mxu0 0.0
      %1652 = vmatprep.subr.mxu0 0.0
      %1653 = vmatpush1.msra.mxu0 0.0
      %1654 = vmatprep.subr.mxu0 0.0
      %1655 = vmatpush1.msra.mxu0 0.0
      %1656 = vmatprep.subr.mxu0 0.0
      %1657 = vmatpush1.msra.mxu0 0.0
      %1658 = vmatprep.subr.mxu0 0.0
      %1659 = vmatpush1.msra.mxu0 0.0
      %1660 = vmatprep.subr.mxu0 0.0
      %1661 = vmatpush1.msra.mxu0 0.0
      %1662 = vmatprep.subr.mxu0 0.0
      %1663 = vmatpush1.msra.mxu0 0.0
      %1664 = vmatprep.subr.mxu0 0.0
      %1665 = vmatpush1.msra.mxu0 0.0
      %1666 = vmatprep.subr.mxu0 0.0
      %1667 = vmatpush1.msra.mxu0 0.0
      %1668 = vmatprep.subr.mxu0 0.0
      %1669 = vmatpush1.msra.mxu0 0.0
      %1670 = vmatprep.mubr.f32.mxu0 0.0
      %1671 = vmatmul.mubr.f32.gmra.mrb[0].mxu0 %v1604
      %v1672 = vpop.f32.mrb[0].mxu0
      %v1673 = vadd.f32 0.0, %v1672
      %v1674 = vpop.f32.mrb[0].mxu0
      %1675 = vdwg.mxu0
      %v1677 = vsel %vm394, %v1564, 0
      %1679 = vmatprep.subr.mxu0 0.0
      %1680 = vmatpush1.msra.mxu0 %v1575
      %1681 = vmatprep.subr.mxu0 0.0
      %1682 = vmatpush1.msra.mxu0 %v1576
      %1683 = vmatprep.subr.mxu0 0.0
      %1684 = vmatpush1.msra.mxu0 %v1577
      %1685 = vmatprep.subr.mxu0 0.0
      %1686 = vmatpush1.msra.mxu0 %v1578
      %1687 = vmatprep.subr.mxu0 0.0
      %1688 = vmatpush1.msra.mxu0 0.0
      %1689 = vmatprep.subr.mxu0 0.0
      %1690 = vmatpush1.msra.mxu0 0.0
      %1691 = vmatprep.subr.mxu0 0.0
      %1692 = vmatpush1.msra.mxu0 0.0
      %1693 = vmatprep.subr.mxu0 0.0
      %1694 = vmatpush1.msra.mxu0 0.0
      %1695 = vmatprep.subr.mxu0 0.0
      %1696 = vmatpush1.msra.mxu0 0.0
      %1697 = vmatprep.subr.mxu0 0.0
      %1698 = vmatpush1.msra.mxu0 0.0
      %1699 = vmatprep.subr.mxu0 0.0
      %1700 = vmatpush1.msra.mxu0 0.0
      %1701 = vmatprep.subr.mxu0 0.0
      %1702 = vmatpush1.msra.mxu0 0.0
      %1703 = vmatprep.subr.mxu0 0.0
      %1704 = vmatpush1.msra.mxu0 0.0
      %1705 = vmatprep.subr.mxu0 0.0
      %1706 = vmatpush1.msra.mxu0 0.0
      %1707 = vmatprep.subr.mxu0 0.0
      %1708 = vmatpush1.msra.mxu0 0.0
      %1709 = vmatprep.subr.mxu0 0.0
      %1710 = vmatpush1.msra.mxu0 0.0
      %1711 = vmatprep.subr.mxu0 0.0
      %1712 = vmatpush1.msra.mxu0 0.0
      %1713 = vmatprep.subr.mxu0 0.0
      %1714 = vmatpush1.msra.mxu0 0.0
      %1715 = vmatprep.subr.mxu0 0.0
      %1716 = vmatpush1.msra.mxu0 0.0
      %1717 = vmatprep.subr.mxu0 0.0
      %1718 = vmatpush1.msra.mxu0 0.0
      %1719 = vmatprep.subr.mxu0 0.0
      %1720 = vmatpush1.msra.mxu0 0.0
      %1721 = vmatprep.subr.mxu0 0.0
      %1722 = vmatpush1.msra.mxu0 0.0
      %1723 = vmatprep.subr.mxu0 0.0
      %1724 = vmatpush1.msra.mxu0 0.0
      %1725 = vmatprep.subr.mxu0 0.0
      %1726 = vmatpush1.msra.mxu0 0.0
      %1727 = vmatprep.subr.mxu0 0.0
      %1728 = vmatpush1.msra.mxu0 0.0
      %1729 = vmatprep.subr.mxu0 0.0
      %1730 = vmatpush1.msra.mxu0 0.0
      %1731 = vmatprep.subr.mxu0 0.0
      %1732 = vmatpush1.msra.mxu0 0.0
      %1733 = vmatprep.subr.mxu0 0.0
      %1734 = vmatpush1.msra.mxu0 0.0
      %1735 = vmatprep.subr.mxu0 0.0
      %1736 = vmatpush1.msra.mxu0 0.0
      %1737 = vmatprep.subr.mxu0 0.0
      %1738 = vmatpush1.msra.mxu0 0.0
      %1739 = vmatprep.subr.mxu0 0.0
      %1740 = vmatpush1.msra.mxu0 0.0
      %1741 = vmatprep.subr.mxu0 0.0
      %1742 = vmatpush1.msra.mxu0 0.0
      %1743 = vmatprep.mubr.f32.mxu0 0.0
      %1744 = vmatmul.mubr.f32.gmra.mrb[0].mxu0 %v1677
      %v1745 = vpop.f32.mrb[0].mxu0
      %v1746 = vadd.f32 0.0, %v1745
      %v1747 = vpop.f32.mrb[0].mxu0
      %1748 = vdwg.mxu0
      %v1750 = vsel %vm394, %v1565, 0
      %1752 = vmatprep.subr.mxu0 0.0
      %1753 = vmatpush1.msra.mxu0 %v1579
      %1754 = vmatprep.subr.mxu0 0.0
      %1755 = vmatpush1.msra.mxu0 %v1580
      %1756 = vmatprep.subr.mxu0 0.0
      %1757 = vmatpush1.msra.mxu0 %v1581
      %1758 = vmatprep.subr.mxu0 0.0
      %1759 = vmatpush1.msra.mxu0 %v1582
      %1760 = vmatprep.subr.mxu0 0.0
      %1761 = vmatpush1.msra.mxu0 0.0
      %1762 = vmatprep.subr.mxu0 0.0
      %1763 = vmatpush1.msra.mxu0 0.0
      %1764 = vmatprep.subr.mxu0 0.0
      %1765 = vmatpush1.msra.mxu0 0.0
      %1766 = vmatprep.subr.mxu0 0.0
      %1767 = vmatpush1.msra.mxu0 0.0
      %1768 = vmatprep.subr.mxu0 0.0
      %1769 = vmatpush1.msra.mxu0 0.0
      %1770 = vmatprep.subr.mxu0 0.0
      %1771 = vmatpush1.msra.mxu0 0.0
      %1772 = vmatprep.subr.mxu0 0.0
      %1773 = vmatpush1.msra.mxu0 0.0
      %1774 = vmatprep.subr.mxu0 0.0
      %1775 = vmatpush1.msra.mxu0 0.0
      %1776 = vmatprep.subr.mxu0 0.0
      %1777 = vmatpush1.msra.mxu0 0.0
      %1778 = vmatprep.subr.mxu0 0.0
      %1779 = vmatpush1.msra.mxu0 0.0
      %1780 = vmatprep.subr.mxu0 0.0
      %1781 = vmatpush1.msra.mxu0 0.0
      %1782 = vmatprep.subr.mxu0 0.0
      %1783 = vmatpush1.msra.mxu0 0.0
      %1784 = vmatprep.subr.mxu0 0.0
      %1785 = vmatpush1.msra.mxu0 0.0
      %1786 = vmatprep.subr.mxu0 0.0
      %1787 = vmatpush1.msra.mxu0 0.0
      %1788 = vmatprep.subr.mxu0 0.0
      %1789 = vmatpush1.msra.mxu0 0.0
      %1790 = vmatprep.subr.mxu0 0.0
      %1791 = vmatpush1.msra.mxu0 0.0
      %1792 = vmatprep.subr.mxu0 0.0
      %1793 = vmatpush1.msra.mxu0 0.0
      %1794 = vmatprep.subr.mxu0 0.0
      %1795 = vmatpush1.msra.mxu0 0.0
      %1796 = vmatprep.subr.mxu0 0.0
      %1797 = vmatpush1.msra.mxu0 0.0
      %1798 = vmatprep.subr.mxu0 0.0
      %1799 = vmatpush1.msra.mxu0 0.0
      %1800 = vmatprep.subr.mxu0 0.0
      %1801 = vmatpush1.msra.mxu0 0.0
      %1802 = vmatprep.subr.mxu0 0.0
      %1803 = vmatpush1.msra.mxu0 0.0
      %1804 = vmatprep.subr.mxu0 0.0
      %1805 = vmatpush1.msra.mxu0 0.0
      %1806 = vmatprep.subr.mxu0 0.0
      %1807 = vmatpush1.msra.mxu0 0.0
      %1808 = vmatprep.subr.mxu0 0.0
      %1809 = vmatpush1.msra.mxu0 0.0
      %1810 = vmatprep.subr.mxu0 0.0
      %1811 = vmatpush1.msra.mxu0 0.0
      %1812 = vmatprep.subr.mxu0 0.0
      %1813 = vmatpush1.msra.mxu0 0.0
      %1814 = vmatprep.subr.mxu0 0.0
      %1815 = vmatpush1.msra.mxu0 0.0
      %1816 = vmatprep.mubr.f32.mxu0 0.0
      %1817 = vmatmul.mubr.f32.gmra.mrb[0].mxu0 %v1750
      %v1818 = vpop.f32.mrb[0].mxu0
      %v1819 = vadd.f32 0.0, %v1818
      %v1820 = vpop.f32.mrb[0].mxu0
      %1821 = vdwg.mxu0
      %v1823 = vsel %vm394, %v1566, 0
      %1825 = vmatprep.subr.mxu0 0.0
      %1826 = vmatpush1.msra.mxu0 %v1583
      %1827 = vmatprep.subr.mxu0 0.0
      %1828 = vmatpush1.msra.mxu0 %v1584
      %1829 = vmatprep.subr.mxu0 0.0
      %1830 = vmatpush1.msra.mxu0 %v1585
      %1831 = vmatprep.subr.mxu0 0.0
      %1832 = vmatpush1.msra.mxu0 %v1586
      %1833 = vmatprep.subr.mxu0 0.0
      %1834 = vmatpush1.msra.mxu0 0.0
      %1835 = vmatprep.subr.mxu0 0.0
      %1836 = vmatpush1.msra.mxu0 0.0
      %1837 = vmatprep.subr.mxu0 0.0
      %1838 = vmatpush1.msra.mxu0 0.0
      %1839 = vmatprep.subr.mxu0 0.0
      %1840 = vmatpush1.msra.mxu0 0.0
      %1841 = vmatprep.subr.mxu0 0.0
      %1842 = vmatpush1.msra.mxu0 0.0
      %1843 = vmatprep.subr.mxu0 0.0
      %1844 = vmatpush1.msra.mxu0 0.0
      %1845 = vmatprep.subr.mxu0 0.0
      %1846 = vmatpush1.msra.mxu0 0.0
      %1847 = vmatprep.subr.mxu0 0.0
      %1848 = vmatpush1.msra.mxu0 0.0
      %1849 = vmatprep.subr.mxu0 0.0
      %1850 = vmatpush1.msra.mxu0 0.0
      %1851 = vmatprep.subr.mxu0 0.0
      %1852 = vmatpush1.msra.mxu0 0.0
      %1853 = vmatprep.subr.mxu0 0.0
      %1854 = vmatpush1.msra.mxu0 0.0
      %1855 = vmatprep.subr.mxu0 0.0
      %1856 = vmatpush1.msra.mxu0 0.0
      %1857 = vmatprep.subr.mxu0 0.0
      %1858 = vmatpush1.msra.mxu0 0.0
      %1859 = vmatprep.subr.mxu0 0.0
      %1860 = vmatpush1.msra.mxu0 0.0
      %1861 = vmatprep.subr.mxu0 0.0
      %1862 = vmatpush1.msra.mxu0 0.0
      %1863 = vmatprep.subr.mxu0 0.0
      %1864 = vmatpush1.msra.mxu0 0.0
      %1865 = vmatprep.subr.mxu0 0.0
      %1866 = vmatpush1.msra.mxu0 0.0
      %1867 = vmatprep.subr.mxu0 0.0
      %1868 = vmatpush1.msra.mxu0 0.0
      %1869 = vmatprep.subr.mxu0 0.0
      %1870 = vmatpush1.msra.mxu0 0.0
      %1871 = vmatprep.subr.mxu0 0.0
      %1872 = vmatpush1.msra.mxu0 0.0
      %1873 = vmatprep.subr.mxu0 0.0
      %1874 = vmatpush1.msra.mxu0 0.0
      %1875 = vmatprep.subr.mxu0 0.0
      %1876 = vmatpush1.msra.mxu0 0.0
      %1877 = vmatprep.subr.mxu0 0.0
      %1878 = vmatpush1.msra.mxu0 0.0
      %1879 = vmatprep.subr.mxu0 0.0
      %1880 = vmatpush1.msra.mxu0 0.0
      %1881 = vmatprep.subr.mxu0 0.0
      %1882 = vmatpush1.msra.mxu0 0.0
      %1883 = vmatprep.subr.mxu0 0.0
      %1884 = vmatpush1.msra.mxu0 0.0
      %1885 = vmatprep.subr.mxu0 0.0
      %1886 = vmatpush1.msra.mxu0 0.0
      %1887 = vmatprep.subr.mxu0 0.0
      %1888 = vmatpush1.msra.mxu0 0.0
      %1889 = vmatprep.mubr.f32.mxu0 0.0
      %1890 = vmatmul.mubr.f32.gmra.mrb[0].mxu0 %v1823
      %v1891 = vpop.f32.mrb[0].mxu0
      %v1892 = vadd.f32 0.0, %v1891
      %v1893 = vpop.f32.mrb[0].mxu0
      %1894 = vdwg.mxu0
      %v1896 = vsel %vm394, %v1567, 0
      %1898 = vmatprep.subr.mxu0 0.0
      %1899 = vmatpush1.msra.mxu0 %v1587
      %1900 = vmatprep.subr.mxu0 0.0
      %1901 = vmatpush1.msra.mxu0 %v1588
      %1902 = vmatprep.subr.mxu0 0.0
      %1903 = vmatpush1.msra.mxu0 %v1589
      %1904 = vmatprep.subr.mxu0 0.0
      %1905 = vmatpush1.msra.mxu0 %v1590
      %1906 = vmatprep.subr.mxu0 0.0
      %1907 = vmatpush1.msra.mxu0 0.0
      %1908 = vmatprep.subr.mxu0 0.0
      %1909 = vmatpush1.msra.mxu0 0.0
      %1910 = vmatprep.subr.mxu0 0.0
      %1911 = vmatpush1.msra.mxu0 0.0
      %1912 = vmatprep.subr.mxu0 0.0
      %1913 = vmatpush1.msra.mxu0 0.0
      %1914 = vmatprep.subr.mxu0 0.0
      %1915 = vmatpush1.msra.mxu0 0.0
      %1916 = vmatprep.subr.mxu0 0.0
      %1917 = vmatpush1.msra.mxu0 0.0
      %1918 = vmatprep.subr.mxu0 0.0
      %1919 = vmatpush1.msra.mxu0 0.0
      %1920 = vmatprep.subr.mxu0 0.0
      %1921 = vmatpush1.msra.mxu0 0.0
      %1922 = vmatprep.subr.mxu0 0.0
      %1923 = vmatpush1.msra.mxu0 0.0
      %1924 = vmatprep.subr.mxu0 0.0
      %1925 = vmatpush1.msra.mxu0 0.0
      %1926 = vmatprep.subr.mxu0 0.0
      %1927 = vmatpush1.msra.mxu0 0.0
      %1928 = vmatprep.subr.mxu0 0.0
      %1929 = vmatpush1.msra.mxu0 0.0
      %1930 = vmatprep.subr.mxu0 0.0
      %1931 = vmatpush1.msra.mxu0 0.0
      %1932 = vmatprep.subr.mxu0 0.0
      %1933 = vmatpush1.msra.mxu0 0.0
      %1934 = vmatprep.subr.mxu0 0.0
      %1935 = vmatpush1.msra.mxu0 0.0
      %1936 = vmatprep.subr.mxu0 0.0
      %1937 = vmatpush1.msra.mxu0 0.0
      %1938 = vmatprep.subr.mxu0 0.0
      %1939 = vmatpush1.msra.mxu0 0.0
      %1940 = vmatprep.subr.mxu0 0.0
      %1941 = vmatpush1.msra.mxu0 0.0
      %1942 = vmatprep.subr.mxu0 0.0
      %1943 = vmatpush1.msra.mxu0 0.0
      %1944 = vmatprep.subr.mxu0 0.0
      %1945 = vmatpush1.msra.mxu0 0.0
      %1946 = vmatprep.subr.mxu0 0.0
      %1947 = vmatpush1.msra.mxu0 0.0
      %1948 = vmatprep.subr.mxu0 0.0
      %1949 = vmatpush1.msra.mxu0 0.0
      %1950 = vmatprep.subr.mxu0 0.0
      %1951 = vmatpush1.msra.mxu0 0.0
      %1952 = vmatprep.subr.mxu0 0.0
      %1953 = vmatpush1.msra.mxu0 0.0
      %1954 = vmatprep.subr.mxu0 0.0
      %1955 = vmatpush1.msra.mxu0 0.0
      %1956 = vmatprep.subr.mxu0 0.0
      %1957 = vmatpush1.msra.mxu0 0.0
      %1958 = vmatprep.subr.mxu0 0.0
      %1959 = vmatpush1.msra.mxu0 0.0
      %1960 = vmatprep.subr.mxu0 0.0
      %1961 = vmatpush1.msra.mxu0 0.0
      %1962 = vmatprep.mubr.f32.mxu0 0.0
      %1963 = vmatmul.mubr.f32.gmra.mrb[0].mxu0 %v1896
      %v1964 = vpop.f32.mrb[0].mxu0
      %v1965 = vadd.f32 0.0, %v1964
      %v1966 = vpop.f32.mrb[0].mxu0
      %1967 = vdwg.mxu0
      %v1969 = vsel %vm394, %v1568, 0
      %1971 = vmatprep.subr.mxu0 0.0
      %1972 = vmatpush1.msra.mxu0 %v1591
      %1973 = vmatprep.subr.mxu0 0.0
      %1974 = vmatpush1.msra.mxu0 %v1592
      %1975 = vmatprep.subr.mxu0 0.0
      %1976 = vmatpush1.msra.mxu0 %v1593
      %1977 = vmatprep.subr.mxu0 0.0
      %1978 = vmatpush1.msra.mxu0 %v1594
      %1979 = vmatprep.subr.mxu0 0.0
      %1980 = vmatpush1.msra.mxu0 0.0
      %1981 = vmatprep.subr.mxu0 0.0
      %1982 = vmatpush1.msra.mxu0 0.0
      %1983 = vmatprep.subr.mxu0 0.0
      %1984 = vmatpush1.msra.mxu0 0.0
      %1985 = vmatprep.subr.mxu0 0.0
      %1986 = vmatpush1.msra.mxu0 0.0
      %1987 = vmatprep.subr.mxu0 0.0
      %1988 = vmatpush1.msra.mxu0 0.0
      %1989 = vmatprep.subr.mxu0 0.0
      %1990 = vmatpush1.msra.mxu0 0.0
      %1991 = vmatprep.subr.mxu0 0.0
      %1992 = vmatpush1.msra.mxu0 0.0
      %1993 = vmatprep.subr.mxu0 0.0
      %1994 = vmatpush1.msra.mxu0 0.0
      %1995 = vmatprep.subr.mxu0 0.0
      %1996 = vmatpush1.msra.mxu0 0.0
      %1997 = vmatprep.subr.mxu0 0.0
      %1998 = vmatpush1.msra.mxu0 0.0
      %1999 = vmatprep.subr.mxu0 0.0
      %2000 = vmatpush1.msra.mxu0 0.0
      %2001 = vmatprep.subr.mxu0 0.0
      %2002 = vmatpush1.msra.mxu0 0.0
      %2003 = vmatprep.subr.mxu0 0.0
      %2004 = vmatpush1.msra.mxu0 0.0
      %2005 = vmatprep.subr.mxu0 0.0
      %2006 = vmatpush1.msra.mxu0 0.0
      %2007 = vmatprep.subr.mxu0 0.0
      %2008 = vmatpush1.msra.mxu0 0.0
      %2009 = vmatprep.subr.mxu0 0.0
      %2010 = vmatpush1.msra.mxu0 0.0
      %2011 = vmatprep.subr.mxu0 0.0
      %2012 = vmatpush1.msra.mxu0 0.0
      %2013 = vmatprep.subr.mxu0 0.0
      %2014 = vmatpush1.msra.mxu0 0.0
      %2015 = vmatprep.subr.mxu0 0.0
      %2016 = vmatpush1.msra.mxu0 0.0
      %2017 = vmatprep.subr.mxu0 0.0
      %2018 = vmatpush1.msra.mxu0 0.0
      %2019 = vmatprep.subr.mxu0 0.0
      %2020 = vmatpush1.msra.mxu0 0.0
      %2021 = vmatprep.subr.mxu0 0.0
      %2022 = vmatpush1.msra.mxu0 0.0
      %2023 = vmatprep.subr.mxu0 0.0
      %2024 = vmatpush1.msra.mxu0 0.0
      %2025 = vmatprep.subr.mxu0 0.0
      %2026 = vmatpush1.msra.mxu0 0.0
      %2027 = vmatprep.subr.mxu0 0.0
      %2028 = vmatpush1.msra.mxu0 0.0
      %2029 = vmatprep.subr.mxu0 0.0
      %2030 = vmatpush1.msra.mxu0 0.0
      %2031 = vmatprep.subr.mxu0 0.0
      %2032 = vmatpush1.msra.mxu0 0.0
      %2033 = vmatprep.subr.mxu0 0.0
      %2034 = vmatpush1.msra.mxu0 0.0
      %2035 = vmatprep.mubr.f32.mxu0 0.0
      %2036 = vmatmul.mubr.f32.gmra.mrb[0].mxu0 %v1969
      %v2037 = vpop.f32.mrb[0].mxu0
      %v2038 = vadd.f32 0.0, %v2037
      %v2039 = vpop.f32.mrb[0].mxu0
      %2040 = vdwg.mxu0
      %v2042 = vsel %vm394, %v1569, 0
      %2044 = vmatprep.subr.mxu0 0.0
      %2045 = vmatpush1.msra.mxu0 %v1595
      %2046 = vmatprep.subr.mxu0 0.0
      %2047 = vmatpush1.msra.mxu0 %v1596
      %2048 = vmatprep.subr.mxu0 0.0
      %2049 = vmatpush1.msra.mxu0 %v1597
      %2050 = vmatprep.subr.mxu0 0.0
      %2051 = vmatpush1.msra.mxu0 %v1598
      %2052 = vmatprep.subr.mxu0 0.0
      %2053 = vmatpush1.msra.mxu0 0.0
      %2054 = vmatprep.subr.mxu0 0.0
      %2055 = vmatpush1.msra.mxu0 0.0
      %2056 = vmatprep.subr.mxu0 0.0
      %2057 = vmatpush1.msra.mxu0 0.0
      %2058 = vmatprep.subr.mxu0 0.0
      %2059 = vmatpush1.msra.mxu0 0.0
      %2060 = vmatprep.subr.mxu0 0.0
      %2061 = vmatpush1.msra.mxu0 0.0
      %2062 = vmatprep.subr.mxu0 0.0
      %2063 = vmatpush1.msra.mxu0 0.0
      %2064 = vmatprep.subr.mxu0 0.0
      %2065 = vmatpush1.msra.mxu0 0.0
      %2066 = vmatprep.subr.mxu0 0.0
      %2067 = vmatpush1.msra.mxu0 0.0
      %2068 = vmatprep.subr.mxu0 0.0
      %2069 = vmatpush1.msra.mxu0 0.0
      %2070 = vmatprep.subr.mxu0 0.0
      %2071 = vmatpush1.msra.mxu0 0.0
      %2072 = vmatprep.subr.mxu0 0.0
      %2073 = vmatpush1.msra.mxu0 0.0
      %2074 = vmatprep.subr.mxu0 0.0
      %2075 = vmatpush1.msra.mxu0 0.0
      %2076 = vmatprep.subr.mxu0 0.0
      %2077 = vmatpush1.msra.mxu0 0.0
      %2078 = vmatprep.subr.mxu0 0.0
      %2079 = vmatpush1.msra.mxu0 0.0
      %2080 = vmatprep.subr.mxu0 0.0
      %2081 = vmatpush1.msra.mxu0 0.0
      %2082 = vmatprep.subr.mxu0 0.0
      %2083 = vmatpush1.msra.mxu0 0.0
      %2084 = vmatprep.subr.mxu0 0.0
      %2085 = vmatpush1.msra.mxu0 0.0
      %2086 = vmatprep.subr.mxu0 0.0
      %2087 = vmatpush1.msra.mxu0 0.0
      %2088 = vmatprep.subr.mxu0 0.0
      %2089 = vmatpush1.msra.mxu0 0.0
      %2090 = vmatprep.subr.mxu0 0.0
      %2091 = vmatpush1.msra.mxu0 0.0
      %2092 = vmatprep.subr.mxu0 0.0
      %2093 = vmatpush1.msra.mxu0 0.0
      %2094 = vmatprep.subr.mxu0 0.0
      %2095 = vmatpush1.msra.mxu0 0.0
      %2096 = vmatprep.subr.mxu0 0.0
      %2097 = vmatpush1.msra.mxu0 0.0
      %2098 = vmatprep.subr.mxu0 0.0
      %2099 = vmatpush1.msra.mxu0 0.0
      %2100 = vmatprep.subr.mxu0 0.0
      %2101 = vmatpush1.msra.mxu0 0.0
      %2102 = vmatprep.subr.mxu0 0.0
      %2103 = vmatpush1.msra.mxu0 0.0
      %2104 = vmatprep.subr.mxu0 0.0
      %2105 = vmatpush1.msra.mxu0 0.0
      %2106 = vmatprep.subr.mxu0 0.0
      %2107 = vmatpush1.msra.mxu0 0.0
      %2108 = vmatprep.mubr.f32.mxu0 0.0
      %2109 = vmatmul.mubr.f32.gmra.mrb[0].mxu0 %v2042
      %v2110 = vpop.f32.mrb[0].mxu0
      %v2111 = vadd.f32 0.0, %v2110
      %v2112 = vpop.f32.mrb[0].mxu0
      %2113 = vdwg.mxu0
      %v2115 = vsel %vm394, %v1570, 0
      %2117 = vmatprep.subr.mxu0 0.0
      %2118 = vmatpush1.msra.mxu0 %v1599
      %2119 = vmatprep.subr.mxu0 0.0
      %2120 = vmatpush1.msra.mxu0 %v1600
      %2121 = vmatprep.subr.mxu0 0.0
      %2122 = vmatpush1.msra.mxu0 %v1601
      %2123 = vmatprep.subr.mxu0 0.0
      %2124 = vmatpush1.msra.mxu0 %v1602
      %2125 = vmatprep.subr.mxu0 0.0
      %2126 = vmatpush1.msra.mxu0 0.0
      %2127 = vmatprep.subr.mxu0 0.0
      %2128 = vmatpush1.msra.mxu0 0.0
      %2129 = vmatprep.subr.mxu0 0.0
      %2130 = vmatpush1.msra.mxu0 0.0
      %2131 = vmatprep.subr.mxu0 0.0
      %2132 = vmatpush1.msra.mxu0 0.0
      %2133 = vmatprep.subr.mxu0 0.0
      %2134 = vmatpush1.msra.mxu0 0.0
      %2135 = vmatprep.subr.mxu0 0.0
      %2136 = vmatpush1.msra.mxu0 0.0
      %2137 = vmatprep.subr.mxu0 0.0
      %2138 = vmatpush1.msra.mxu0 0.0
      %2139 = vmatprep.subr.mxu0 0.0
      %2140 = vmatpush1.msra.mxu0 0.0
      %2141 = vmatprep.subr.mxu0 0.0
      %2142 = vmatpush1.msra.mxu0 0.0
      %2143 = vmatprep.subr.mxu0 0.0
      %2144 = vmatpush1.msra.mxu0 0.0
      %2145 = vmatprep.subr.mxu0 0.0
      %2146 = vmatpush1.msra.mxu0 0.0
      %2147 = vmatprep.subr.mxu0 0.0
      %2148 = vmatpush1.msra.mxu0 0.0
      %2149 = vmatprep.subr.mxu0 0.0
      %2150 = vmatpush1.msra.mxu0 0.0
      %2151 = vmatprep.subr.mxu0 0.0
      %2152 = vmatpush1.msra.mxu0 0.0
      %2153 = vmatprep.subr.mxu0 0.0
      %2154 = vmatpush1.msra.mxu0 0.0
      %2155 = vmatprep.subr.mxu0 0.0
      %2156 = vmatpush1.msra.mxu0 0.0
      %2157 = vmatprep.subr.mxu0 0.0
      %2158 = vmatpush1.msra.mxu0 0.0
      %2159 = vmatprep.subr.mxu0 0.0
      %2160 = vmatpush1.msra.mxu0 0.0
      %2161 = vmatprep.subr.mxu0 0.0
      %2162 = vmatpush1.msra.mxu0 0.0
      %2163 = vmatprep.subr.mxu0 0.0
      %2164 = vmatpush1.msra.mxu0 0.0
      %2165 = vmatprep.subr.mxu0 0.0
      %2166 = vmatpush1.msra.mxu0 0.0
      %2167 = vmatprep.subr.mxu0 0.0
      %2168 = vmatpush1.msra.mxu0 0.0
      %2169 = vmatprep.subr.mxu0 0.0
      %2170 = vmatpush1.msra.mxu0 0.0
      %2171 = vmatprep.subr.mxu0 0.0
      %2172 = vmatpush1.msra.mxu0 0.0
      %2173 = vmatprep.subr.mxu0 0.0
      %2174 = vmatpush1.msra.mxu0 0.0
      %2175 = vmatprep.subr.mxu0 0.0
      %2176 = vmatpush1.msra.mxu0 0.0
      %2177 = vmatprep.subr.mxu0 0.0
      %2178 = vmatpush1.msra.mxu0 0.0
      %2179 = vmatprep.subr.mxu0 0.0
      %2180 = vmatpush1.msra.mxu0 0.0
      %2181 = vmatprep.mubr.f32.mxu0 0.0
      %2182 = vmatmul.mubr.f32.gmra.mrb[0].mxu0 %v2115
      %v2183 = vpop.f32.mrb[0].mxu0
      %v2184 = vadd.f32 0.0, %v2183
      %v2185 = vpop.f32.mrb[0].mxu0
      %2186 = vdwg.mxu0
      %v2187 = vsub.f32 %v465, %v1049
      %v2188 = vsub.f32 %v538, %v1122
      %v2189 = vsub.f32 %v611, %v1195
      %v2190 = vsub.f32 %v684, %v1268
      %v2191 = vsub.f32 %v757, %v1341
      %v2192 = vsub.f32 %v830, %v1414
      %v2193 = vsub.f32 %v903, %v1487
      %v2194 = vsub.f32 %v976, %v1560
      %vm2195 = vcmask 254976
      %2196 = vst.msk [vmem:[%s306] sm:$0x3] %vm2195, %v2187
      %2197 = vst.msk [vmem:[%s306 + $0x2] sm:$0x3] %vm2195, %v2188
      %2198 = vst.msk [vmem:[%s306 + $0x4] sm:$0x3] %vm2195, %v2189
      %2199 = vst.msk [vmem:[%s306 + $0x6] sm:$0x3] %vm2195, %v2190
      %2200 = vst.msk [vmem:[%s306 + $0x8] sm:$0x3] %vm2195, %v2191
      %2201 = vst.msk [vmem:[%s306 + $0xa] sm:$0x3] %vm2195, %v2192
      %2202 = vst.msk [vmem:[%s306 + $0xc] sm:$0x3] %vm2195, %v2193
      %2203 = vst.msk [vmem:[%s306 + $0xe] sm:$0x3] %vm2195, %v2194
      %v2204 = vsub.f32 %v1673, %v465
      %v2205 = vsub.f32 %v1746, %v538
      %v2206 = vsub.f32 %v1819, %v611
      %v2207 = vsub.f32 %v1892, %v684
      %v2208 = vsub.f32 %v1965, %v757
      %v2209 = vsub.f32 %v2038, %v830
      %v2210 = vsub.f32 %v2111, %v903
      %v2211 = vsub.f32 %v2184, %v976
      %v2212 = vsub.f32 %v2204, %v1049
      %v2213 = vsub.f32 %v2205, %v1122
      %v2214 = vsub.f32 %v2206, %v1195
      %v2215 = vsub.f32 %v2207, %v1268
      %v2216 = vsub.f32 %v2208, %v1341
      %v2217 = vsub.f32 %v2209, %v1414
      %v2218 = vsub.f32 %v2210, %v1487
      %v2219 = vsub.f32 %v2211, %v1560
      %2220 = vst.msk [vmem:[%s312] sm:$0x3] %vm2195, %v2212
      %2221 = vst.msk [vmem:[%s312 + $0x2] sm:$0x3] %vm2195, %v2213
      %2222 = vst.msk [vmem:[%s312 + $0x4] sm:$0x3] %vm2195, %v2214
      %2223 = vst.msk [vmem:[%s312 + $0x6] sm:$0x3] %vm2195, %v2215
      %2224 = vst.msk [vmem:[%s312 + $0x8] sm:$0x3] %vm2195, %v2216
      %2225 = vst.msk [vmem:[%s312 + $0xa] sm:$0x3] %vm2195, %v2217
      %2226 = vst.msk [vmem:[%s312 + $0xc] sm:$0x3] %vm2195, %v2218
      %2227 = vst.msk [vmem:[%s312 + $0xe] sm:$0x3] %vm2195, %v2219
      %s2228 = smul.u32 8, %s17
      %p2229 = scmp.lt.s32.totalorder %s2228, 15
      %s2230 = scalar_select %p2229, %s2228, 15
      %s2231 = smul.addr %s2230, 2
      %s2232 = scalar_lea.vmem %s4, %s2231
      %s2233 = smul.u32 8, %s17
      %p2234 = scmp.lt.s32.totalorder %s2233, 15
      %s2235 = scalar_select %p2234, %s2233, 15
      %s2236 = smul.addr %s2235, 2
      %s2237 = scalar_lea.vmem %s5, %s2236
      // Predicated region
      $region37: #{fno2d_forward.8} parent=35 // pred_check
        %p2238 = pneg %p139
      $region38: #{fno2d_forward.8} parent=35 // pred_check_branch
        %2240 = sbr.rel (%p2238) target = $region40
      $region39: #{fno2d_forward.8} parent=35 // pred_region
        %s2241 = smul.u32 8, %s17
      $region40: #{fno2d_forward.8} parent=35 // pred_fallthru
        _
      // Predicated region
      $region41: #{fno2d_forward.8} parent=35 // pred_check
        %p2242 = pneg %p165
      $region42: #{fno2d_forward.8} parent=35 // pred_check_branch
        %2244 = sbr.rel (%p2242) target = $region44
      $region43: #{fno2d_forward.8} parent=35 // pred_region
        %s2245 = smul.u32 8, %s17
      $region44: #{fno2d_forward.8} parent=35 // pred_fallthru
        _
    $region36: #{fno2d_forward.8} parent=5 // pred_fallthru
      _
    %p2246 = scmp.le.s32.totalorder 2, %s12
    // Predicated region
    $region45: #{fno2d_forward.8} parent=5 // pred_check
      %p2247 = pneg %p2246
    $region46: #{fno2d_forward.8} parent=5 // pred_check_branch
      %2249 = sbr.rel (%p2247) target = $region48
    $region47: #{fno2d_forward.8} parent=5 // pred_region
      %s2250 = ssub.s32 %s12, 2
      // Predicated region
      $region49: #{fno2d_forward.8} parent=47 // pred_check
        %p2251 = pneg %p145
      $region50: #{fno2d_forward.8} parent=47 // pred_check_branch
        %2253 = sbr.rel (%p2251) target = $region52
      $region51: #{fno2d_forward.8} parent=47 // pred_region
        %s2254 = smul.u32 8, %s18
        %p2255 = scmp.lt.s32.totalorder %s2254, 15
        %s2256 = scalar_select %p2255, %s2254, 15
        %s2257 = smul.addr %s2256, 2
        %s2258 = scalar_lea.vmem %s4, %s2257
      $region52: #{fno2d_forward.8} parent=47 // pred_fallthru
        _
      // Predicated region
      $region53: #{fno2d_forward.8} parent=47 // pred_check
        %p2259 = pneg %p171
      $region54: #{fno2d_forward.8} parent=47 // pred_check_branch
        %2261 = sbr.rel (%p2259) target = $region56
      $region55: #{fno2d_forward.8} parent=47 // pred_region
        %s2262 = smul.u32 8, %s18
        %p2263 = scmp.lt.s32.totalorder %s2262, 15
        %s2264 = scalar_select %p2263, %s2262, 15
        %s2265 = smul.addr %s2264, 2
        %s2266 = scalar_lea.vmem %s5, %s2265
      $region56: #{fno2d_forward.8} parent=47 // pred_fallthru
        _
    $region48: #{fno2d_forward.8} parent=5 // pred_fallthru
      _
  $region6: #{fno2d_forward.8} parent=0 // loop_footer
    %s16 = sadd.s32 1, %s12
  $region7: #{fno2d_forward.8} parent=0 // loop_footer_branch
    %11 = sbr.rel target = $region3
  $region8: #{fno2d_forward.8} parent=0 // loop_exit
    _

// kernel: reverse.8
$region0: #{reverse.8}
  #allocation0 [shape = 's32[1]{0}', space=sflag, size = 0x4, scoped, tag = 'scoped memory for reverse.8']
  %s0 = inlined_call_operand.vmem [shape: f32[2,32,16,7], index: 0, kind: input, shape index: {}]
  %s1 = inlined_call_operand.vmem [shape: f32[2,32,16,7], index: 1, kind: output, shape index: {}]
  %s2 = scalar_lea.vmem %s0, 96
  %v3 = vld [vmem:[%s2] sm:$0xff]
  %4 = vst [vmem:[%s1] sm:$0xff] %v3
  %s5 = scalar_lea.vmem %s0, 208
  %v6 = vld [vmem:[%s5] sm:$0xff]
  %s7 = scalar_lea.vmem %s1, 112
  %8 = vst [vmem:[%s7] sm:$0xff] %v6
  %s9 = scalar_lea.vmem %s0, 80
  %v10 = vld [vmem:[%s9] sm:$0xff]
  %s11 = scalar_lea.vmem %s1, 16
  %12 = vst [vmem:[%s11] sm:$0xff] %v10
  %s13 = scalar_lea.vmem %s0, 192
  %v14 = vld [vmem:[%s13] sm:$0xff]
  %s15 = scalar_lea.vmem %s1, 128
  %16 = vst [vmem:[%s15] sm:$0xff] %v14
  %s17 = scalar_lea.vmem %s0, 64
  %v18 = vld [vmem:[%s17] sm:$0xff]
  %s19 = scalar_lea.vmem %s1, 32
  %20 = vst [vmem:[%s19] sm:$0xff] %v18
  %s21 = scalar_lea.vmem %s0, 176
  %v22 = vld [vmem:[%s21] sm:$0xff]
  %s23 = scalar_lea.vmem %s1, 144
  %24 = vst [vmem:[%s23] sm:$0xff] %v22
  %s25 = scalar_lea.vmem %s0, 48
  %v26 = vld [vmem:[%s25] sm:$0xff]
  %s27 = scalar_lea.vmem %s1, 48
  %28 = vst [vmem:[%s27] sm:$0xff] %v26
  %s29 = scalar_lea.vmem %s0, 160
  %v30 = vld [vmem:[%s29] sm:$0xff]
  %s31 = scalar_lea.vmem %s1, 160
  %32 = vst [vmem:[%s31] sm:$0xff] %v30
  %s33 = scalar_lea.vmem %s0, 32
  %v34 = vld [vmem:[%s33] sm:$0xff]
  %s35 = scalar_lea.vmem %s1, 64
  %36 = vst [vmem:[%s35] sm:$0xff] %v34
  %s37 = scalar_lea.vmem %s0, 144
  %v38 = vld [vmem:[%s37] sm:$0xff]
  %s39 = scalar_lea.vmem %s1, 176
  %40 = vst [vmem:[%s39] sm:$0xff] %v38
  %s41 = scalar_lea.vmem %s0, 16
  %v42 = vld [vmem:[%s41] sm:$0xff]
  %s43 = scalar_lea.vmem %s1, 80
  %44 = vst [vmem:[%s43] sm:$0xff] %v42
  %s45 = scalar_lea.vmem %s0, 128
  %v46 = vld [vmem:[%s45] sm:$0xff]
  %s47 = scalar_lea.vmem %s1, 192
  %48 = vst [vmem:[%s47] sm:$0xff] %v46
  %v49 = vld [vmem:[%s0] sm:$0xff]
  %s50 = scalar_lea.vmem %s1, 96
  %51 = vst [vmem:[%s50] sm:$0xff] %v49
  %s52 = scalar_lea.vmem %s0, 112
  %v53 = vld [vmem:[%s52] sm:$0xff]
  %s54 = scalar_lea.vmem %s1, 208
  %55 = vst [vmem:[%s54] sm:$0xff] %v53
  %s56 = scalar_lea.vmem %s0, 104
  %v57 = vld [vmem:[%s56] sm:$0xff]
  %s58 = scalar_lea.vmem %s1, 8
  %59 = vst [vmem:[%s58] sm:$0xff] %v57
  %s60 = scalar_lea.vmem %s0, 216
  %v61 = vld [vmem:[%s60] sm:$0xff]
  %s62 = scalar_lea.vmem %s1, 120
  %63 = vst [vmem:[%s62] sm:$0xff] %v61
  %s64 = scalar_lea.vmem %s0, 88
  %v65 = vld [vmem:[%s64] sm:$0xff]
  %s66 = scalar_lea.vmem %s1, 24
  %67 = vst [vmem:[%s66] sm:$0xff] %v65
  %s68 = scalar_lea.vmem %s0, 200
  %v69 = vld [vmem:[%s68] sm:$0xff]
  %s70 = scalar_lea.vmem %s1, 136
  %71 = vst [vmem:[%s70] sm:$0xff] %v69
  %s72 = scalar_lea.vmem %s0, 72
  %v73 = vld [vmem:[%s72] sm:$0xff]
  %s74 = scalar_lea.vmem %s1, 40
  %75 = vst [vmem:[%s74] sm:$0xff] %v73
  %s76 = scalar_lea.vmem %s0, 184
  %v77 = vld [vmem:[%s76] sm:$0xff]
  %s78 = scalar_lea.vmem %s1, 152
  %79 = vst [vmem:[%s78] sm:$0xff] %v77
  %s80 = scalar_lea.vmem %s0, 56
  %v81 = vld [vmem:[%s80] sm:$0xff]
  %s82 = scalar_lea.vmem %s1, 56
  %83 = vst [vmem:[%s82] sm:$0xff] %v81
  %s84 = scalar_lea.vmem %s0, 168
  %v85 = vld [vmem:[%s84] sm:$0xff]
  %s86 = scalar_lea.vmem %s1, 168
  %87 = vst [vmem:[%s86] sm:$0xff] %v85
  %s88 = scalar_lea.vmem %s0, 40
  %v89 = vld [vmem:[%s88] sm:$0xff]
  %s90 = scalar_lea.vmem %s1, 72
  %91 = vst [vmem:[%s90] sm:$0xff] %v89
  %s92 = scalar_lea.vmem %s0, 152
  %v93 = vld [vmem:[%s92] sm:$0xff]
  %s94 = scalar_lea.vmem %s1, 184
  %95 = vst [vmem:[%s94] sm:$0xff] %v93
  %s96 = scalar_lea.vmem %s0, 24
  %v97 = vld [vmem:[%s96] sm:$0xff]
  %s98 = scalar_lea.vmem %s1, 88
  %99 = vst [vmem:[%s98] sm:$0xff] %v97
  %s100 = scalar_lea.vmem %s0, 136
  %v101 = vld [vmem:[%s100] sm:$0xff]
  %s102 = scalar_lea.vmem %s1, 200
  %103 = vst [vmem:[%s102] sm:$0xff] %v101
  %s104 = scalar_lea.vmem %s0, 8
  %v105 = vld [vmem:[%s104] sm:$0xff]
  %s106 = scalar_lea.vmem %s1, 104
  %107 = vst [vmem:[%s106] sm:$0xff] %v105
  %s108 = scalar_lea.vmem %s0, 120
  %v109 = vld [vmem:[%s108] sm:$0xff]
  %s110 = scalar_lea.vmem %s1, 216
  %111 = vst [vmem:[%s110] sm:$0xff] %v109

// kernel: fno2d_forward.9
$region0: #{fno2d_forward.9}
  #allocation0 [shape = 'u32[]', space=smem, size = 0x4, offset = 0x4, fixed_abs, tag = 'smem constant byte address 0x4 - core index']
  #allocation1 [shape = 'u32[144,128]{1,0:T(1,128)}', space=vmem, size = 0x12000, scoped, tag = 'internal scratch']
  %s0 = inlined_call_operand.vmem [shape: f32[512,32], index: 0, kind: input, shape index: {}]
  %s1 = inlined_call_operand.vmem [shape: f32[512,32], index: 1, kind: input, shape index: {}]
  %s2 = inlined_call_operand.vmem [shape: f32[32,32], index: 2, kind: input, shape index: {}]
  %s3 = inlined_call_operand.vmem [shape: f32[1,32], index: 3, kind: input, shape index: {}]
  %s4 = inlined_call_operand.vmem [shape: f32[512,32], index: 4, kind: output, shape index: {}]
  %s5 = sld [smem:[#allocation0]]
  $region49: #{fno2d_forward.9} parent=0
    _
  %s7 = ssub.s32 1, %s5
  %s8 = scalar_select 0, %s7, %s5
  loop: start=0, step=1, limit=4
  $region2: #{fno2d_forward.9} parent=0 // loop_pre_header
    _
  $region3: #{fno2d_forward.9} parent=0 // loop_header
    %s10 = sphi 0, %s14
    %p11 = scmp.ge.s32.totalorder %s10, 4
    %s20 = sphi 0, %s22
    %s23 = sphi 0, %s20
    %s24 = sphi 0, %s23
    %s40 = sphi 0, %s24
    %s46 = sphi 0, %s48
    %s49 = sphi 0, %s46
    %s50 = sphi 0, %s49
    %s66 = sphi 0, %s50
    %s70 = sphi 0, %s70
    %s72 = sphi 0, %s70
    %s73 = sphi 0, %s72
    %s87 = sphi 0, %s73
    %s91 = sphi 0, %s91
    %s93 = sphi 0, %s91
    %s94 = sphi 0, %s93
    %s108 = sphi 0, %s94
    %s114 = sphi 0, %s116
    %s117 = sphi 0, %s114
    %s118 = sphi 0, %s117
    %s134 = sphi 0, %s118
  $region4: #{fno2d_forward.9} parent=0 // loop_header_branch
    %13 = sbr.rel (%p11) target = $region8
  $region5: #{fno2d_forward.9} parent=0 // loop_body
    %s15 = ssub.s32 %s10, 1
    %s16 = ssub.s32 %s10, 2
    %s17 = sadd.s32 %s10, 1
    %s18 = ssub.s32 %s10, %s17
    %p19 = scmp.eq.s32.totalorder %s18, 0
    %s21 = sadd.s32 %s20, 1
    %s22 = scalar_select %p19, %s20, %s21
    %p25 = pneg %p19
    %p26 = scmp.eq.s32.totalorder %s10, 1
    %p27 = por %p25, %p26
    %p28 = scmp.ne.s32.totalorder %s20, %s23
    %p29 = scmp.eq.s32.totalorder %s10, 0
    %p30 = por %p28, %p29
    %p31 = scmp.ne.s32.totalorder %s20, %s23
    %p32 = scmp.eq.s32.totalorder %s15, 1
    %p33 = por %p31, %p32
    %p34 = scmp.ne.s32.totalorder %s23, %s24
    %p35 = scmp.eq.s32.totalorder %s15, 0
    %p36 = por %p34, %p35
    %p37 = scmp.ne.s32.totalorder %s23, %s24
    %p38 = scmp.eq.s32.totalorder %s16, 1
    %p39 = por %p37, %p38
    %p41 = scmp.ne.s32.totalorder %s24, %s40
    %p42 = scmp.eq.s32.totalorder %s16, 0
    %p43 = por %p41, %p42
    %s44 = ssub.s32 %s10, %s17
    %p45 = scmp.eq.s32.totalorder %s44, 0
    %s47 = sadd.s32 %s46, 1
    %s48 = scalar_select %p45, %s46, %s47
    %p51 = pneg %p45
    %p52 = scmp.eq.s32.totalorder %s10, 1
    %p53 = por %p51, %p52
    %p54 = scmp.ne.s32.totalorder %s46, %s49
    %p55 = scmp.eq.s32.totalorder %s10, 0
    %p56 = por %p54, %p55
    %p57 = scmp.ne.s32.totalorder %s46, %s49
    %p58 = scmp.eq.s32.totalorder %s15, 1
    %p59 = por %p57, %p58
    %p60 = scmp.ne.s32.totalorder %s49, %s50
    %p61 = scmp.eq.s32.totalorder %s15, 0
    %p62 = por %p60, %p61
    %p63 = scmp.ne.s32.totalorder %s49, %s50
    %p64 = scmp.eq.s32.totalorder %s16, 1
    %p65 = por %p63, %p64
    %p67 = scmp.ne.s32.totalorder %s50, %s66
    %p68 = scmp.eq.s32.totalorder %s16, 0
    %p69 = por %p67, %p68
    %s71 = sadd.s32 %s70, 1
    %p74 = scmp.eq.s32.totalorder %s10, 1
    %p75 = scmp.ne.s32.totalorder %s70, %s72
    %p76 = scmp.eq.s32.totalorder %s10, 0
    %p77 = por %p75, %p76
    %p78 = scmp.ne.s32.totalorder %s70, %s72
    %p79 = scmp.eq.s32.totalorder %s15, 1
    %p80 = por %p78, %p79
    %p81 = scmp.ne.s32.totalorder %s72, %s73
    %p82 = scmp.eq.s32.totalorder %s15, 0
    %p83 = por %p81, %p82
    %p84 = scmp.ne.s32.totalorder %s72, %s73
    %p85 = scmp.eq.s32.totalorder %s16, 1
    %p86 = por %p84, %p85
    %p88 = scmp.ne.s32.totalorder %s73, %s87
    %p89 = scmp.eq.s32.totalorder %s16, 0
    %p90 = por %p88, %p89
    %s92 = sadd.s32 %s91, 1
    %p95 = scmp.eq.s32.totalorder %s10, 1
    %p96 = scmp.ne.s32.totalorder %s91, %s93
    %p97 = scmp.eq.s32.totalorder %s10, 0
    %p98 = por %p96, %p97
    %p99 = scmp.ne.s32.totalorder %s91, %s93
    %p100 = scmp.eq.s32.totalorder %s15, 1
    %p101 = por %p99, %p100
    %p102 = scmp.ne.s32.totalorder %s93, %s94
    %p103 = scmp.eq.s32.totalorder %s15, 0
    %p104 = por %p102, %p103
    %p105 = scmp.ne.s32.totalorder %s93, %s94
    %p106 = scmp.eq.s32.totalorder %s16, 1
    %p107 = por %p105, %p106
    %p109 = scmp.ne.s32.totalorder %s94, %s108
    %p110 = scmp.eq.s32.totalorder %s16, 0
    %p111 = por %p109, %p110
    %s112 = ssub.s32 %s10, %s17
    %p113 = scmp.eq.s32.totalorder %s112, 0
    %s115 = sadd.s32 %s114, 1
    %s116 = scalar_select %p113, %s114, %s115
    %p119 = pneg %p113
    %p120 = scmp.eq.s32.totalorder %s10, 1
    %p121 = por %p119, %p120
    %p122 = scmp.ne.s32.totalorder %s114, %s117
    %p123 = scmp.eq.s32.totalorder %s10, 0
    %p124 = por %p122, %p123
    %p125 = scmp.ne.s32.totalorder %s114, %s117
    %p126 = scmp.eq.s32.totalorder %s15, 1
    %p127 = por %p125, %p126
    %p128 = scmp.ne.s32.totalorder %s117, %s118
    %p129 = scmp.eq.s32.totalorder %s15, 0
    %p130 = por %p128, %p129
    %p131 = scmp.ne.s32.totalorder %s117, %s118
    %p132 = scmp.eq.s32.totalorder %s16, 1
    %p133 = por %p131, %p132
    %p135 = scmp.ne.s32.totalorder %s118, %s134
    %p136 = scmp.eq.s32.totalorder %s16, 0
    %p137 = por %p135, %p136
    %p138 = scmp.le.s32.totalorder 1, %s10
    %p139 = scmp.lt.s32.totalorder %s10, 3
    %p140 = pnand %p138, %p139
    %p141 = pneg %p140
    // Predicated region
    $region9: #{fno2d_forward.9} parent=5 // pred_check
      _
    $region10: #{fno2d_forward.9} parent=5 // pred_check_branch
      %143 = sbr.rel (%p140) target = $region12
    $region11: #{fno2d_forward.9} parent=5 // pred_region
      %s144 = ssub.s32 %s10, 1
      // Predicated region
      $region13: #{fno2d_forward.9} parent=11 // pred_check
        %p145 = pneg %p83
      $region14: #{fno2d_forward.9} parent=11 // pred_check_branch
        %147 = sbr.rel (%p145) target = $region16
      $region15: #{fno2d_forward.9} parent=11 // pred_region
        _
      $region16: #{fno2d_forward.9} parent=11 // pred_fallthru
        _
      // Predicated region
      $region17: #{fno2d_forward.9} parent=11 // pred_check
        %p148 = pneg %p104
      $region18: #{fno2d_forward.9} parent=11 // pred_check_branch
        %150 = sbr.rel (%p148) target = $region20
      $region19: #{fno2d_forward.9} parent=11 // pred_region
        _
      $region20: #{fno2d_forward.9} parent=11 // pred_fallthru
        _
    $region12: #{fno2d_forward.9} parent=5 // pred_fallthru
      _
    %p151 = scmp.lt.s32.totalorder %s10, 2
    // Predicated region
    $region21: #{fno2d_forward.9} parent=5 // pred_check
      %p152 = pneg %p151
    $region22: #{fno2d_forward.9} parent=5 // pred_check_branch
      %154 = sbr.rel (%p152) target = $region24
    $region23: #{fno2d_forward.9} parent=5 // pred_region
      // Predicated region
      $region25: #{fno2d_forward.9} parent=23 // pred_check
        %p155 = pneg %p30
      $region26: #{fno2d_forward.9} parent=23 // pred_check_branch
        %157 = sbr.rel (%p155) target = $region28
      $region27: #{fno2d_forward.9} parent=23 // pred_region
        %s158 = smul.u32 32, %s10
        %p159 = scmp.lt.s32.totalorder %s158, 63
        %s160 = scalar_select %p159, %s158, 63
        %s161 = smul.addr %s160, 8
        %s162 = scalar_lea.vmem %s0, %s161
        %s163 = smul.u32 32, %s10
      $region28: #{fno2d_forward.9} parent=23 // pred_fallthru
        _
      // Predicated region
      $region29: #{fno2d_forward.9} parent=23 // pred_check
        %p164 = pneg %p56
      $region30: #{fno2d_forward.9} parent=23 // pred_check_branch
        %166 = sbr.rel (%p164) target = $region32
      $region31: #{fno2d_forward.9} parent=23 // pred_region
        %s167 = smul.u32 32, %s10
        %p168 = scmp.lt.s32.totalorder %s167, 63
        %s169 = scalar_select %p168, %s167, 63
        %s170 = smul.addr %s169, 8
        %s171 = scalar_lea.vmem %s1, %s170
        %s172 = smul.u32 32, %s10
      $region32: #{fno2d_forward.9} parent=23 // pred_fallthru
        _
    $region24: #{fno2d_forward.9} parent=5 // pred_fallthru
      _
    %p173 = scmp.le.s32.totalorder 1, %s10
    %p174 = scmp.lt.s32.totalorder %s10, 3
    %p175 = pnand %p173, %p174
    %p176 = pneg %p175
    // Predicated region
    $region33: #{fno2d_forward.9} parent=5 // pred_check
      _
    $region34: #{fno2d_forward.9} parent=5 // pred_check_branch
      %178 = sbr.rel (%p175) target = $region36
    $region35: #{fno2d_forward.9} parent=5 // pred_region
      %s179 = ssub.s32 %s10, 1
      %s180 = smul.u32 32, %s15
      %p181 = scmp.lt.s32.totalorder %s180, 63
      %s182 = scalar_select %p181, %s180, 63
      %s183 = smul.addr %s182, 8
      %s184 = scalar_lea.vmem %s0, %s183
      %p185 = pneg %p36
      %p186 = pneg %p33
      %s187 = smul.u32 32, %s15
      %p188 = scmp.lt.s32.totalorder %s187, 63
      %s189 = scalar_select %p188, %s187, 63
      %s190 = smul.addr %s189, 8
      %s191 = scalar_lea.vmem %s1, %s190
      %p192 = pneg %p62
      %p193 = pneg %p59
      %p194 = pneg %p83
      %p195 = pneg %p80
      %p196 = pneg %p104
      %p197 = pneg %p101
      %p198 = pneg %p130
      %p199 = pneg %p127
      %s200 = smul.u32 32, %s15
      %p201 = scmp.lt.s32.totalorder %s200, 63
      %s202 = scalar_select %p201, %s200, 63
      %s203 = smul.addr %s202, 8
      %s204 = scalar_lea.vmem %s4, %s203
      %s205 = smul.u32 32, %s15
      %p206 = scmp.lt.s32.totalorder %s205, 63
      %s207 = scalar_select %p206, %s205, 63
      %s208 = smul.addr %s207, 8
      %s209 = scalar_lea.vmem %s0, %s208
      %s210 = smul.u32 32, %s15
      %s211 = smul.u32 32, %s15
      %p212 = scmp.lt.s32.totalorder %s211, 63
      %s213 = scalar_select %p212, %s211, 63
      %s214 = smul.addr %s213, 8
      %s215 = scalar_lea.vmem %s1, %s214
      %s216 = smul.u32 32, %s15
      %s217 = smul.u32 32, %s15
      %p218 = scmp.lt.s32.totalorder %s217, 63
      %s219 = scalar_select %p218, %s217, 63
      %s220 = smul.addr %s219, 8
      %s221 = scalar_lea.vmem %s4, %s220
      %s222 = smul.u32 32, %s15
      %v223 = vld [vmem:[%s209] sm:$0xff]
      %v224 = vld [vmem:[%s209 + $0x8] sm:$0xff]
      %v225 = vld [vmem:[%s209 + $0x10] sm:$0xff]
      %v226 = vld [vmem:[%s209 + $0x18] sm:$0xff]
      %v227 = vld [vmem:[%s209 + $0x20] sm:$0xff]
      %v228 = vld [vmem:[%s209 + $0x28] sm:$0xff]
      %v229 = vld [vmem:[%s209 + $0x30] sm:$0xff]
      %v230 = vld [vmem:[%s209 + $0x38] sm:$0xff]
      %v231 = vld [vmem:[%s209 + $0x40] sm:$0xff]
      %v232 = vld [vmem:[%s209 + $0x48] sm:$0xff]
      %v233 = vld [vmem:[%s209 + $0x50] sm:$0xff]
      %v234 = vld [vmem:[%s209 + $0x58] sm:$0xff]
      %v235 = vld [vmem:[%s209 + $0x60] sm:$0xff]
      %v236 = vld [vmem:[%s209 + $0x68] sm:$0xff]
      %v237 = vld [vmem:[%s209 + $0x70] sm:$0xff]
      %v238 = vld [vmem:[%s209 + $0x78] sm:$0xff]
      %v239 = vld [vmem:[%s209 + $0x80] sm:$0xff]
      %v240 = vld [vmem:[%s209 + $0x88] sm:$0xff]
      %v241 = vld [vmem:[%s209 + $0x90] sm:$0xff]
      %v242 = vld [vmem:[%s209 + $0x98] sm:$0xff]
      %v243 = vld [vmem:[%s209 + $0xa0] sm:$0xff]
      %v244 = vld [vmem:[%s209 + $0xa8] sm:$0xff]
      %v245 = vld [vmem:[%s209 + $0xb0] sm:$0xff]
      %v246 = vld [vmem:[%s209 + $0xb8] sm:$0xff]
      %v247 = vld [vmem:[%s209 + $0xc0] sm:$0xff]
      %v248 = vld [vmem:[%s209 + $0xc8] sm:$0xff]
      %v249 = vld [vmem:[%s209 + $0xd0] sm:$0xff]
      %v250 = vld [vmem:[%s209 + $0xd8] sm:$0xff]
      %v251 = vld [vmem:[%s209 + $0xe0] sm:$0xff]
      %v252 = vld [vmem:[%s209 + $0xe8] sm:$0xff]
      %v253 = vld [vmem:[%s209 + $0xf0] sm:$0xff]
      %v254 = vld [vmem:[%s209 + $0xf8] sm:$0xff]
      %v255 = vld [vmem:[%s2] sm:$0xff]
      %v256 = vld [vmem:[%s2 + $0x8] sm:$0xff]
      %v257 = vld [vmem:[%s2 + $0x10] sm:$0xff]
      %v258 = vld [vmem:[%s2 + $0x18] sm:$0xff]
      %v259 = vld [vmem:[%s3] sm:$0x1]
      %v261 = vlaneseq
      %v262 = vshrl.u32 %v261, 7
      %v263 = vsub.s32 0, %v262
      %v264 = vrot.slane %v259, %v263
      %vm266 = vcmask 261120
      %v268 = vsel %vm266, %v223, 0
      %v271 = vsel %vm266, %v224, 0
      %v274 = vsel %vm266, %v225, 0
      %v277 = vsel %vm266, %v226, 0
      %v280 = vsel %vm266, %v227, 0
      %v283 = vsel %vm266, %v228, 0
      %v286 = vsel %vm266, %v229, 0
      %v289 = vsel %vm266, %v230, 0
      %v292 = vsel %vm266, %v231, 0
      %v295 = vsel %vm266, %v232, 0
      %v298 = vsel %vm266, %v233, 0
      %v301 = vsel %vm266, %v234, 0
      %v304 = vsel %vm266, %v235, 0
      %v307 = vsel %vm266, %v236, 0
      %v310 = vsel %vm266, %v237, 0
      %v313 = vsel %vm266, %v238, 0
      %v316 = vsel %vm266, %v239, 0
      %v319 = vsel %vm266, %v240, 0
      %v322 = vsel %vm266, %v241, 0
      %v325 = vsel %vm266, %v242, 0
      %v328 = vsel %vm266, %v243, 0
      %v331 = vsel %vm266, %v244, 0
      %v334 = vsel %vm266, %v245, 0
      %v337 = vsel %vm266, %v246, 0
      %v340 = vsel %vm266, %v247, 0
      %v343 = vsel %vm266, %v248, 0
      %v346 = vsel %vm266, %v249, 0
      %v349 = vsel %vm266, %v250, 0
      %v352 = vsel %vm266, %v251, 0
      %v355 = vsel %vm266, %v252, 0
      %v358 = vsel %vm266, %v253, 0
      %v361 = vsel %vm266, %v254, 0
      %363 = vmatprep.subr.mxu0 0.0
      %364 = vmatpush1.msra.mxu0 %v255
      %365 = vmatprep.subr.mxu0 0.0
      %366 = vmatpush1.msra.mxu0 %v256
      %367 = vmatprep.subr.mxu0 0.0
      %368 = vmatpush1.msra.mxu0 %v257
      %369 = vmatprep.subr.mxu0 0.0
      %370 = vmatpush1.msra.mxu0 %v258
      %371 = vmatprep.subr.mxu0 0.0
      %372 = vmatpush1.msra.mxu0 0.0
      %373 = vmatprep.subr.mxu0 0.0
      %374 = vmatpush1.msra.mxu0 0.0
      %375 = vmatprep.subr.mxu0 0.0
      %376 = vmatpush1.msra.mxu0 0.0
      %377 = vmatprep.subr.mxu0 0.0
      %378 = vmatpush1.msra.mxu0 0.0
      %379 = vmatprep.subr.mxu0 0.0
      %380 = vmatpush1.msra.mxu0 0.0
      %381 = vmatprep.subr.mxu0 0.0
      %382 = vmatpush1.msra.mxu0 0.0
      %383 = vmatprep.subr.mxu0 0.0
      %384 = vmatpush1.msra.mxu0 0.0
      %385 = vmatprep.subr.mxu0 0.0
      %386 = vmatpush1.msra.mxu0 0.0
      %387 = vmatprep.subr.mxu0 0.0
      %388 = vmatpush1.msra.mxu0 0.0
      %389 = vmatprep.subr.mxu0 0.0
      %390 = vmatpush1.msra.mxu0 0.0
      %391 = vmatprep.subr.mxu0 0.0
      %392 = vmatpush1.msra.mxu0 0.0
      %393 = vmatprep.subr.mxu0 0.0
      %394 = vmatpush1.msra.mxu0 0.0
      %395 = vmatprep.subr.mxu0 0.0
      %396 = vmatpush1.msra.mxu0 0.0
      %397 = vmatprep.subr.mxu0 0.0
      %398 = vmatpush1.msra.mxu0 0.0
      %399 = vmatprep.subr.mxu0 0.0
      %400 = vmatpush1.msra.mxu0 0.0
      %401 = vmatprep.subr.mxu0 0.0
      %402 = vmatpush1.msra.mxu0 0.0
      %403 = vmatprep.subr.mxu0 0.0
      %404 = vmatpush1.msra.mxu0 0.0
      %405 = vmatprep.subr.mxu0 0.0
      %406 = vmatpush1.msra.mxu0 0.0
      %407 = vmatprep.subr.mxu0 0.0
      %408 = vmatpush1.msra.mxu0 0.0
      %409 = vmatprep.subr.mxu0 0.0
      %410 = vmatpush1.msra.mxu0 0.0
      %411 = vmatprep.subr.mxu0 0.0
      %412 = vmatpush1.msra.mxu0 0.0
      %413 = vmatprep.subr.mxu0 0.0
      %414 = vmatpush1.msra.mxu0 0.0
      %415 = vmatprep.subr.mxu0 0.0
      %416 = vmatpush1.msra.mxu0 0.0
      %417 = vmatprep.subr.mxu0 0.0
      %418 = vmatpush1.msra.mxu0 0.0
      %419 = vmatprep.subr.mxu0 0.0
      %420 = vmatpush1.msra.mxu0 0.0
      %421 = vmatprep.subr.mxu0 0.0
      %422 = vmatpush1.msra.mxu0 0.0
      %423 = vmatprep.subr.mxu0 0.0
      %424 = vmatpush1.msra.mxu0 0.0
      %425 = vmatprep.subr.mxu0 0.0
      %426 = vmatpush1.msra.mxu0 0.0
      %427 = vmatprep.mubr.f32.mxu0 0.0
      %428 = vmatmul.mubr.f32.gmra.mrb[0].mxu0 %v268
      %v429 = vpop.f32.mrb[0].mxu0
      %v430 = vadd.f32 %v264, %v429
      %v431 = vpop.f32.mrb[0].mxu0
      %432 = vmatprep.mubr.f32.mxu0 0.0
      %433 = vmatmul.mubr.f32.gmra.mrb[0].mxu0 %v271
      %v434 = vpop.f32.mrb[0].mxu0
      %v435 = vadd.f32 %v264, %v434
      %v436 = vpop.f32.mrb[0].mxu0
      %437 = vmatprep.mubr.f32.mxu0 0.0
      %438 = vmatmul.mubr.f32.gmra.mrb[0].mxu0 %v274
      %v439 = vpop.f32.mrb[0].mxu0
      %v440 = vadd.f32 %v264, %v439
      %v441 = vpop.f32.mrb[0].mxu0
      %442 = vmatprep.mubr.f32.mxu0 0.0
      %443 = vmatmul.mubr.f32.gmra.mrb[0].mxu0 %v277
      %v444 = vpop.f32.mrb[0].mxu0
      %v445 = vadd.f32 %v264, %v444
      %v446 = vpop.f32.mrb[0].mxu0
      %447 = vmatprep.mubr.f32.mxu0 0.0
      %448 = vmatmul.mubr.f32.gmra.mrb[0].mxu0 %v280
      %v449 = vpop.f32.mrb[0].mxu0
      %v450 = vadd.f32 %v264, %v449
      %v451 = vpop.f32.mrb[0].mxu0
      %452 = vmatprep.mubr.f32.mxu0 0.0
      %453 = vmatmul.mubr.f32.gmra.mrb[0].mxu0 %v283
      %v454 = vpop.f32.mrb[0].mxu0
      %v455 = vadd.f32 %v264, %v454
      %v456 = vpop.f32.mrb[0].mxu0
      %457 = vmatprep.mubr.f32.mxu0 0.0
      %458 = vmatmul.mubr.f32.gmra.mrb[0].mxu0 %v286
      %v459 = vpop.f32.mrb[0].mxu0
      %v460 = vadd.f32 %v264, %v459
      %v461 = vpop.f32.mrb[0].mxu0
      %462 = vmatprep.mubr.f32.mxu0 0.0
      %463 = vmatmul.mubr.f32.gmra.mrb[0].mxu0 %v289
      %v464 = vpop.f32.mrb[0].mxu0
      %v465 = vadd.f32 %v264, %v464
      %v466 = vpop.f32.mrb[0].mxu0
      %467 = vmatprep.mubr.f32.mxu0 0.0
      %468 = vmatmul.mubr.f32.gmra.mrb[0].mxu0 %v292
      %v469 = vpop.f32.mrb[0].mxu0
      %v470 = vadd.f32 %v264, %v469
      %v471 = vpop.f32.mrb[0].mxu0
      %472 = vmatprep.mubr.f32.mxu0 0.0
      %473 = vmatmul.mubr.f32.gmra.mrb[0].mxu0 %v295
      %v474 = vpop.f32.mrb[0].mxu0
      %v475 = vadd.f32 %v264, %v474
      %v476 = vpop.f32.mrb[0].mxu0
      %477 = vmatprep.mubr.f32.mxu0 0.0
      %478 = vmatmul.mubr.f32.gmra.mrb[0].mxu0 %v298
      %v479 = vpop.f32.mrb[0].mxu0
      %v480 = vadd.f32 %v264, %v479
      %v481 = vpop.f32.mrb[0].mxu0
      %482 = vmatprep.mubr.f32.mxu0 0.0
      %483 = vmatmul.mubr.f32.gmra.mrb[0].mxu0 %v301
      %v484 = vpop.f32.mrb[0].mxu0
      %v485 = vadd.f32 %v264, %v484
      %v486 = vpop.f32.mrb[0].mxu0
      %487 = vmatprep.mubr.f32.mxu0 0.0
      %488 = vmatmul.mubr.f32.gmra.mrb[0].mxu0 %v304
      %v489 = vpop.f32.mrb[0].mxu0
      %v490 = vadd.f32 %v264, %v489
      %v491 = vpop.f32.mrb[0].mxu0
      %492 = vmatprep.mubr.f32.mxu0 0.0
      %493 = vmatmul.mubr.f32.gmra.mrb[0].mxu0 %v307
      %v494 = vpop.f32.mrb[0].mxu0
      %v495 = vadd.f32 %v264, %v494
      %v496 = vpop.f32.mrb[0].mxu0
      %497 = vmatprep.mubr.f32.mxu0 0.0
      %498 = vmatmul.mubr.f32.gmra.mrb[0].mxu0 %v310
      %v499 = vpop.f32.mrb[0].mxu0
      %v500 = vadd.f32 %v264, %v499
      %v501 = vpop.f32.mrb[0].mxu0
      %502 = vmatprep.mubr.f32.mxu0 0.0
      %503 = vmatmul.mubr.f32.gmra.mrb[0].mxu0 %v313
      %v504 = vpop.f32.mrb[0].mxu0
      %v505 = vadd.f32 %v264, %v504
      %v506 = vpop.f32.mrb[0].mxu0
      %507 = vmatprep.mubr.f32.mxu0 0.0
      %508 = vmatmul.mubr.f32.gmra.mrb[0].mxu0 %v316
      %v509 = vpop.f32.mrb[0].mxu0
      %v510 = vadd.f32 %v264, %v509
      %v511 = vpop.f32.mrb[0].mxu0
      %512 = vmatprep.mubr.f32.mxu0 0.0
      %513 = vmatmul.mubr.f32.gmra.mrb[0].mxu0 %v319
      %v514 = vpop.f32.mrb[0].mxu0
      %v515 = vadd.f32 %v264, %v514
      %v516 = vpop.f32.mrb[0].mxu0
      %517 = vmatprep.mubr.f32.mxu0 0.0
      %518 = vmatmul.mubr.f32.gmra.mrb[0].mxu0 %v322
      %v519 = vpop.f32.mrb[0].mxu0
      %v520 = vadd.f32 %v264, %v519
      %v521 = vpop.f32.mrb[0].mxu0
      %522 = vmatprep.mubr.f32.mxu0 0.0
      %523 = vmatmul.mubr.f32.gmra.mrb[0].mxu0 %v325
      %v524 = vpop.f32.mrb[0].mxu0
      %v525 = vadd.f32 %v264, %v524
      %v526 = vpop.f32.mrb[0].mxu0
      %527 = vmatprep.mubr.f32.mxu0 0.0
      %528 = vmatmul.mubr.f32.gmra.mrb[0].mxu0 %v328
      %v529 = vpop.f32.mrb[0].mxu0
      %v530 = vadd.f32 %v264, %v529
      %v531 = vpop.f32.mrb[0].mxu0
      %532 = vmatprep.mubr.f32.mxu0 0.0
      %533 = vmatmul.mubr.f32.gmra.mrb[0].mxu0 %v331
      %v534 = vpop.f32.mrb[0].mxu0
      %v535 = vadd.f32 %v264, %v534
      %v536 = vpop.f32.mrb[0].mxu0
      %537 = vmatprep.mubr.f32.mxu0 0.0
      %538 = vmatmul.mubr.f32.gmra.mrb[0].mxu0 %v334
      %v539 = vpop.f32.mrb[0].mxu0
      %v540 = vadd.f32 %v264, %v539
      %v541 = vpop.f32.mrb[0].mxu0
      %542 = vmatprep.mubr.f32.mxu0 0.0
      %543 = vmatmul.mubr.f32.gmra.mrb[0].mxu0 %v337
      %v544 = vpop.f32.mrb[0].mxu0
      %v545 = vadd.f32 %v264, %v544
      %v546 = vpop.f32.mrb[0].mxu0
      %547 = vmatprep.mubr.f32.mxu0 0.0
      %548 = vmatmul.mubr.f32.gmra.mrb[0].mxu0 %v340
      %v549 = vpop.f32.mrb[0].mxu0
      %v550 = vadd.f32 %v264, %v549
      %v551 = vpop.f32.mrb[0].mxu0
      %552 = vmatprep.mubr.f32.mxu0 0.0
      %553 = vmatmul.mubr.f32.gmra.mrb[0].mxu0 %v343
      %v554 = vpop.f32.mrb[0].mxu0
      %v555 = vadd.f32 %v264, %v554
      %v556 = vpop.f32.mrb[0].mxu0
      %557 = vmatprep.mubr.f32.mxu0 0.0
      %558 = vmatmul.mubr.f32.gmra.mrb[0].mxu0 %v346
      %v559 = vpop.f32.mrb[0].mxu0
      %v560 = vadd.f32 %v264, %v559
      %v561 = vpop.f32.mrb[0].mxu0
      %562 = vmatprep.mubr.f32.mxu0 0.0
      %563 = vmatmul.mubr.f32.gmra.mrb[0].mxu0 %v349
      %v564 = vpop.f32.mrb[0].mxu0
      %v565 = vadd.f32 %v264, %v564
      %v566 = vpop.f32.mrb[0].mxu0
      %567 = vmatprep.mubr.f32.mxu0 0.0
      %568 = vmatmul.mubr.f32.gmra.mrb[0].mxu0 %v352
      %v569 = vpop.f32.mrb[0].mxu0
      %v570 = vadd.f32 %v264, %v569
      %v571 = vpop.f32.mrb[0].mxu0
      %572 = vmatprep.mubr.f32.mxu0 0.0
      %573 = vmatmul.mubr.f32.gmra.mrb[0].mxu0 %v355
      %v574 = vpop.f32.mrb[0].mxu0
      %v575 = vadd.f32 %v264, %v574
      %v576 = vpop.f32.mrb[0].mxu0
      %577 = vmatprep.mubr.f32.mxu0 0.0
      %578 = vmatmul.mubr.f32.gmra.mrb[0].mxu0 %v358
      %v579 = vpop.f32.mrb[0].mxu0
      %v580 = vadd.f32 %v264, %v579
      %v581 = vpop.f32.mrb[0].mxu0
      %582 = vmatprep.mubr.f32.mxu0 0.0
      %583 = vmatmul.mubr.f32.gmra.mrb[0].mxu0 %v361
      %v584 = vpop.f32.mrb[0].mxu0
      %v585 = vadd.f32 %v264, %v584
      %v586 = vpop.f32.mrb[0].mxu0
      %587 = vdwg.mxu0
      %v588 = vld [vmem:[%s215] sm:$0xff]
      %v589 = vld [vmem:[%s215 + $0x8] sm:$0xff]
      %v590 = vld [vmem:[%s215 + $0x10] sm:$0xff]
      %v591 = vld [vmem:[%s215 + $0x18] sm:$0xff]
      %v592 = vld [vmem:[%s215 + $0x20] sm:$0xff]
      %v593 = vld [vmem:[%s215 + $0x28] sm:$0xff]
      %v594 = vld [vmem:[%s215 + $0x30] sm:$0xff]
      %v595 = vld [vmem:[%s215 + $0x38] sm:$0xff]
      %v596 = vld [vmem:[%s215 + $0x40] sm:$0xff]
      %v597 = vld [vmem:[%s215 + $0x48] sm:$0xff]
      %v598 = vld [vmem:[%s215 + $0x50] sm:$0xff]
      %v599 = vld [vmem:[%s215 + $0x58] sm:$0xff]
      %v600 = vld [vmem:[%s215 + $0x60] sm:$0xff]
      %v601 = vld [vmem:[%s215 + $0x68] sm:$0xff]
      %v602 = vld [vmem:[%s215 + $0x70] sm:$0xff]
      %v603 = vld [vmem:[%s215 + $0x78] sm:$0xff]
      %v604 = vld [vmem:[%s215 + $0x80] sm:$0xff]
      %v605 = vld [vmem:[%s215 + $0x88] sm:$0xff]
      %v606 = vld [vmem:[%s215 + $0x90] sm:$0xff]
      %v607 = vld [vmem:[%s215 + $0x98] sm:$0xff]
      %v608 = vld [vmem:[%s215 + $0xa0] sm:$0xff]
      %v609 = vld [vmem:[%s215 + $0xa8] sm:$0xff]
      %v610 = vld [vmem:[%s215 + $0xb0] sm:$0xff]
      %v611 = vld [vmem:[%s215 + $0xb8] sm:$0xff]
      %v612 = vld [vmem:[%s215 + $0xc0] sm:$0xff]
      %v613 = vld [vmem:[%s215 + $0xc8] sm:$0xff]
      %v614 = vld [vmem:[%s215 + $0xd0] sm:$0xff]
      %v615 = vld [vmem:[%s215 + $0xd8] sm:$0xff]
      %v616 = vld [vmem:[%s215 + $0xe0] sm:$0xff]
      %v617 = vld [vmem:[%s215 + $0xe8] sm:$0xff]
      %v618 = vld [vmem:[%s215 + $0xf0] sm:$0xff]
      %v619 = vld [vmem:[%s215 + $0xf8] sm:$0xff]
      %v620 = vadd.f32 %v430, %v588
      %v621 = vadd.f32 %v435, %v589
      %v622 = vadd.f32 %v440, %v590
      %v623 = vadd.f32 %v445, %v591
      %v624 = vadd.f32 %v450, %v592
      %v625 = vadd.f32 %v455, %v593
      %v626 = vadd.f32 %v460, %v594
      %v627 = vadd.f32 %v465, %v595
      %v628 = vadd.f32 %v470, %v596
      %v629 = vadd.f32 %v475, %v597
      %v630 = vadd.f32 %v480, %v598
      %v631 = vadd.f32 %v485, %v599
      %v632 = vadd.f32 %v490, %v600
      %v633 = vadd.f32 %v495, %v601
      %v634 = vadd.f32 %v500, %v602
      %v635 = vadd.f32 %v505, %v603
      %v636 = vadd.f32 %v510, %v604
      %v637 = vadd.f32 %v515, %v605
      %v638 = vadd.f32 %v520, %v606
      %v639 = vadd.f32 %v525, %v607
      %v640 = vadd.f32 %v530, %v608
      %v641 = vadd.f32 %v535, %v609
      %v642 = vadd.f32 %v540, %v610
      %v643 = vadd.f32 %v545, %v611
      %v644 = vadd.f32 %v550, %v612
      %v645 = vadd.f32 %v555, %v613
      %v646 = vadd.f32 %v560, %v614
      %v647 = vadd.f32 %v565, %v615
      %v648 = vadd.f32 %v570, %v616
      %v649 = vadd.f32 %v575, %v617
      %v650 = vadd.f32 %v580, %v618
      %v651 = vadd.f32 %v585, %v619
      %v652 = vmax.f32 %v620, 0.0
      %v653 = vmax.f32 %v621, 0.0
      %v654 = vmax.f32 %v622, 0.0
      %v655 = vmax.f32 %v623, 0.0
      %v656 = vmax.f32 %v624, 0.0
      %v657 = vmax.f32 %v625, 0.0
      %v658 = vmax.f32 %v626, 0.0
      %v659 = vmax.f32 %v627, 0.0
      %v660 = vmax.f32 %v628, 0.0
      %v661 = vmax.f32 %v629, 0.0
      %v662 = vmax.f32 %v630, 0.0
      %v663 = vmax.f32 %v631, 0.0
      %v664 = vmax.f32 %v632, 0.0
      %v665 = vmax.f32 %v633, 0.0
      %v666 = vmax.f32 %v634, 0.0
      %v667 = vmax.f32 %v635, 0.0
      %v668 = vmax.f32 %v636, 0.0
      %v669 = vmax.f32 %v637, 0.0
      %v670 = vmax.f32 %v638, 0.0
      %v671 = vmax.f32 %v639, 0.0
      %v672 = vmax.f32 %v640, 0.0
      %v673 = vmax.f32 %v641, 0.0
      %v674 = vmax.f32 %v642, 0.0
      %v675 = vmax.f32 %v643, 0.0
      %v676 = vmax.f32 %v644, 0.0
      %v677 = vmax.f32 %v645, 0.0
      %v678 = vmax.f32 %v646, 0.0
      %v679 = vmax.f32 %v647, 0.0
      %v680 = vmax.f32 %v648, 0.0
      %v681 = vmax.f32 %v649, 0.0
      %v682 = vmax.f32 %v650, 0.0
      %v683 = vmax.f32 %v651, 0.0
      %684 = vst.msk [vmem:[%s221] sm:$0xff] %vm266, %v652
      %685 = vst.msk [vmem:[%s221 + $0x8] sm:$0xff] %vm266, %v653
      %686 = vst.msk [vmem:[%s221 + $0x10] sm:$0xff] %vm266, %v654
      %687 = vst.msk [vmem:[%s221 + $0x18] sm:$0xff] %vm266, %v655
      %688 = vst.msk [vmem:[%s221 + $0x20] sm:$0xff] %vm266, %v656
      %689 = vst.msk [vmem:[%s221 + $0x28] sm:$0xff] %vm266, %v657
      %690 = vst.msk [vmem:[%s221 + $0x30] sm:$0xff] %vm266, %v658
      %691 = vst.msk [vmem:[%s221 + $0x38] sm:$0xff] %vm266, %v659
      %692 = vst.msk [vmem:[%s221 + $0x40] sm:$0xff] %vm266, %v660
      %693 = vst.msk [vmem:[%s221 + $0x48] sm:$0xff] %vm266, %v661
      %694 = vst.msk [vmem:[%s221 + $0x50] sm:$0xff] %vm266, %v662
      %695 = vst.msk [vmem:[%s221 + $0x58] sm:$0xff] %vm266, %v663
      %696 = vst.msk [vmem:[%s221 + $0x60] sm:$0xff] %vm266, %v664
      %697 = vst.msk [vmem:[%s221 + $0x68] sm:$0xff] %vm266, %v665
      %698 = vst.msk [vmem:[%s221 + $0x70] sm:$0xff] %vm266, %v666
      %699 = vst.msk [vmem:[%s221 + $0x78] sm:$0xff] %vm266, %v667
      %700 = vst.msk [vmem:[%s221 + $0x80] sm:$0xff] %vm266, %v668
      %701 = vst.msk [vmem:[%s221 + $0x88] sm:$0xff] %vm266, %v669
      %702 = vst.msk [vmem:[%s221 + $0x90] sm:$0xff] %vm266, %v670
      %703 = vst.msk [vmem:[%s221 + $0x98] sm:$0xff] %vm266, %v671
      %704 = vst.msk [vmem:[%s221 + $0xa0] sm:$0xff] %vm266, %v672
      %705 = vst.msk [vmem:[%s221 + $0xa8] sm:$0xff] %vm266, %v673
      %706 = vst.msk [vmem:[%s221 + $0xb0] sm:$0xff] %vm266, %v674
      %707 = vst.msk [vmem:[%s221 + $0xb8] sm:$0xff] %vm266, %v675
      %708 = vst.msk [vmem:[%s221 + $0xc0] sm:$0xff] %vm266, %v676
      %709 = vst.msk [vmem:[%s221 + $0xc8] sm:$0xff] %vm266, %v677
      %710 = vst.msk [vmem:[%s221 + $0xd0] sm:$0xff] %vm266, %v678
      %711 = vst.msk [vmem:[%s221 + $0xd8] sm:$0xff] %vm266, %v679
      %712 = vst.msk [vmem:[%s221 + $0xe0] sm:$0xff] %vm266, %v680
      %713 = vst.msk [vmem:[%s221 + $0xe8] sm:$0xff] %vm266, %v681
      %714 = vst.msk [vmem:[%s221 + $0xf0] sm:$0xff] %vm266, %v682
      %715 = vst.msk [vmem:[%s221 + $0xf8] sm:$0xff] %vm266, %v683
      %s716 = smul.u32 32, %s15
      %p717 = scmp.lt.s32.totalorder %s716, 63
      %s718 = scalar_select %p717, %s716, 63
      %s719 = smul.addr %s718, 8
      %s720 = scalar_lea.vmem %s4, %s719
      // Predicated region
      $region37: #{fno2d_forward.9} parent=35 // pred_check
        %p721 = pneg %p127
      $region38: #{fno2d_forward.9} parent=35 // pred_check_branch
        %723 = sbr.rel (%p721) target = $region40
      $region39: #{fno2d_forward.9} parent=35 // pred_region
        %s724 = smul.u32 32, %s15
      $region40: #{fno2d_forward.9} parent=35 // pred_fallthru
        _
    $region36: #{fno2d_forward.9} parent=5 // pred_fallthru
      _
    %p725 = scmp.le.s32.totalorder 2, %s10
    // Predicated region
    $region41: #{fno2d_forward.9} parent=5 // pred_check
      %p726 = pneg %p725
    $region42: #{fno2d_forward.9} parent=5 // pred_check_branch
      %728 = sbr.rel (%p726) target = $region44
    $region43: #{fno2d_forward.9} parent=5 // pred_region
      %s729 = ssub.s32 %s10, 2
      // Predicated region
      $region45: #{fno2d_forward.9} parent=43 // pred_check
        %p730 = pneg %p133
      $region46: #{fno2d_forward.9} parent=43 // pred_check_branch
        %732 = sbr.rel (%p730) target = $region48
      $region47: #{fno2d_forward.9} parent=43 // pred_region
        %s733 = smul.u32 32, %s16
        %p734 = scmp.lt.s32.totalorder %s733, 63
        %s735 = scalar_select %p734, %s733, 63
        %s736 = smul.addr %s735, 8
        %s737 = scalar_lea.vmem %s4, %s736
      $region48: #{fno2d_forward.9} parent=43 // pred_fallthru
        _
    $region44: #{fno2d_forward.9} parent=5 // pred_fallthru
      _
  $region6: #{fno2d_forward.9} parent=0 // loop_footer
    %s14 = sadd.s32 1, %s10
  $region7: #{fno2d_forward.9} parent=0 // loop_footer_branch
    %9 = sbr.rel target = $region3
  $region8: #{fno2d_forward.9} parent=0 // loop_exit
    _

// kernel: fno2d_forward.15
$region0: #{fno2d_forward.15}
  #allocation0 [shape = 'u32[]', space=smem, size = 0x4, offset = 0x4, fixed_abs, tag = 'smem constant byte address 0x4 - core index']
  #allocation1 [shape = 'u32[144,128]{1,0:T(1,128)}', space=vmem, size = 0x12000, scoped, tag = 'internal scratch']
  #allocation2 [shape = 'f32[1,1]{1,0:T(1,128)S(1)}', space=vmem, size = 0x200, scoped, tag = 'scoped memory for fno2d_forward.15']
  %s0 = inlined_call_operand.vmem [shape: f32[512,32], index: 0, kind: input, shape index: {}]
  %s1 = inlined_call_operand.vmem [shape: f32[512,32], index: 1, kind: input, shape index: {}]
  %s2 = inlined_call_operand.vmem [shape: f32[32,32], index: 2, kind: input, shape index: {}]
  %s3 = inlined_call_operand.vmem [shape: f32[1,32], index: 3, kind: input, shape index: {}]
  %s4 = inlined_call_operand.vmem [shape: f32[32,128], index: 4, kind: input, shape index: {}]
  %s5 = inlined_call_operand.vmem [shape: f32[1,128], index: 5, kind: input, shape index: {}]
  %s6 = inlined_call_operand.vmem [shape: f32[128,1], index: 6, kind: input, shape index: {}]
  %s7 = inlined_call_operand.<no memory space> [shape: f32[1,1], index: 7, kind: input, shape index: {}]
  %s8 = inlined_call_operand.vmem [shape: f32[512,1], index: 8, kind: output, shape index: {}]
  %s9 = sld [smem:[#allocation0]]
  $region65: #{fno2d_forward.15} parent=0
    _
  %s11 = ssub.s32 1, %s9
  %s12 = scalar_select 0, %s11, %s9
  %v13 = vstv %s7
  %14 = vst [vmem:[#allocation2] sm:$0x1] %v13
  loop: start=0, step=1, limit=4
  $region2: #{fno2d_forward.15} parent=0 // loop_pre_header
    _
  $region3: #{fno2d_forward.15} parent=0 // loop_header
    %s16 = sphi 0, %s20
    %p17 = scmp.ge.s32.totalorder %s16, 4
    %s26 = sphi 0, %s28
    %s29 = sphi 0, %s26
    %s30 = sphi 0, %s29
    %s46 = sphi 0, %s30
    %s52 = sphi 0, %s54
    %s55 = sphi 0, %s52
    %s56 = sphi 0, %s55
    %s72 = sphi 0, %s56
    %s76 = sphi 0, %s76
    %s78 = sphi 0, %s76
    %s79 = sphi 0, %s78
    %s93 = sphi 0, %s79
    %s97 = sphi 0, %s97
    %s99 = sphi 0, %s97
    %s100 = sphi 0, %s99
    %s114 = sphi 0, %s100
    %s118 = sphi 0, %s118
    %s120 = sphi 0, %s118
    %s121 = sphi 0, %s120
    %s135 = sphi 0, %s121
    %s139 = sphi 0, %s139
    %s141 = sphi 0, %s139
    %s142 = sphi 0, %s141
    %s156 = sphi 0, %s142
    %s160 = sphi 0, %s160
    %s162 = sphi 0, %s160
    %s163 = sphi 0, %s162
    %s177 = sphi 0, %s163
    %s181 = sphi 0, %s181
    %s183 = sphi 0, %s181
    %s184 = sphi 0, %s183
    %s198 = sphi 0, %s184
    %s204 = sphi 0, %s206
    %s207 = sphi 0, %s204
    %s208 = sphi 0, %s207
    %s224 = sphi 0, %s208
  $region4: #{fno2d_forward.15} parent=0 // loop_header_branch
    %19 = sbr.rel (%p17) target = $region8
  $region5: #{fno2d_forward.15} parent=0 // loop_body
    %s21 = ssub.s32 %s16, 1
    %s22 = ssub.s32 %s16, 2
    %s23 = sadd.s32 %s16, 1
    %s24 = ssub.s32 %s16, %s23
    %p25 = scmp.eq.s32.totalorder %s24, 0
    %s27 = sadd.s32 %s26, 1
    %s28 = scalar_select %p25, %s26, %s27
    %p31 = pneg %p25
    %p32 = scmp.eq.s32.totalorder %s16, 1
    %p33 = por %p31, %p32
    %p34 = scmp.ne.s32.totalorder %s26, %s29
    %p35 = scmp.eq.s32.totalorder %s16, 0
    %p36 = por %p34, %p35
    %p37 = scmp.ne.s32.totalorder %s26, %s29
    %p38 = scmp.eq.s32.totalorder %s21, 1
    %p39 = por %p37, %p38
    %p40 = scmp.ne.s32.totalorder %s29, %s30
    %p41 = scmp.eq.s32.totalorder %s21, 0
    %p42 = por %p40, %p41
    %p43 = scmp.ne.s32.totalorder %s29, %s30
    %p44 = scmp.eq.s32.totalorder %s22, 1
    %p45 = por %p43, %p44
    %p47 = scmp.ne.s32.totalorder %s30, %s46
    %p48 = scmp.eq.s32.totalorder %s22, 0
    %p49 = por %p47, %p48
    %s50 = ssub.s32 %s16, %s23
    %p51 = scmp.eq.s32.totalorder %s50, 0
    %s53 = sadd.s32 %s52, 1
    %s54 = scalar_select %p51, %s52, %s53
    %p57 = pneg %p51
    %p58 = scmp.eq.s32.totalorder %s16, 1
    %p59 = por %p57, %p58
    %p60 = scmp.ne.s32.totalorder %s52, %s55
    %p61 = scmp.eq.s32.totalorder %s16, 0
    %p62 = por %p60, %p61
    %p63 = scmp.ne.s32.totalorder %s52, %s55
    %p64 = scmp.eq.s32.totalorder %s21, 1
    %p65 = por %p63, %p64
    %p66 = scmp.ne.s32.totalorder %s55, %s56
    %p67 = scmp.eq.s32.totalorder %s21, 0
    %p68 = por %p66, %p67
    %p69 = scmp.ne.s32.totalorder %s55, %s56
    %p70 = scmp.eq.s32.totalorder %s22, 1
    %p71 = por %p69, %p70
    %p73 = scmp.ne.s32.totalorder %s56, %s72
    %p74 = scmp.eq.s32.totalorder %s22, 0
    %p75 = por %p73, %p74
    %s77 = sadd.s32 %s76, 1
    %p80 = scmp.eq.s32.totalorder %s16, 1
    %p81 = scmp.ne.s32.totalorder %s76, %s78
    %p82 = scmp.eq.s32.totalorder %s16, 0
    %p83 = por %p81, %p82
    %p84 = scmp.ne.s32.totalorder %s76, %s78
    %p85 = scmp.eq.s32.totalorder %s21, 1
    %p86 = por %p84, %p85
    %p87 = scmp.ne.s32.totalorder %s78, %s79
    %p88 = scmp.eq.s32.totalorder %s21, 0
    %p89 = por %p87, %p88
    %p90 = scmp.ne.s32.totalorder %s78, %s79
    %p91 = scmp.eq.s32.totalorder %s22, 1
    %p92 = por %p90, %p91
    %p94 = scmp.ne.s32.totalorder %s79, %s93
    %p95 = scmp.eq.s32.totalorder %s22, 0
    %p96 = por %p94, %p95
    %s98 = sadd.s32 %s97, 1
    %p101 = scmp.eq.s32.totalorder %s16, 1
    %p102 = scmp.ne.s32.totalorder %s97, %s99
    %p103 = scmp.eq.s32.totalorder %s16, 0
    %p104 = por %p102, %p103
    %p105 = scmp.ne.s32.totalorder %s97, %s99
    %p106 = scmp.eq.s32.totalorder %s21, 1
    %p107 = por %p105, %p106
    %p108 = scmp.ne.s32.totalorder %s99, %s100
    %p109 = scmp.eq.s32.totalorder %s21, 0
    %p110 = por %p108, %p109
    %p111 = scmp.ne.s32.totalorder %s99, %s100
    %p112 = scmp.eq.s32.totalorder %s22, 1
    %p113 = por %p111, %p112
    %p115 = scmp.ne.s32.totalorder %s100, %s114
    %p116 = scmp.eq.s32.totalorder %s22, 0
    %p117 = por %p115, %p116
    %s119 = sadd.s32 %s118, 1
    %p122 = scmp.eq.s32.totalorder %s16, 1
    %p123 = scmp.ne.s32.totalorder %s118, %s120
    %p124 = scmp.eq.s32.totalorder %s16, 0
    %p125 = por %p123, %p124
    %p126 = scmp.ne.s32.totalorder %s118, %s120
    %p127 = scmp.eq.s32.totalorder %s21, 1
    %p128 = por %p126, %p127
    %p129 = scmp.ne.s32.totalorder %s120, %s121
    %p130 = scmp.eq.s32.totalorder %s21, 0
    %p131 = por %p129, %p130
    %p132 = scmp.ne.s32.totalorder %s120, %s121
    %p133 = scmp.eq.s32.totalorder %s22, 1
    %p134 = por %p132, %p133
    %p136 = scmp.ne.s32.totalorder %s121, %s135
    %p137 = scmp.eq.s32.totalorder %s22, 0
    %p138 = por %p136, %p137
    %s140 = sadd.s32 %s139, 1
    %p143 = scmp.eq.s32.totalorder %s16, 1
    %p144 = scmp.ne.s32.totalorder %s139, %s141
    %p145 = scmp.eq.s32.totalorder %s16, 0
    %p146 = por %p144, %p145
    %p147 = scmp.ne.s32.totalorder %s139, %s141
    %p148 = scmp.eq.s32.totalorder %s21, 1
    %p149 = por %p147, %p148
    %p150 = scmp.ne.s32.totalorder %s141, %s142
    %p151 = scmp.eq.s32.totalorder %s21, 0
    %p152 = por %p150, %p151
    %p153 = scmp.ne.s32.totalorder %s141, %s142
    %p154 = scmp.eq.s32.totalorder %s22, 1
    %p155 = por %p153, %p154
    %p157 = scmp.ne.s32.totalorder %s142, %s156
    %p158 = scmp.eq.s32.totalorder %s22, 0
    %p159 = por %p157, %p158
    %s161 = sadd.s32 %s160, 1
    %p164 = scmp.eq.s32.totalorder %s16, 1
    %p165 = scmp.ne.s32.totalorder %s160, %s162
    %p166 = scmp.eq.s32.totalorder %s16, 0
    %p167 = por %p165, %p166
    %p168 = scmp.ne.s32.totalorder %s160, %s162
    %p169 = scmp.eq.s32.totalorder %s21, 1
    %p170 = por %p168, %p169
    %p171 = scmp.ne.s32.totalorder %s162, %s163
    %p172 = scmp.eq.s32.totalorder %s21, 0
    %p173 = por %p171, %p172
    %p174 = scmp.ne.s32.totalorder %s162, %s163
    %p175 = scmp.eq.s32.totalorder %s22, 1
    %p176 = por %p174, %p175
    %p178 = scmp.ne.s32.totalorder %s163, %s177
    %p179 = scmp.eq.s32.totalorder %s22, 0
    %p180 = por %p178, %p179
    %s182 = sadd.s32 %s181, 1
    %p185 = scmp.eq.s32.totalorder %s16, 1
    %p186 = scmp.ne.s32.totalorder %s181, %s183
    %p187 = scmp.eq.s32.totalorder %s16, 0
    %p188 = por %p186, %p187
    %p189 = scmp.ne.s32.totalorder %s181, %s183
    %p190 = scmp.eq.s32.totalorder %s21, 1
    %p191 = por %p189, %p190
    %p192 = scmp.ne.s32.totalorder %s183, %s184
    %p193 = scmp.eq.s32.totalorder %s21, 0
    %p194 = por %p192, %p193
    %p195 = scmp.ne.s32.totalorder %s183, %s184
    %p196 = scmp.eq.s32.totalorder %s22, 1
    %p197 = por %p195, %p196
    %p199 = scmp.ne.s32.totalorder %s184, %s198
    %p200 = scmp.eq.s32.totalorder %s22, 0
    %p201 = por %p199, %p200
    %s202 = ssub.s32 %s16, %s23
    %p203 = scmp.eq.s32.totalorder %s202, 0
    %s205 = sadd.s32 %s204, 1
    %s206 = scalar_select %p203, %s204, %s205
    %p209 = pneg %p203
    %p210 = scmp.eq.s32.totalorder %s16, 1
    %p211 = por %p209, %p210
    %p212 = scmp.ne.s32.totalorder %s204, %s207
    %p213 = scmp.eq.s32.totalorder %s16, 0
    %p214 = por %p212, %p213
    %p215 = scmp.ne.s32.totalorder %s204, %s207
    %p216 = scmp.eq.s32.totalorder %s21, 1
    %p217 = por %p215, %p216
    %p218 = scmp.ne.s32.totalorder %s207, %s208
    %p219 = scmp.eq.s32.totalorder %s21, 0
    %p220 = por %p218, %p219
    %p221 = scmp.ne.s32.totalorder %s207, %s208
    %p222 = scmp.eq.s32.totalorder %s22, 1
    %p223 = por %p221, %p222
    %p225 = scmp.ne.s32.totalorder %s208, %s224
    %p226 = scmp.eq.s32.totalorder %s22, 0
    %p227 = por %p225, %p226
    %p228 = scmp.le.s32.totalorder 1, %s16
    %p229 = scmp.lt.s32.totalorder %s16, 3
    %p230 = pnand %p228, %p229
    %p231 = pneg %p230
    // Predicated region
    $region9: #{fno2d_forward.15} parent=5 // pred_check
      _
    $region10: #{fno2d_forward.15} parent=5 // pred_check_branch
      %233 = sbr.rel (%p230) target = $region12
    $region11: #{fno2d_forward.15} parent=5 // pred_region
      %s234 = ssub.s32 %s16, 1
      // Predicated region
      $region13: #{fno2d_forward.15} parent=11 // pred_check
        %p235 = pneg %p89
      $region14: #{fno2d_forward.15} parent=11 // pred_check_branch
        %237 = sbr.rel (%p235) target = $region16
      $region15: #{fno2d_forward.15} parent=11 // pred_region
        _
      $region16: #{fno2d_forward.15} parent=11 // pred_fallthru
        _
      // Predicated region
      $region17: #{fno2d_forward.15} parent=11 // pred_check
        %p238 = pneg %p110
      $region18: #{fno2d_forward.15} parent=11 // pred_check_branch
        %240 = sbr.rel (%p238) target = $region20
      $region19: #{fno2d_forward.15} parent=11 // pred_region
        _
      $region20: #{fno2d_forward.15} parent=11 // pred_fallthru
        _
      // Predicated region
      $region21: #{fno2d_forward.15} parent=11 // pred_check
        %p241 = pneg %p131
      $region22: #{fno2d_forward.15} parent=11 // pred_check_branch
        %243 = sbr.rel (%p241) target = $region24
      $region23: #{fno2d_forward.15} parent=11 // pred_region
        _
      $region24: #{fno2d_forward.15} parent=11 // pred_fallthru
        _
      // Predicated region
      $region25: #{fno2d_forward.15} parent=11 // pred_check
        %p244 = pneg %p152
      $region26: #{fno2d_forward.15} parent=11 // pred_check_branch
        %246 = sbr.rel (%p244) target = $region28
      $region27: #{fno2d_forward.15} parent=11 // pred_region
        _
      $region28: #{fno2d_forward.15} parent=11 // pred_fallthru
        _
      // Predicated region
      $region29: #{fno2d_forward.15} parent=11 // pred_check
        %p247 = pneg %p173
      $region30: #{fno2d_forward.15} parent=11 // pred_check_branch
        %249 = sbr.rel (%p247) target = $region32
      $region31: #{fno2d_forward.15} parent=11 // pred_region
        _
      $region32: #{fno2d_forward.15} parent=11 // pred_fallthru
        _
      // Predicated region
      $region33: #{fno2d_forward.15} parent=11 // pred_check
        %p250 = pneg %p194
      $region34: #{fno2d_forward.15} parent=11 // pred_check_branch
        %252 = sbr.rel (%p250) target = $region36
      $region35: #{fno2d_forward.15} parent=11 // pred_region
        _
      $region36: #{fno2d_forward.15} parent=11 // pred_fallthru
        _
    $region12: #{fno2d_forward.15} parent=5 // pred_fallthru
      _
    %p253 = scmp.lt.s32.totalorder %s16, 2
    // Predicated region
    $region37: #{fno2d_forward.15} parent=5 // pred_check
      %p254 = pneg %p253
    $region38: #{fno2d_forward.15} parent=5 // pred_check_branch
      %256 = sbr.rel (%p254) target = $region40
    $region39: #{fno2d_forward.15} parent=5 // pred_region
      // Predicated region
      $region41: #{fno2d_forward.15} parent=39 // pred_check
        %p257 = pneg %p36
      $region42: #{fno2d_forward.15} parent=39 // pred_check_branch
        %259 = sbr.rel (%p257) target = $region44
      $region43: #{fno2d_forward.15} parent=39 // pred_region
        %s260 = smul.u32 32, %s16
        %p261 = scmp.lt.s32.totalorder %s260, 63
        %s262 = scalar_select %p261, %s260, 63
        %s263 = smul.addr %s262, 8
        %s264 = scalar_lea.vmem %s0, %s263
        %s265 = smul.u32 32, %s16
      $region44: #{fno2d_forward.15} parent=39 // pred_fallthru
        _
      // Predicated region
      $region45: #{fno2d_forward.15} parent=39 // pred_check
        %p266 = pneg %p62
      $region46: #{fno2d_forward.15} parent=39 // pred_check_branch
        %268 = sbr.rel (%p266) target = $region48
      $region47: #{fno2d_forward.15} parent=39 // pred_region
        %s269 = smul.u32 32, %s16
        %p270 = scmp.lt.s32.totalorder %s269, 63
        %s271 = scalar_select %p270, %s269, 63
        %s272 = smul.addr %s271, 8
        %s273 = scalar_lea.vmem %s1, %s272
        %s274 = smul.u32 32, %s16
      $region48: #{fno2d_forward.15} parent=39 // pred_fallthru
        _
    $region40: #{fno2d_forward.15} parent=5 // pred_fallthru
      _
    %p275 = scmp.le.s32.totalorder 1, %s16
    %p276 = scmp.lt.s32.totalorder %s16, 3
    %p277 = pnand %p275, %p276
    %p278 = pneg %p277
    // Predicated region
    $region49: #{fno2d_forward.15} parent=5 // pred_check
      _
    $region50: #{fno2d_forward.15} parent=5 // pred_check_branch
      %280 = sbr.rel (%p277) target = $region52
    $region51: #{fno2d_forward.15} parent=5 // pred_region
      %s281 = ssub.s32 %s16, 1
      %s282 = smul.u32 32, %s21
      %p283 = scmp.lt.s32.totalorder %s282, 63
      %s284 = scalar_select %p283, %s282, 63
      %s285 = smul.addr %s284, 8
      %s286 = scalar_lea.vmem %s0, %s285
      %p287 = pneg %p42
      %p288 = pneg %p39
      %s289 = smul.u32 32, %s21
      %p290 = scmp.lt.s32.totalorder %s289, 63
      %s291 = scalar_select %p290, %s289, 63
      %s292 = smul.addr %s291, 8
      %s293 = scalar_lea.vmem %s1, %s292
      %p294 = pneg %p68
      %p295 = pneg %p65
      %p296 = pneg %p89
      %p297 = pneg %p86
      %p298 = pneg %p110
      %p299 = pneg %p107
      %p300 = pneg %p131
      %p301 = pneg %p128
      %p302 = pneg %p152
      %p303 = pneg %p149
      %p304 = pneg %p173
      %p305 = pneg %p170
      %p306 = pneg %p194
      %p307 = pneg %p191
      %p308 = pneg %p220
      %p309 = pneg %p217
      %s310 = smul.u32 32, %s21
      %p311 = scmp.lt.s32.totalorder %s310, 63
      %s312 = scalar_select %p311, %s310, 63
      %s313 = smul.addr %s312, 8
      %s314 = scalar_lea.vmem %s8, %s313
      %s315 = smul.u32 32, %s21
      %p316 = scmp.lt.s32.totalorder %s315, 63
      %s317 = scalar_select %p316, %s315, 63
      %s318 = smul.addr %s317, 8
      %s319 = scalar_lea.vmem %s0, %s318
      %s320 = smul.u32 32, %s21
      %s321 = smul.u32 32, %s21
      %p322 = scmp.lt.s32.totalorder %s321, 63
      %s323 = scalar_select %p322, %s321, 63
      %s324 = smul.addr %s323, 8
      %s325 = scalar_lea.vmem %s1, %s324
      %s326 = smul.u32 32, %s21
      %s327 = smul.u32 32, %s21
      %p328 = scmp.lt.s32.totalorder %s327, 63
      %s329 = scalar_select %p328, %s327, 63
      %s330 = smul.addr %s329, 8
      %s331 = scalar_lea.vmem %s8, %s330
      %s332 = smul.u32 32, %s21
      %v333 = vld [vmem:[%s319] sm:$0xff]
      %v334 = vld [vmem:[%s319 + $0x8] sm:$0xff]
      %v335 = vld [vmem:[%s319 + $0x10] sm:$0xff]
      %v336 = vld [vmem:[%s319 + $0x18] sm:$0xff]
      %v337 = vld [vmem:[%s319 + $0x20] sm:$0xff]
      %v338 = vld [vmem:[%s319 + $0x28] sm:$0xff]
      %v339 = vld [vmem:[%s319 + $0x30] sm:$0xff]
      %v340 = vld [vmem:[%s319 + $0x38] sm:$0xff]
      %v341 = vld [vmem:[%s319 + $0x40] sm:$0xff]
      %v342 = vld [vmem:[%s319 + $0x48] sm:$0xff]
      %v343 = vld [vmem:[%s319 + $0x50] sm:$0xff]
      %v344 = vld [vmem:[%s319 + $0x58] sm:$0xff]
      %v345 = vld [vmem:[%s319 + $0x60] sm:$0xff]
      %v346 = vld [vmem:[%s319 + $0x68] sm:$0xff]
      %v347 = vld [vmem:[%s319 + $0x70] sm:$0xff]
      %v348 = vld [vmem:[%s319 + $0x78] sm:$0xff]
      %v349 = vld [vmem:[%s319 + $0x80] sm:$0xff]
      %v350 = vld [vmem:[%s319 + $0x88] sm:$0xff]
      %v351 = vld [vmem:[%s319 + $0x90] sm:$0xff]
      %v352 = vld [vmem:[%s319 + $0x98] sm:$0xff]
      %v353 = vld [vmem:[%s319 + $0xa0] sm:$0xff]
      %v354 = vld [vmem:[%s319 + $0xa8] sm:$0xff]
      %v355 = vld [vmem:[%s319 + $0xb0] sm:$0xff]
      %v356 = vld [vmem:[%s319 + $0xb8] sm:$0xff]
      %v357 = vld [vmem:[%s319 + $0xc0] sm:$0xff]
      %v358 = vld [vmem:[%s319 + $0xc8] sm:$0xff]
      %v359 = vld [vmem:[%s319 + $0xd0] sm:$0xff]
      %v360 = vld [vmem:[%s319 + $0xd8] sm:$0xff]
      %v361 = vld [vmem:[%s319 + $0xe0] sm:$0xff]
      %v362 = vld [vmem:[%s319 + $0xe8] sm:$0xff]
      %v363 = vld [vmem:[%s319 + $0xf0] sm:$0xff]
      %v364 = vld [vmem:[%s319 + $0xf8] sm:$0xff]
      %v365 = vld [vmem:[%s2] sm:$0xff]
      %v366 = vld [vmem:[%s2 + $0x8] sm:$0xff]
      %v367 = vld [vmem:[%s2 + $0x10] sm:$0xff]
      %v368 = vld [vmem:[%s2 + $0x18] sm:$0xff]
      %v369 = vld [vmem:[%s3] sm:$0x1]
      %v371 = vlaneseq
      %v372 = vshrl.u32 %v371, 7
      %v373 = vsub.s32 0, %v372
      %v374 = vrot.slane %v369, %v373
      %vm376 = vcmask 261120
      %v378 = vsel %vm376, %v333, 0
      %v381 = vsel %vm376, %v334, 0
      %v384 = vsel %vm376, %v335, 0
      %v387 = vsel %vm376, %v336, 0
      %v390 = vsel %vm376, %v337, 0
      %v393 = vsel %vm376, %v338, 0
      %v396 = vsel %vm376, %v339, 0
      %v399 = vsel %vm376, %v340, 0
      %v402 = vsel %vm376, %v341, 0
      %v405 = vsel %vm376, %v342, 0
      %v408 = vsel %vm376, %v343, 0
      %v411 = vsel %vm376, %v344, 0
      %v414 = vsel %vm376, %v345, 0
      %v417 = vsel %vm376, %v346, 0
      %v420 = vsel %vm376, %v347, 0
      %v423 = vsel %vm376, %v348, 0
      %v426 = vsel %vm376, %v349, 0
      %v429 = vsel %vm376, %v350, 0
      %v432 = vsel %vm376, %v351, 0
      %v435 = vsel %vm376, %v352, 0
      %v438 = vsel %vm376, %v353, 0
      %v441 = vsel %vm376, %v354, 0
      %v444 = vsel %vm376, %v355, 0
      %v447 = vsel %vm376, %v356, 0
      %v450 = vsel %vm376, %v357, 0
      %v453 = vsel %vm376, %v358, 0
      %v456 = vsel %vm376, %v359, 0
      %v459 = vsel %vm376, %v360, 0
      %v462 = vsel %vm376, %v361, 0
      %v465 = vsel %vm376, %v362, 0
      %v468 = vsel %vm376, %v363, 0
      %v471 = vsel %vm376, %v364, 0
      %473 = vmatprep.subr.mxu0 0.0
      %474 = vmatpush1.msra.mxu0 %v365
      %475 = vmatprep.subr.mxu0 0.0
      %476 = vmatpush1.msra.mxu0 %v366
      %477 = vmatprep.subr.mxu0 0.0
      %478 = vmatpush1.msra.mxu0 %v367
      %479 = vmatprep.subr.mxu0 0.0
      %480 = vmatpush1.msra.mxu0 %v368
      %481 = vmatprep.subr.mxu0 0.0
      %482 = vmatpush1.msra.mxu0 0.0
      %483 = vmatprep.subr.mxu0 0.0
      %484 = vmatpush1.msra.mxu0 0.0
      %485 = vmatprep.subr.mxu0 0.0
      %486 = vmatpush1.msra.mxu0 0.0
      %487 = vmatprep.subr.mxu0 0.0
      %488 = vmatpush1.msra.mxu0 0.0
      %489 = vmatprep.subr.mxu0 0.0
      %490 = vmatpush1.msra.mxu0 0.0
      %491 = vmatprep.subr.mxu0 0.0
      %492 = vmatpush1.msra.mxu0 0.0
      %493 = vmatprep.subr.mxu0 0.0
      %494 = vmatpush1.msra.mxu0 0.0
      %495 = vmatprep.subr.mxu0 0.0
      %496 = vmatpush1.msra.mxu0 0.0
      %497 = vmatprep.subr.mxu0 0.0
      %498 = vmatpush1.msra.mxu0 0.0
      %499 = vmatprep.subr.mxu0 0.0
      %500 = vmatpush1.msra.mxu0 0.0
      %501 = vmatprep.subr.mxu0 0.0
      %502 = vmatpush1.msra.mxu0 0.0
      %503 = vmatprep.subr.mxu0 0.0
      %504 = vmatpush1.msra.mxu0 0.0
      %505 = vmatprep.subr.mxu0 0.0
      %506 = vmatpush1.msra.mxu0 0.0
      %507 = vmatprep.subr.mxu0 0.0
      %508 = vmatpush1.msra.mxu0 0.0
      %509 = vmatprep.subr.mxu0 0.0
      %510 = vmatpush1.msra.mxu0 0.0
      %511 = vmatprep.subr.mxu0 0.0
      %512 = vmatpush1.msra.mxu0 0.0
      %513 = vmatprep.subr.mxu0 0.0
      %514 = vmatpush1.msra.mxu0 0.0
      %515 = vmatprep.subr.mxu0 0.0
      %516 = vmatpush1.msra.mxu0 0.0
      %517 = vmatprep.subr.mxu0 0.0
      %518 = vmatpush1.msra.mxu0 0.0
      %519 = vmatprep.subr.mxu0 0.0
      %520 = vmatpush1.msra.mxu0 0.0
      %521 = vmatprep.subr.mxu0 0.0
      %522 = vmatpush1.msra.mxu0 0.0
      %523 = vmatprep.subr.mxu0 0.0
      %524 = vmatpush1.msra.mxu0 0.0
      %525 = vmatprep.subr.mxu0 0.0
      %526 = vmatpush1.msra.mxu0 0.0
      %527 = vmatprep.subr.mxu0 0.0
      %528 = vmatpush1.msra.mxu0 0.0
      %529 = vmatprep.subr.mxu0 0.0
      %530 = vmatpush1.msra.mxu0 0.0
      %531 = vmatprep.subr.mxu0 0.0
      %532 = vmatpush1.msra.mxu0 0.0
      %533 = vmatprep.subr.mxu0 0.0
      %534 = vmatpush1.msra.mxu0 0.0
      %535 = vmatprep.subr.mxu0 0.0
      %536 = vmatpush1.msra.mxu0 0.0
      %537 = vmatprep.mubr.f32.mxu0 0.0
      %538 = vmatmul.mubr.f32.gmra.mrb[0].mxu0 %v378
      %v539 = vpop.f32.mrb[0].mxu0
      %v540 = vadd.f32 %v374, %v539
      %v541 = vpop.f32.mrb[0].mxu0
      %542 = vmatprep.mubr.f32.mxu0 0.0
      %543 = vmatmul.mubr.f32.gmra.mrb[0].mxu0 %v381
      %v544 = vpop.f32.mrb[0].mxu0
      %v545 = vadd.f32 %v374, %v544
      %v546 = vpop.f32.mrb[0].mxu0
      %547 = vmatprep.mubr.f32.mxu0 0.0
      %548 = vmatmul.mubr.f32.gmra.mrb[0].mxu0 %v384
      %v549 = vpop.f32.mrb[0].mxu0
      %v550 = vadd.f32 %v374, %v549
      %v551 = vpop.f32.mrb[0].mxu0
      %552 = vmatprep.mubr.f32.mxu0 0.0
      %553 = vmatmul.mubr.f32.gmra.mrb[0].mxu0 %v387
      %v554 = vpop.f32.mrb[0].mxu0
      %v555 = vadd.f32 %v374, %v554
      %v556 = vpop.f32.mrb[0].mxu0
      %557 = vmatprep.mubr.f32.mxu0 0.0
      %558 = vmatmul.mubr.f32.gmra.mrb[0].mxu0 %v390
      %v559 = vpop.f32.mrb[0].mxu0
      %v560 = vadd.f32 %v374, %v559
      %v561 = vpop.f32.mrb[0].mxu0
      %562 = vmatprep.mubr.f32.mxu0 0.0
      %563 = vmatmul.mubr.f32.gmra.mrb[0].mxu0 %v393
      %v564 = vpop.f32.mrb[0].mxu0
      %v565 = vadd.f32 %v374, %v564
      %v566 = vpop.f32.mrb[0].mxu0
      %567 = vmatprep.mubr.f32.mxu0 0.0
      %568 = vmatmul.mubr.f32.gmra.mrb[0].mxu0 %v396
      %v569 = vpop.f32.mrb[0].mxu0
      %v570 = vadd.f32 %v374, %v569
      %v571 = vpop.f32.mrb[0].mxu0
      %572 = vmatprep.mubr.f32.mxu0 0.0
      %573 = vmatmul.mubr.f32.gmra.mrb[0].mxu0 %v399
      %v574 = vpop.f32.mrb[0].mxu0
      %v575 = vadd.f32 %v374, %v574
      %v576 = vpop.f32.mrb[0].mxu0
      %577 = vmatprep.mubr.f32.mxu0 0.0
      %578 = vmatmul.mubr.f32.gmra.mrb[0].mxu0 %v402
      %v579 = vpop.f32.mrb[0].mxu0
      %v580 = vadd.f32 %v374, %v579
      %v581 = vpop.f32.mrb[0].mxu0
      %582 = vmatprep.mubr.f32.mxu0 0.0
      %583 = vmatmul.mubr.f32.gmra.mrb[0].mxu0 %v405
      %v584 = vpop.f32.mrb[0].mxu0
      %v585 = vadd.f32 %v374, %v584
      %v586 = vpop.f32.mrb[0].mxu0
      %587 = vmatprep.mubr.f32.mxu0 0.0
      %588 = vmatmul.mubr.f32.gmra.mrb[0].mxu0 %v408
      %v589 = vpop.f32.mrb[0].mxu0
      %v590 = vadd.f32 %v374, %v589
      %v591 = vpop.f32.mrb[0].mxu0
      %592 = vmatprep.mubr.f32.mxu0 0.0
      %593 = vmatmul.mubr.f32.gmra.mrb[0].mxu0 %v411
      %v594 = vpop.f32.mrb[0].mxu0
      %v595 = vadd.f32 %v374, %v594
      %v596 = vpop.f32.mrb[0].mxu0
      %597 = vmatprep.mubr.f32.mxu0 0.0
      %598 = vmatmul.mubr.f32.gmra.mrb[0].mxu0 %v414
      %v599 = vpop.f32.mrb[0].mxu0
      %v600 = vadd.f32 %v374, %v599
      %v601 = vpop.f32.mrb[0].mxu0
      %602 = vmatprep.mubr.f32.mxu0 0.0
      %603 = vmatmul.mubr.f32.gmra.mrb[0].mxu0 %v417
      %v604 = vpop.f32.mrb[0].mxu0
      %v605 = vadd.f32 %v374, %v604
      %v606 = vpop.f32.mrb[0].mxu0
      %607 = vmatprep.mubr.f32.mxu0 0.0
      %608 = vmatmul.mubr.f32.gmra.mrb[0].mxu0 %v420
      %v609 = vpop.f32.mrb[0].mxu0
      %v610 = vadd.f32 %v374, %v609
      %v611 = vpop.f32.mrb[0].mxu0
      %612 = vmatprep.mubr.f32.mxu0 0.0
      %613 = vmatmul.mubr.f32.gmra.mrb[0].mxu0 %v423
      %v614 = vpop.f32.mrb[0].mxu0
      %v615 = vadd.f32 %v374, %v614
      %v616 = vpop.f32.mrb[0].mxu0
      %617 = vmatprep.mubr.f32.mxu0 0.0
      %618 = vmatmul.mubr.f32.gmra.mrb[0].mxu0 %v426
      %v619 = vpop.f32.mrb[0].mxu0
      %v620 = vadd.f32 %v374, %v619
      %v621 = vpop.f32.mrb[0].mxu0
      %622 = vmatprep.mubr.f32.mxu0 0.0
      %623 = vmatmul.mubr.f32.gmra.mrb[0].mxu0 %v429
      %v624 = vpop.f32.mrb[0].mxu0
      %v625 = vadd.f32 %v374, %v624
      %v626 = vpop.f32.mrb[0].mxu0
      %627 = vmatprep.mubr.f32.mxu0 0.0
      %628 = vmatmul.mubr.f32.gmra.mrb[0].mxu0 %v432
      %v629 = vpop.f32.mrb[0].mxu0
      %v630 = vadd.f32 %v374, %v629
      %v631 = vpop.f32.mrb[0].mxu0
      %632 = vmatprep.mubr.f32.mxu0 0.0
      %633 = vmatmul.mubr.f32.gmra.mrb[0].mxu0 %v435
      %v634 = vpop.f32.mrb[0].mxu0
      %v635 = vadd.f32 %v374, %v634
      %v636 = vpop.f32.mrb[0].mxu0
      %637 = vmatprep.mubr.f32.mxu0 0.0
      %638 = vmatmul.mubr.f32.gmra.mrb[0].mxu0 %v438
      %v639 = vpop.f32.mrb[0].mxu0
      %v640 = vadd.f32 %v374, %v639
      %v641 = vpop.f32.mrb[0].mxu0
      %642 = vmatprep.mubr.f32.mxu0 0.0
      %643 = vmatmul.mubr.f32.gmra.mrb[0].mxu0 %v441
      %v644 = vpop.f32.mrb[0].mxu0
      %v645 = vadd.f32 %v374, %v644
      %v646 = vpop.f32.mrb[0].mxu0
      %647 = vmatprep.mubr.f32.mxu0 0.0
      %648 = vmatmul.mubr.f32.gmra.mrb[0].mxu0 %v444
      %v649 = vpop.f32.mrb[0].mxu0
      %v650 = vadd.f32 %v374, %v649
      %v651 = vpop.f32.mrb[0].mxu0
      %652 = vmatprep.mubr.f32.mxu0 0.0
      %653 = vmatmul.mubr.f32.gmra.mrb[0].mxu0 %v447
      %v654 = vpop.f32.mrb[0].mxu0
      %v655 = vadd.f32 %v374, %v654
      %v656 = vpop.f32.mrb[0].mxu0
      %657 = vmatprep.mubr.f32.mxu0 0.0
      %658 = vmatmul.mubr.f32.gmra.mrb[0].mxu0 %v450
      %v659 = vpop.f32.mrb[0].mxu0
      %v660 = vadd.f32 %v374, %v659
      %v661 = vpop.f32.mrb[0].mxu0
      %662 = vmatprep.mubr.f32.mxu0 0.0
      %663 = vmatmul.mubr.f32.gmra.mrb[0].mxu0 %v453
      %v664 = vpop.f32.mrb[0].mxu0
      %v665 = vadd.f32 %v374, %v664
      %v666 = vpop.f32.mrb[0].mxu0
      %667 = vmatprep.mubr.f32.mxu0 0.0
      %668 = vmatmul.mubr.f32.gmra.mrb[0].mxu0 %v456
      %v669 = vpop.f32.mrb[0].mxu0
      %v670 = vadd.f32 %v374, %v669
      %v671 = vpop.f32.mrb[0].mxu0
      %672 = vmatprep.mubr.f32.mxu0 0.0
      %673 = vmatmul.mubr.f32.gmra.mrb[0].mxu0 %v459
      %v674 = vpop.f32.mrb[0].mxu0
      %v675 = vadd.f32 %v374, %v674
      %v676 = vpop.f32.mrb[0].mxu0
      %677 = vmatprep.mubr.f32.mxu0 0.0
      %678 = vmatmul.mubr.f32.gmra.mrb[0].mxu0 %v462
      %v679 = vpop.f32.mrb[0].mxu0
      %v680 = vadd.f32 %v374, %v679
      %v681 = vpop.f32.mrb[0].mxu0
      %682 = vmatprep.mubr.f32.mxu0 0.0
      %683 = vmatmul.mubr.f32.gmra.mrb[0].mxu0 %v465
      %v684 = vpop.f32.mrb[0].mxu0
      %v685 = vadd.f32 %v374, %v684
      %v686 = vpop.f32.mrb[0].mxu0
      %687 = vmatprep.mubr.f32.mxu0 0.0
      %688 = vmatmul.mubr.f32.gmra.mrb[0].mxu0 %v468
      %v689 = vpop.f32.mrb[0].mxu0
      %v690 = vadd.f32 %v374, %v689
      %v691 = vpop.f32.mrb[0].mxu0
      %692 = vmatprep.mubr.f32.mxu0 0.0
      %693 = vmatmul.mubr.f32.gmra.mrb[0].mxu0 %v471
      %v694 = vpop.f32.mrb[0].mxu0
      %v695 = vadd.f32 %v374, %v694
      %v696 = vpop.f32.mrb[0].mxu0
      %697 = vdwg.mxu0
      %v698 = vld [vmem:[%s325] sm:$0xff]
      %v699 = vld [vmem:[%s325 + $0x8] sm:$0xff]
      %v700 = vld [vmem:[%s325 + $0x10] sm:$0xff]
      %v701 = vld [vmem:[%s325 + $0x18] sm:$0xff]
      %v702 = vld [vmem:[%s325 + $0x20] sm:$0xff]
      %v703 = vld [vmem:[%s325 + $0x28] sm:$0xff]
      %v704 = vld [vmem:[%s325 + $0x30] sm:$0xff]
      %v705 = vld [vmem:[%s325 + $0x38] sm:$0xff]
      %v706 = vld [vmem:[%s325 + $0x40] sm:$0xff]
      %v707 = vld [vmem:[%s325 + $0x48] sm:$0xff]
      %v708 = vld [vmem:[%s325 + $0x50] sm:$0xff]
      %v709 = vld [vmem:[%s325 + $0x58] sm:$0xff]
      %v710 = vld [vmem:[%s325 + $0x60] sm:$0xff]
      %v711 = vld [vmem:[%s325 + $0x68] sm:$0xff]
      %v712 = vld [vmem:[%s325 + $0x70] sm:$0xff]
      %v713 = vld [vmem:[%s325 + $0x78] sm:$0xff]
      %v714 = vld [vmem:[%s325 + $0x80] sm:$0xff]
      %v715 = vld [vmem:[%s325 + $0x88] sm:$0xff]
      %v716 = vld [vmem:[%s325 + $0x90] sm:$0xff]
      %v717 = vld [vmem:[%s325 + $0x98] sm:$0xff]
      %v718 = vld [vmem:[%s325 + $0xa0] sm:$0xff]
      %v719 = vld [vmem:[%s325 + $0xa8] sm:$0xff]
      %v720 = vld [vmem:[%s325 + $0xb0] sm:$0xff]
      %v721 = vld [vmem:[%s325 + $0xb8] sm:$0xff]
      %v722 = vld [vmem:[%s325 + $0xc0] sm:$0xff]
      %v723 = vld [vmem:[%s325 + $0xc8] sm:$0xff]
      %v724 = vld [vmem:[%s325 + $0xd0] sm:$0xff]
      %v725 = vld [vmem:[%s325 + $0xd8] sm:$0xff]
      %v726 = vld [vmem:[%s325 + $0xe0] sm:$0xff]
      %v727 = vld [vmem:[%s325 + $0xe8] sm:$0xff]
      %v728 = vld [vmem:[%s325 + $0xf0] sm:$0xff]
      %v729 = vld [vmem:[%s325 + $0xf8] sm:$0xff]
      %v730 = vadd.f32 %v540, %v698
      %v731 = vadd.f32 %v545, %v699
      %v732 = vadd.f32 %v550, %v700
      %v733 = vadd.f32 %v555, %v701
      %v734 = vadd.f32 %v560, %v702
      %v735 = vadd.f32 %v565, %v703
      %v736 = vadd.f32 %v570, %v704
      %v737 = vadd.f32 %v575, %v705
      %v738 = vadd.f32 %v580, %v706
      %v739 = vadd.f32 %v585, %v707
      %v740 = vadd.f32 %v590, %v708
      %v741 = vadd.f32 %v595, %v709
      %v742 = vadd.f32 %v600, %v710
      %v743 = vadd.f32 %v605, %v711
      %v744 = vadd.f32 %v610, %v712
      %v745 = vadd.f32 %v615, %v713
      %v746 = vadd.f32 %v620, %v714
      %v747 = vadd.f32 %v625, %v715
      %v748 = vadd.f32 %v630, %v716
      %v749 = vadd.f32 %v635, %v717
      %v750 = vadd.f32 %v640, %v718
      %v751 = vadd.f32 %v645, %v719
      %v752 = vadd.f32 %v650, %v720
      %v753 = vadd.f32 %v655, %v721
      %v754 = vadd.f32 %v660, %v722
      %v755 = vadd.f32 %v665, %v723
      %v756 = vadd.f32 %v670, %v724
      %v757 = vadd.f32 %v675, %v725
      %v758 = vadd.f32 %v680, %v726
      %v759 = vadd.f32 %v685, %v727
      %v760 = vadd.f32 %v690, %v728
      %v761 = vadd.f32 %v695, %v729
      %v762 = vmax.f32 %v730, 0.0
      %v763 = vmax.f32 %v731, 0.0
      %v764 = vmax.f32 %v732, 0.0
      %v765 = vmax.f32 %v733, 0.0
      %v766 = vmax.f32 %v734, 0.0
      %v767 = vmax.f32 %v735, 0.0
      %v768 = vmax.f32 %v736, 0.0
      %v769 = vmax.f32 %v737, 0.0
      %v770 = vmax.f32 %v738, 0.0
      %v771 = vmax.f32 %v739, 0.0
      %v772 = vmax.f32 %v740, 0.0
      %v773 = vmax.f32 %v741, 0.0
      %v774 = vmax.f32 %v742, 0.0
      %v775 = vmax.f32 %v743, 0.0
      %v776 = vmax.f32 %v744, 0.0
      %v777 = vmax.f32 %v745, 0.0
      %v778 = vmax.f32 %v746, 0.0
      %v779 = vmax.f32 %v747, 0.0
      %v780 = vmax.f32 %v748, 0.0
      %v781 = vmax.f32 %v749, 0.0
      %v782 = vmax.f32 %v750, 0.0
      %v783 = vmax.f32 %v751, 0.0
      %v784 = vmax.f32 %v752, 0.0
      %v785 = vmax.f32 %v753, 0.0
      %v786 = vmax.f32 %v754, 0.0
      %v787 = vmax.f32 %v755, 0.0
      %v788 = vmax.f32 %v756, 0.0
      %v789 = vmax.f32 %v757, 0.0
      %v790 = vmax.f32 %v758, 0.0
      %v791 = vmax.f32 %v759, 0.0
      %v792 = vmax.f32 %v760, 0.0
      %v793 = vmax.f32 %v761, 0.0
      %v794 = vld [vmem:[%s4] sm:$0xff]
      %v795 = vld [vmem:[%s4 + $0x8] sm:$0xff]
      %v796 = vld [vmem:[%s4 + $0x10] sm:$0xff]
      %v797 = vld [vmem:[%s4 + $0x18] sm:$0xff]
      %v798 = vld [vmem:[%s5] sm:$0x1]
      %v800 = vlaneseq
      %v801 = vshrl.u32 %v800, 7
      %v802 = vsub.s32 0, %v801
      %v803 = vrot.slane %v798, %v802
      %v806 = vsel %vm376, %v762, 0
      %v809 = vsel %vm376, %v763, 0
      %v812 = vsel %vm376, %v764, 0
      %v815 = vsel %vm376, %v765, 0
      %v818 = vsel %vm376, %v766, 0
      %v821 = vsel %vm376, %v767, 0
      %v824 = vsel %vm376, %v768, 0
      %v827 = vsel %vm376, %v769, 0
      %v830 = vsel %vm376, %v770, 0
      %v833 = vsel %vm376, %v771, 0
      %v836 = vsel %vm376, %v772, 0
      %v839 = vsel %vm376, %v773, 0
      %v842 = vsel %vm376, %v774, 0
      %v845 = vsel %vm376, %v775, 0
      %v848 = vsel %vm376, %v776, 0
      %v851 = vsel %vm376, %v777, 0
      %v854 = vsel %vm376, %v778, 0
      %v857 = vsel %vm376, %v779, 0
      %v860 = vsel %vm376, %v780, 0
      %v863 = vsel %vm376, %v781, 0
      %v866 = vsel %vm376, %v782, 0
      %v869 = vsel %vm376, %v783, 0
      %v872 = vsel %vm376, %v784, 0
      %v875 = vsel %vm376, %v785, 0
      %v878 = vsel %vm376, %v786, 0
      %v881 = vsel %vm376, %v787, 0
      %v884 = vsel %vm376, %v788, 0
      %v887 = vsel %vm376, %v789, 0
      %v890 = vsel %vm376, %v790, 0
      %v893 = vsel %vm376, %v791, 0
      %v896 = vsel %vm376, %v792, 0
      %v899 = vsel %vm376, %v793, 0
      %901 = vmatprep.subr.mxu0 0.0
      %902 = vmatpush1.msra.mxu0 %v794
      %903 = vmatprep.subr.mxu0 0.0
      %904 = vmatpush1.msra.mxu0 %v795
      %905 = vmatprep.subr.mxu0 0.0
      %906 = vmatpush1.msra.mxu0 %v796
      %907 = vmatprep.subr.mxu0 0.0
      %908 = vmatpush1.msra.mxu0 %v797
      %909 = vmatprep.subr.mxu0 0.0
      %910 = vmatpush1.msra.mxu0 0.0
      %911 = vmatprep.subr.mxu0 0.0
      %912 = vmatpush1.msra.mxu0 0.0
      %913 = vmatprep.subr.mxu0 0.0
      %914 = vmatpush1.msra.mxu0 0.0
      %915 = vmatprep.subr.mxu0 0.0
      %916 = vmatpush1.msra.mxu0 0.0
      %917 = vmatprep.subr.mxu0 0.0
      %918 = vmatpush1.msra.mxu0 0.0
      %919 = vmatprep.subr.mxu0 0.0
      %920 = vmatpush1.msra.mxu0 0.0
      %921 = vmatprep.subr.mxu0 0.0
      %922 = vmatpush1.msra.mxu0 0.0
      %923 = vmatprep.subr.mxu0 0.0
      %924 = vmatpush1.msra.mxu0 0.0
      %925 = vmatprep.subr.mxu0 0.0
      %926 = vmatpush1.msra.mxu0 0.0
      %927 = vmatprep.subr.mxu0 0.0
      %928 = vmatpush1.msra.mxu0 0.0
      %929 = vmatprep.subr.mxu0 0.0
      %930 = vmatpush1.msra.mxu0 0.0
      %931 = vmatprep.subr.mxu0 0.0
      %932 = vmatpush1.msra.mxu0 0.0
      %933 = vmatprep.subr.mxu0 0.0
      %934 = vmatpush1.msra.mxu0 0.0
      %935 = vmatprep.subr.mxu0 0.0
      %936 = vmatpush1.msra.mxu0 0.0
      %937 = vmatprep.subr.mxu0 0.0
      %938 = vmatpush1.msra.mxu0 0.0
      %939 = vmatprep.subr.mxu0 0.0
      %940 = vmatpush1.msra.mxu0 0.0
      %941 = vmatprep.subr.mxu0 0.0
      %942 = vmatpush1.msra.mxu0 0.0
      %943 = vmatprep.subr.mxu0 0.0
      %944 = vmatpush1.msra.mxu0 0.0
      %945 = vmatprep.subr.mxu0 0.0
      %946 = vmatpush1.msra.mxu0 0.0
      %947 = vmatprep.subr.mxu0 0.0
      %948 = vmatpush1.msra.mxu0 0.0
      %949 = vmatprep.subr.mxu0 0.0
      %950 = vmatpush1.msra.mxu0 0.0
      %951 = vmatprep.subr.mxu0 0.0
      %952 = vmatpush1.msra.mxu0 0.0
      %953 = vmatprep.subr.mxu0 0.0
      %954 = vmatpush1.msra.mxu0 0.0
      %955 = vmatprep.subr.mxu0 0.0
      %956 = vmatpush1.msra.mxu0 0.0
      %957 = vmatprep.subr.mxu0 0.0
      %958 = vmatpush1.msra.mxu0 0.0
      %959 = vmatprep.subr.mxu0 0.0
      %960 = vmatpush1.msra.mxu0 0.0
      %961 = vmatprep.subr.mxu0 0.0
      %962 = vmatpush1.msra.mxu0 0.0
      %963 = vmatprep.subr.mxu0 0.0
      %964 = vmatpush1.msra.mxu0 0.0
      %965 = vmatprep.mubr.f32.mxu0 0.0
      %966 = vmatmul.mubr.f32.gmra.mrb[0].mxu0 %v806
      %v967 = vpop.f32.mrb[0].mxu0
      %v968 = vadd.f32 %v803, %v967
      %v969 = vpop.f32.mrb[0].mxu0
      %970 = vmatprep.mubr.f32.mxu0 0.0
      %971 = vmatmul.mubr.f32.gmra.mrb[0].mxu0 %v809
      %v972 = vpop.f32.mrb[0].mxu0
      %v973 = vadd.f32 %v803, %v972
      %v974 = vpop.f32.mrb[0].mxu0
      %975 = vmatprep.mubr.f32.mxu0 0.0
      %976 = vmatmul.mubr.f32.gmra.mrb[0].mxu0 %v812
      %v977 = vpop.f32.mrb[0].mxu0
      %v978 = vadd.f32 %v803, %v977
      %v979 = vpop.f32.mrb[0].mxu0
      %980 = vmatprep.mubr.f32.mxu0 0.0
      %981 = vmatmul.mubr.f32.gmra.mrb[0].mxu0 %v815
      %v982 = vpop.f32.mrb[0].mxu0
      %v983 = vadd.f32 %v803, %v982
      %v984 = vpop.f32.mrb[0].mxu0
      %985 = vmatprep.mubr.f32.mxu0 0.0
      %986 = vmatmul.mubr.f32.gmra.mrb[0].mxu0 %v818
      %v987 = vpop.f32.mrb[0].mxu0
      %v988 = vadd.f32 %v803, %v987
      %v989 = vpop.f32.mrb[0].mxu0
      %990 = vmatprep.mubr.f32.mxu0 0.0
      %991 = vmatmul.mubr.f32.gmra.mrb[0].mxu0 %v821
      %v992 = vpop.f32.mrb[0].mxu0
      %v993 = vadd.f32 %v803, %v992
      %v994 = vpop.f32.mrb[0].mxu0
      %995 = vmatprep.mubr.f32.mxu0 0.0
      %996 = vmatmul.mubr.f32.gmra.mrb[0].mxu0 %v824
      %v997 = vpop.f32.mrb[0].mxu0
      %v998 = vadd.f32 %v803, %v997
      %v999 = vpop.f32.mrb[0].mxu0
      %1000 = vmatprep.mubr.f32.mxu0 0.0
      %1001 = vmatmul.mubr.f32.gmra.mrb[0].mxu0 %v827
      %v1002 = vpop.f32.mrb[0].mxu0
      %v1003 = vadd.f32 %v803, %v1002
      %v1004 = vpop.f32.mrb[0].mxu0
      %1005 = vmatprep.mubr.f32.mxu0 0.0
      %1006 = vmatmul.mubr.f32.gmra.mrb[0].mxu0 %v830
      %v1007 = vpop.f32.mrb[0].mxu0
      %v1008 = vadd.f32 %v803, %v1007
      %v1009 = vpop.f32.mrb[0].mxu0
      %1010 = vmatprep.mubr.f32.mxu0 0.0
      %1011 = vmatmul.mubr.f32.gmra.mrb[0].mxu0 %v833
      %v1012 = vpop.f32.mrb[0].mxu0
      %v1013 = vadd.f32 %v803, %v1012
      %v1014 = vpop.f32.mrb[0].mxu0
      %1015 = vmatprep.mubr.f32.mxu0 0.0
      %1016 = vmatmul.mubr.f32.gmra.mrb[0].mxu0 %v836
      %v1017 = vpop.f32.mrb[0].mxu0
      %v1018 = vadd.f32 %v803, %v1017
      %v1019 = vpop.f32.mrb[0].mxu0
      %1020 = vmatprep.mubr.f32.mxu0 0.0
      %1021 = vmatmul.mubr.f32.gmra.mrb[0].mxu0 %v839
      %v1022 = vpop.f32.mrb[0].mxu0
      %v1023 = vadd.f32 %v803, %v1022
      %v1024 = vpop.f32.mrb[0].mxu0
      %1025 = vmatprep.mubr.f32.mxu0 0.0
      %1026 = vmatmul.mubr.f32.gmra.mrb[0].mxu0 %v842
      %v1027 = vpop.f32.mrb[0].mxu0
      %v1028 = vadd.f32 %v803, %v1027
      %v1029 = vpop.f32.mrb[0].mxu0
      %1030 = vmatprep.mubr.f32.mxu0 0.0
      %1031 = vmatmul.mubr.f32.gmra.mrb[0].mxu0 %v845
      %v1032 = vpop.f32.mrb[0].mxu0
      %v1033 = vadd.f32 %v803, %v1032
      %v1034 = vpop.f32.mrb[0].mxu0
      %1035 = vmatprep.mubr.f32.mxu0 0.0
      %1036 = vmatmul.mubr.f32.gmra.mrb[0].mxu0 %v848
      %v1037 = vpop.f32.mrb[0].mxu0
      %v1038 = vadd.f32 %v803, %v1037
      %v1039 = vpop.f32.mrb[0].mxu0
      %1040 = vmatprep.mubr.f32.mxu0 0.0
      %1041 = vmatmul.mubr.f32.gmra.mrb[0].mxu0 %v851
      %v1042 = vpop.f32.mrb[0].mxu0
      %v1043 = vadd.f32 %v803, %v1042
      %v1044 = vpop.f32.mrb[0].mxu0
      %1045 = vmatprep.mubr.f32.mxu0 0.0
      %1046 = vmatmul.mubr.f32.gmra.mrb[0].mxu0 %v854
      %v1047 = vpop.f32.mrb[0].mxu0
      %v1048 = vadd.f32 %v803, %v1047
      %v1049 = vpop.f32.mrb[0].mxu0
      %1050 = vmatprep.mubr.f32.mxu0 0.0
      %1051 = vmatmul.mubr.f32.gmra.mrb[0].mxu0 %v857
      %v1052 = vpop.f32.mrb[0].mxu0
      %v1053 = vadd.f32 %v803, %v1052
      %v1054 = vpop.f32.mrb[0].mxu0
      %1055 = vmatprep.mubr.f32.mxu0 0.0
      %1056 = vmatmul.mubr.f32.gmra.mrb[0].mxu0 %v860
      %v1057 = vpop.f32.mrb[0].mxu0
      %v1058 = vadd.f32 %v803, %v1057
      %v1059 = vpop.f32.mrb[0].mxu0
      %1060 = vmatprep.mubr.f32.mxu0 0.0
      %1061 = vmatmul.mubr.f32.gmra.mrb[0].mxu0 %v863
      %v1062 = vpop.f32.mrb[0].mxu0
      %v1063 = vadd.f32 %v803, %v1062
      %v1064 = vpop.f32.mrb[0].mxu0
      %1065 = vmatprep.mubr.f32.mxu0 0.0
      %1066 = vmatmul.mubr.f32.gmra.mrb[0].mxu0 %v866
      %v1067 = vpop.f32.mrb[0].mxu0
      %v1068 = vadd.f32 %v803, %v1067
      %v1069 = vpop.f32.mrb[0].mxu0
      %1070 = vmatprep.mubr.f32.mxu0 0.0
      %1071 = vmatmul.mubr.f32.gmra.mrb[0].mxu0 %v869
      %v1072 = vpop.f32.mrb[0].mxu0
      %v1073 = vadd.f32 %v803, %v1072
      %v1074 = vpop.f32.mrb[0].mxu0
      %1075 = vmatprep.mubr.f32.mxu0 0.0
      %1076 = vmatmul.mubr.f32.gmra.mrb[0].mxu0 %v872
      %v1077 = vpop.f32.mrb[0].mxu0
      %v1078 = vadd.f32 %v803, %v1077
      %v1079 = vpop.f32.mrb[0].mxu0
      %1080 = vmatprep.mubr.f32.mxu0 0.0
      %1081 = vmatmul.mubr.f32.gmra.mrb[0].mxu0 %v875
      %v1082 = vpop.f32.mrb[0].mxu0
      %v1083 = vadd.f32 %v803, %v1082
      %v1084 = vpop.f32.mrb[0].mxu0
      %1085 = vmatprep.mubr.f32.mxu0 0.0
      %1086 = vmatmul.mubr.f32.gmra.mrb[0].mxu0 %v878
      %v1087 = vpop.f32.mrb[0].mxu0
      %v1088 = vadd.f32 %v803, %v1087
      %v1089 = vpop.f32.mrb[0].mxu0
      %1090 = vmatprep.mubr.f32.mxu0 0.0
      %1091 = vmatmul.mubr.f32.gmra.mrb[0].mxu0 %v881
      %v1092 = vpop.f32.mrb[0].mxu0
      %v1093 = vadd.f32 %v803, %v1092
      %v1094 = vpop.f32.mrb[0].mxu0
      %1095 = vmatprep.mubr.f32.mxu0 0.0
      %1096 = vmatmul.mubr.f32.gmra.mrb[0].mxu0 %v884
      %v1097 = vpop.f32.mrb[0].mxu0
      %v1098 = vadd.f32 %v803, %v1097
      %v1099 = vpop.f32.mrb[0].mxu0
      %1100 = vmatprep.mubr.f32.mxu0 0.0
      %1101 = vmatmul.mubr.f32.gmra.mrb[0].mxu0 %v887
      %v1102 = vpop.f32.mrb[0].mxu0
      %v1103 = vadd.f32 %v803, %v1102
      %v1104 = vpop.f32.mrb[0].mxu0
      %1105 = vmatprep.mubr.f32.mxu0 0.0
      %1106 = vmatmul.mubr.f32.gmra.mrb[0].mxu0 %v890
      %v1107 = vpop.f32.mrb[0].mxu0
      %v1108 = vadd.f32 %v803, %v1107
      %v1109 = vpop.f32.mrb[0].mxu0
      %1110 = vmatprep.mubr.f32.mxu0 0.0
      %1111 = vmatmul.mubr.f32.gmra.mrb[0].mxu0 %v893
      %v1112 = vpop.f32.mrb[0].mxu0
      %v1113 = vadd.f32 %v803, %v1112
      %v1114 = vpop.f32.mrb[0].mxu0
      %1115 = vmatprep.mubr.f32.mxu0 0.0
      %1116 = vmatmul.mubr.f32.gmra.mrb[0].mxu0 %v896
      %v1117 = vpop.f32.mrb[0].mxu0
      %v1118 = vadd.f32 %v803, %v1117
      %v1119 = vpop.f32.mrb[0].mxu0
      %1120 = vmatprep.mubr.f32.mxu0 0.0
      %1121 = vmatmul.mubr.f32.gmra.mrb[0].mxu0 %v899
      %v1122 = vpop.f32.mrb[0].mxu0
      %v1123 = vadd.f32 %v803, %v1122
      %v1124 = vpop.f32.mrb[0].mxu0
      %1125 = vdwg.mxu0
      %v1126 = vmax.f32 %v968, 0.0
      %v1127 = vmax.f32 %v973, 0.0
      %v1128 = vmax.f32 %v978, 0.0
      %v1129 = vmax.f32 %v983, 0.0
      %v1130 = vmax.f32 %v988, 0.0
      %v1131 = vmax.f32 %v993, 0.0
      %v1132 = vmax.f32 %v998, 0.0
      %v1133 = vmax.f32 %v1003, 0.0
      %v1134 = vmax.f32 %v1008, 0.0
      %v1135 = vmax.f32 %v1013, 0.0
      %v1136 = vmax.f32 %v1018, 0.0
      %v1137 = vmax.f32 %v1023, 0.0
      %v1138 = vmax.f32 %v1028, 0.0
      %v1139 = vmax.f32 %v1033, 0.0
      %v1140 = vmax.f32 %v1038, 0.0
      %v1141 = vmax.f32 %v1043, 0.0
      %v1142 = vmax.f32 %v1048, 0.0
      %v1143 = vmax.f32 %v1053, 0.0
      %v1144 = vmax.f32 %v1058, 0.0
      %v1145 = vmax.f32 %v1063, 0.0
      %v1146 = vmax.f32 %v1068, 0.0
      %v1147 = vmax.f32 %v1073, 0.0
      %v1148 = vmax.f32 %v1078, 0.0
      %v1149 = vmax.f32 %v1083, 0.0
      %v1150 = vmax.f32 %v1088, 0.0
      %v1151 = vmax.f32 %v1093, 0.0
      %v1152 = vmax.f32 %v1098, 0.0
      %v1153 = vmax.f32 %v1103, 0.0
      %v1154 = vmax.f32 %v1108, 0.0
      %v1155 = vmax.f32 %v1113, 0.0
      %v1156 = vmax.f32 %v1118, 0.0
      %v1157 = vmax.f32 %v1123, 0.0
      %v1158 = vld [vmem:[%s6] sm:$0xff]
      %v1159 = vld [vmem:[%s6 + $0x8] sm:$0xff]
      %v1160 = vld [vmem:[%s6 + $0x10] sm:$0xff]
      %v1161 = vld [vmem:[%s6 + $0x18] sm:$0xff]
      %v1162 = vld [vmem:[%s6 + $0x20] sm:$0xff]
      %v1163 = vld [vmem:[%s6 + $0x28] sm:$0xff]
      %v1164 = vld [vmem:[%s6 + $0x30] sm:$0xff]
      %v1165 = vld [vmem:[%s6 + $0x38] sm:$0xff]
      %v1166 = vld [vmem:[%s6 + $0x40] sm:$0xff]
      %v1167 = vld [vmem:[%s6 + $0x48] sm:$0xff]
      %v1168 = vld [vmem:[%s6 + $0x50] sm:$0xff]
      %v1169 = vld [vmem:[%s6 + $0x58] sm:$0xff]
      %v1170 = vld [vmem:[%s6 + $0x60] sm:$0xff]
      %v1171 = vld [vmem:[%s6 + $0x68] sm:$0xff]
      %v1172 = vld [vmem:[%s6 + $0x70] sm:$0xff]
      %v1173 = vld [vmem:[%s6 + $0x78] sm:$0xff]
      %v1174 = vld [vmem:[#allocation2] sm:$0x1]
      %v1176 = vlaneseq
      %v1177 = vshrl.u32 %v1176, 7
      %v1178 = vsub.s32 0, %v1177
      %v1179 = vrot.slane %v1174, %v1178
      %1181 = vmatprep.subr.mxu0 0.0
      %1182 = vmatpush1.msra.mxu0 %v1158
      %1183 = vmatprep.subr.mxu0 0.0
      %1184 = vmatpush1.msra.mxu0 %v1159
      %1185 = vmatprep.subr.mxu0 0.0
      %1186 = vmatpush1.msra.mxu0 %v1160
      %1187 = vmatprep.subr.mxu0 0.0
      %1188 = vmatpush1.msra.mxu0 %v1161
      %1189 = vmatprep.subr.mxu0 0.0
      %1190 = vmatpush1.msra.mxu0 %v1162
      %1191 = vmatprep.subr.mxu0 0.0
      %1192 = vmatpush1.msra.mxu0 %v1163
      %1193 = vmatprep.subr.mxu0 0.0
      %1194 = vmatpush1.msra.mxu0 %v1164
      %1195 = vmatprep.subr.mxu0 0.0
      %1196 = vmatpush1.msra.mxu0 %v1165
      %1197 = vmatprep.subr.mxu0 0.0
      %1198 = vmatpush1.msra.mxu0 %v1166
      %1199 = vmatprep.subr.mxu0 0.0
      %1200 = vmatpush1.msra.mxu0 %v1167
      %1201 = vmatprep.subr.mxu0 0.0
      %1202 = vmatpush1.msra.mxu0 %v1168
      %1203 = vmatprep.subr.mxu0 0.0
      %1204 = vmatpush1.msra.mxu0 %v1169
      %1205 = vmatprep.subr.mxu0 0.0
      %1206 = vmatpush1.msra.mxu0 %v1170
      %1207 = vmatprep.subr.mxu0 0.0
      %1208 = vmatpush1.msra.mxu0 %v1171
      %1209 = vmatprep.subr.mxu0 0.0
      %1210 = vmatpush1.msra.mxu0 %v1172
      %1211 = vmatprep.subr.mxu0 0.0
      %1212 = vmatpush1.msra.mxu0 %v1173
      %1213 = vmatprep.subr.mxu0 0.0
      %1214 = vmatpush1.msra.mxu0 0.0
      %1215 = vmatprep.subr.mxu0 0.0
      %1216 = vmatpush1.msra.mxu0 0.0
      %1217 = vmatprep.subr.mxu0 0.0
      %1218 = vmatpush1.msra.mxu0 0.0
      %1219 = vmatprep.subr.mxu0 0.0
      %1220 = vmatpush1.msra.mxu0 0.0
      %1221 = vmatprep.subr.mxu0 0.0
      %1222 = vmatpush1.msra.mxu0 0.0
      %1223 = vmatprep.subr.mxu0 0.0
      %1224 = vmatpush1.msra.mxu0 0.0
      %1225 = vmatprep.subr.mxu0 0.0
      %1226 = vmatpush1.msra.mxu0 0.0
      %1227 = vmatprep.subr.mxu0 0.0
      %1228 = vmatpush1.msra.mxu0 0.0
      %1229 = vmatprep.subr.mxu0 0.0
      %1230 = vmatpush1.msra.mxu0 0.0
      %1231 = vmatprep.subr.mxu0 0.0
      %1232 = vmatpush1.msra.mxu0 0.0
      %1233 = vmatprep.subr.mxu0 0.0
      %1234 = vmatpush1.msra.mxu0 0.0
      %1235 = vmatprep.subr.mxu0 0.0
      %1236 = vmatpush1.msra.mxu0 0.0
      %1237 = vmatprep.subr.mxu0 0.0
      %1238 = vmatpush1.msra.mxu0 0.0
      %1239 = vmatprep.subr.mxu0 0.0
      %1240 = vmatpush1.msra.mxu0 0.0
      %1241 = vmatprep.subr.mxu0 0.0
      %1242 = vmatpush1.msra.mxu0 0.0
      %1243 = vmatprep.subr.mxu0 0.0
      %1244 = vmatpush1.msra.mxu0 0.0
      %1245 = vmatprep.mubr.f32.mxu0 0.0
      %1246 = vmatmul.mubr.f32.gmra.mrb[0].mxu0 %v1126
      %v1247 = vpop.f32.mrb[0].mxu0
      %v1248 = vadd.f32 %v1179, %v1247
      %v1249 = vpop.f32.mrb[0].mxu0
      %1250 = vmatprep.mubr.f32.mxu0 0.0
      %1251 = vmatmul.mubr.f32.gmra.mrb[0].mxu0 %v1127
      %v1252 = vpop.f32.mrb[0].mxu0
      %v1253 = vadd.f32 %v1179, %v1252
      %v1254 = vpop.f32.mrb[0].mxu0
      %1255 = vmatprep.mubr.f32.mxu0 0.0
      %1256 = vmatmul.mubr.f32.gmra.mrb[0].mxu0 %v1128
      %v1257 = vpop.f32.mrb[0].mxu0
      %v1258 = vadd.f32 %v1179, %v1257
      %v1259 = vpop.f32.mrb[0].mxu0
      %1260 = vmatprep.mubr.f32.mxu0 0.0
      %1261 = vmatmul.mubr.f32.gmra.mrb[0].mxu0 %v1129
      %v1262 = vpop.f32.mrb[0].mxu0
      %v1263 = vadd.f32 %v1179, %v1262
      %v1264 = vpop.f32.mrb[0].mxu0
      %1265 = vmatprep.mubr.f32.mxu0 0.0
      %1266 = vmatmul.mubr.f32.gmra.mrb[0].mxu0 %v1130
      %v1267 = vpop.f32.mrb[0].mxu0
      %v1268 = vadd.f32 %v1179, %v1267
      %v1269 = vpop.f32.mrb[0].mxu0
      %1270 = vmatprep.mubr.f32.mxu0 0.0
      %1271 = vmatmul.mubr.f32.gmra.mrb[0].mxu0 %v1131
      %v1272 = vpop.f32.mrb[0].mxu0
      %v1273 = vadd.f32 %v1179, %v1272
      %v1274 = vpop.f32.mrb[0].mxu0
      %1275 = vmatprep.mubr.f32.mxu0 0.0
      %1276 = vmatmul.mubr.f32.gmra.mrb[0].mxu0 %v1132
      %v1277 = vpop.f32.mrb[0].mxu0
      %v1278 = vadd.f32 %v1179, %v1277
      %v1279 = vpop.f32.mrb[0].mxu0
      %1280 = vmatprep.mubr.f32.mxu0 0.0
      %1281 = vmatmul.mubr.f32.gmra.mrb[0].mxu0 %v1133
      %v1282 = vpop.f32.mrb[0].mxu0
      %v1283 = vadd.f32 %v1179, %v1282
      %v1284 = vpop.f32.mrb[0].mxu0
      %1285 = vmatprep.mubr.f32.mxu0 0.0
      %1286 = vmatmul.mubr.f32.gmra.mrb[0].mxu0 %v1134
      %v1287 = vpop.f32.mrb[0].mxu0
      %v1288 = vadd.f32 %v1179, %v1287
      %v1289 = vpop.f32.mrb[0].mxu0
      %1290 = vmatprep.mubr.f32.mxu0 0.0
      %1291 = vmatmul.mubr.f32.gmra.mrb[0].mxu0 %v1135
      %v1292 = vpop.f32.mrb[0].mxu0
      %v1293 = vadd.f32 %v1179, %v1292
      %v1294 = vpop.f32.mrb[0].mxu0
      %1295 = vmatprep.mubr.f32.mxu0 0.0
      %1296 = vmatmul.mubr.f32.gmra.mrb[0].mxu0 %v1136
      %v1297 = vpop.f32.mrb[0].mxu0
      %v1298 = vadd.f32 %v1179, %v1297
      %v1299 = vpop.f32.mrb[0].mxu0
      %1300 = vmatprep.mubr.f32.mxu0 0.0
      %1301 = vmatmul.mubr.f32.gmra.mrb[0].mxu0 %v1137
      %v1302 = vpop.f32.mrb[0].mxu0
      %v1303 = vadd.f32 %v1179, %v1302
      %v1304 = vpop.f32.mrb[0].mxu0
      %1305 = vmatprep.mubr.f32.mxu0 0.0
      %1306 = vmatmul.mubr.f32.gmra.mrb[0].mxu0 %v1138
      %v1307 = vpop.f32.mrb[0].mxu0
      %v1308 = vadd.f32 %v1179, %v1307
      %v1309 = vpop.f32.mrb[0].mxu0
      %1310 = vmatprep.mubr.f32.mxu0 0.0
      %1311 = vmatmul.mubr.f32.gmra.mrb[0].mxu0 %v1139
      %v1312 = vpop.f32.mrb[0].mxu0
      %v1313 = vadd.f32 %v1179, %v1312
      %v1314 = vpop.f32.mrb[0].mxu0
      %1315 = vmatprep.mubr.f32.mxu0 0.0
      %1316 = vmatmul.mubr.f32.gmra.mrb[0].mxu0 %v1140
      %v1317 = vpop.f32.mrb[0].mxu0
      %v1318 = vadd.f32 %v1179, %v1317
      %v1319 = vpop.f32.mrb[0].mxu0
      %1320 = vmatprep.mubr.f32.mxu0 0.0
      %1321 = vmatmul.mubr.f32.gmra.mrb[0].mxu0 %v1141
      %v1322 = vpop.f32.mrb[0].mxu0
      %v1323 = vadd.f32 %v1179, %v1322
      %v1324 = vpop.f32.mrb[0].mxu0
      %1325 = vmatprep.mubr.f32.mxu0 0.0
      %1326 = vmatmul.mubr.f32.gmra.mrb[0].mxu0 %v1142
      %v1327 = vpop.f32.mrb[0].mxu0
      %v1328 = vadd.f32 %v1179, %v1327
      %v1329 = vpop.f32.mrb[0].mxu0
      %1330 = vmatprep.mubr.f32.mxu0 0.0
      %1331 = vmatmul.mubr.f32.gmra.mrb[0].mxu0 %v1143
      %v1332 = vpop.f32.mrb[0].mxu0
      %v1333 = vadd.f32 %v1179, %v1332
      %v1334 = vpop.f32.mrb[0].mxu0
      %1335 = vmatprep.mubr.f32.mxu0 0.0
      %1336 = vmatmul.mubr.f32.gmra.mrb[0].mxu0 %v1144
      %v1337 = vpop.f32.mrb[0].mxu0
      %v1338 = vadd.f32 %v1179, %v1337
      %v1339 = vpop.f32.mrb[0].mxu0
      %1340 = vmatprep.mubr.f32.mxu0 0.0
      %1341 = vmatmul.mubr.f32.gmra.mrb[0].mxu0 %v1145
      %v1342 = vpop.f32.mrb[0].mxu0
      %v1343 = vadd.f32 %v1179, %v1342
      %v1344 = vpop.f32.mrb[0].mxu0
      %1345 = vmatprep.mubr.f32.mxu0 0.0
      %1346 = vmatmul.mubr.f32.gmra.mrb[0].mxu0 %v1146
      %v1347 = vpop.f32.mrb[0].mxu0
      %v1348 = vadd.f32 %v1179, %v1347
      %v1349 = vpop.f32.mrb[0].mxu0
      %1350 = vmatprep.mubr.f32.mxu0 0.0
      %1351 = vmatmul.mubr.f32.gmra.mrb[0].mxu0 %v1147
      %v1352 = vpop.f32.mrb[0].mxu0
      %v1353 = vadd.f32 %v1179, %v1352
      %v1354 = vpop.f32.mrb[0].mxu0
      %1355 = vmatprep.mubr.f32.mxu0 0.0
      %1356 = vmatmul.mubr.f32.gmra.mrb[0].mxu0 %v1148
      %v1357 = vpop.f32.mrb[0].mxu0
      %v1358 = vadd.f32 %v1179, %v1357
      %v1359 = vpop.f32.mrb[0].mxu0
      %1360 = vmatprep.mubr.f32.mxu0 0.0
      %1361 = vmatmul.mubr.f32.gmra.mrb[0].mxu0 %v1149
      %v1362 = vpop.f32.mrb[0].mxu0
      %v1363 = vadd.f32 %v1179, %v1362
      %v1364 = vpop.f32.mrb[0].mxu0
      %1365 = vmatprep.mubr.f32.mxu0 0.0
      %1366 = vmatmul.mubr.f32.gmra.mrb[0].mxu0 %v1150
      %v1367 = vpop.f32.mrb[0].mxu0
      %v1368 = vadd.f32 %v1179, %v1367
      %v1369 = vpop.f32.mrb[0].mxu0
      %1370 = vmatprep.mubr.f32.mxu0 0.0
      %1371 = vmatmul.mubr.f32.gmra.mrb[0].mxu0 %v1151
      %v1372 = vpop.f32.mrb[0].mxu0
      %v1373 = vadd.f32 %v1179, %v1372
      %v1374 = vpop.f32.mrb[0].mxu0
      %1375 = vmatprep.mubr.f32.mxu0 0.0
      %1376 = vmatmul.mubr.f32.gmra.mrb[0].mxu0 %v1152
      %v1377 = vpop.f32.mrb[0].mxu0
      %v1378 = vadd.f32 %v1179, %v1377
      %v1379 = vpop.f32.mrb[0].mxu0
      %1380 = vmatprep.mubr.f32.mxu0 0.0
      %1381 = vmatmul.mubr.f32.gmra.mrb[0].mxu0 %v1153
      %v1382 = vpop.f32.mrb[0].mxu0
      %v1383 = vadd.f32 %v1179, %v1382
      %v1384 = vpop.f32.mrb[0].mxu0
      %1385 = vmatprep.mubr.f32.mxu0 0.0
      %1386 = vmatmul.mubr.f32.gmra.mrb[0].mxu0 %v1154
      %v1387 = vpop.f32.mrb[0].mxu0
      %v1388 = vadd.f32 %v1179, %v1387
      %v1389 = vpop.f32.mrb[0].mxu0
      %1390 = vmatprep.mubr.f32.mxu0 0.0
      %1391 = vmatmul.mubr.f32.gmra.mrb[0].mxu0 %v1155
      %v1392 = vpop.f32.mrb[0].mxu0
      %v1393 = vadd.f32 %v1179, %v1392
      %v1394 = vpop.f32.mrb[0].mxu0
      %1395 = vmatprep.mubr.f32.mxu0 0.0
      %1396 = vmatmul.mubr.f32.gmra.mrb[0].mxu0 %v1156
      %v1397 = vpop.f32.mrb[0].mxu0
      %v1398 = vadd.f32 %v1179, %v1397
      %v1399 = vpop.f32.mrb[0].mxu0
      %1400 = vmatprep.mubr.f32.mxu0 0.0
      %1401 = vmatmul.mubr.f32.gmra.mrb[0].mxu0 %v1157
      %v1402 = vpop.f32.mrb[0].mxu0
      %v1403 = vadd.f32 %v1179, %v1402
      %v1404 = vpop.f32.mrb[0].mxu0
      %1405 = vdwg.mxu0
      %vm1406 = vcmask 7168
      %1407 = vst.msk [vmem:[%s331] sm:$0xff] %vm1406, %v1248
      %1408 = vst.msk [vmem:[%s331 + $0x8] sm:$0xff] %vm1406, %v1253
      %1409 = vst.msk [vmem:[%s331 + $0x10] sm:$0xff] %vm1406, %v1258
      %1410 = vst.msk [vmem:[%s331 + $0x18] sm:$0xff] %vm1406, %v1263
      %1411 = vst.msk [vmem:[%s331 + $0x20] sm:$0xff] %vm1406, %v1268
      %1412 = vst.msk [vmem:[%s331 + $0x28] sm:$0xff] %vm1406, %v1273
      %1413 = vst.msk [vmem:[%s331 + $0x30] sm:$0xff] %vm1406, %v1278
      %1414 = vst.msk [vmem:[%s331 + $0x38] sm:$0xff] %vm1406, %v1283
      %1415 = vst.msk [vmem:[%s331 + $0x40] sm:$0xff] %vm1406, %v1288
      %1416 = vst.msk [vmem:[%s331 + $0x48] sm:$0xff] %vm1406, %v1293
      %1417 = vst.msk [vmem:[%s331 + $0x50] sm:$0xff] %vm1406, %v1298
      %1418 = vst.msk [vmem:[%s331 + $0x58] sm:$0xff] %vm1406, %v1303
      %1419 = vst.msk [vmem:[%s331 + $0x60] sm:$0xff] %vm1406, %v1308
      %1420 = vst.msk [vmem:[%s331 + $0x68] sm:$0xff] %vm1406, %v1313
      %1421 = vst.msk [vmem:[%s331 + $0x70] sm:$0xff] %vm1406, %v1318
      %1422 = vst.msk [vmem:[%s331 + $0x78] sm:$0xff] %vm1406, %v1323
      %1423 = vst.msk [vmem:[%s331 + $0x80] sm:$0xff] %vm1406, %v1328
      %1424 = vst.msk [vmem:[%s331 + $0x88] sm:$0xff] %vm1406, %v1333
      %1425 = vst.msk [vmem:[%s331 + $0x90] sm:$0xff] %vm1406, %v1338
      %1426 = vst.msk [vmem:[%s331 + $0x98] sm:$0xff] %vm1406, %v1343
      %1427 = vst.msk [vmem:[%s331 + $0xa0] sm:$0xff] %vm1406, %v1348
      %1428 = vst.msk [vmem:[%s331 + $0xa8] sm:$0xff] %vm1406, %v1353
      %1429 = vst.msk [vmem:[%s331 + $0xb0] sm:$0xff] %vm1406, %v1358
      %1430 = vst.msk [vmem:[%s331 + $0xb8] sm:$0xff] %vm1406, %v1363
      %1431 = vst.msk [vmem:[%s331 + $0xc0] sm:$0xff] %vm1406, %v1368
      %1432 = vst.msk [vmem:[%s331 + $0xc8] sm:$0xff] %vm1406, %v1373
      %1433 = vst.msk [vmem:[%s331 + $0xd0] sm:$0xff] %vm1406, %v1378
      %1434 = vst.msk [vmem:[%s331 + $0xd8] sm:$0xff] %vm1406, %v1383
      %1435 = vst.msk [vmem:[%s331 + $0xe0] sm:$0xff] %vm1406, %v1388
      %1436 = vst.msk [vmem:[%s331 + $0xe8] sm:$0xff] %vm1406, %v1393
      %1437 = vst.msk [vmem:[%s331 + $0xf0] sm:$0xff] %vm1406, %v1398
      %1438 = vst.msk [vmem:[%s331 + $0xf8] sm:$0xff] %vm1406, %v1403
      %s1439 = smul.u32 32, %s21
      %p1440 = scmp.lt.s32.totalorder %s1439, 63
      %s1441 = scalar_select %p1440, %s1439, 63
      %s1442 = smul.addr %s1441, 8
      %s1443 = scalar_lea.vmem %s8, %s1442
      // Predicated region
      $region53: #{fno2d_forward.15} parent=51 // pred_check
        %p1444 = pneg %p217
      $region54: #{fno2d_forward.15} parent=51 // pred_check_branch
        %1446 = sbr.rel (%p1444) target = $region56
      $region55: #{fno2d_forward.15} parent=51 // pred_region
        %s1447 = smul.u32 32, %s21
      $region56: #{fno2d_forward.15} parent=51 // pred_fallthru
        _
    $region52: #{fno2d_forward.15} parent=5 // pred_fallthru
      _
    %p1448 = scmp.le.s32.totalorder 2, %s16
    // Predicated region
    $region57: #{fno2d_forward.15} parent=5 // pred_check
      %p1449 = pneg %p1448
    $region58: #{fno2d_forward.15} parent=5 // pred_check_branch
      %1451 = sbr.rel (%p1449) target = $region60
    $region59: #{fno2d_forward.15} parent=5 // pred_region
      %s1452 = ssub.s32 %s16, 2
      // Predicated region
      $region61: #{fno2d_forward.15} parent=59 // pred_check
        %p1453 = pneg %p223
      $region62: #{fno2d_forward.15} parent=59 // pred_check_branch
        %1455 = sbr.rel (%p1453) target = $region64
      $region63: #{fno2d_forward.15} parent=59 // pred_region
        %s1456 = smul.u32 32, %s22
        %p1457 = scmp.lt.s32.totalorder %s1456, 63
        %s1458 = scalar_select %p1457, %s1456, 63
        %s1459 = smul.addr %s1458, 8
        %s1460 = scalar_lea.vmem %s8, %s1459
      $region64: #{fno2d_forward.15} parent=59 // pred_fallthru
        _
    $region60: #{fno2d_forward.15} parent=5 // pred_fallthru
      _
  $region6: #{fno2d_forward.15} parent=0 // loop_footer
    %s20 = sadd.s32 1, %s16
  $region7: #{fno2d_forward.15} parent=0 // loop_footer_branch
    %15 = sbr.rel target = $region3
  $region8: #{fno2d_forward.15} parent=0 // loop_exit
    _

</llo_original>
